<compile_context>
chip_gen: v6e
topology: v6e:2x2x1
jax: 0.10.0
libtpu: 0.0.40
codegen_flags: <defaults>
</compile_context>

<pallas_src>
import functools

import jax
import jax.numpy as jnp
import numpy as np
from jax import lax
from jax.experimental import pallas as pl
from jax.experimental.pallas import tpu as pltpu

# 3x3x3 tap enumeration (dz outer, dy middle, dx inner) -- must match the weight reshape
# in prepare_params ((O, kD, kH, kW, I) row-major) and the mask table built in the wrapper.
TAPS_3 = [(dz, dy, dx) for dz in (-1, 0, 1) for dy in (-1, 0, 1) for dx in (-1, 0, 1)]
TAP_CHUNK = 8  # 8 taps x C=16 rows -> 128-row, lane-aligned contraction chunks


# ---------------------------------------------------------------------------
# Fused BasicBlock kernel (single grid step: whole batch folded into the lanes)
# ---------------------------------------------------------------------------


def make_basic_block_kernel(C, N, S, Do, Ho, Wo, G, eps=1e-5):
    cg = C // G
    NS = N * S
    HW = Ho * Wo
    inv_cnt = 1.0 / float(cg * S)

    def expand_groups(col_g):
        # (G, 1) -> (C, 1): repeat each group's value over its cg contiguous channels.
        return jnp.broadcast_to(col_g[:, None, :], (G, cg, 1)).reshape(C, 1)

    def gn_relu(x, gamma_col, beta_col, seg_ref):
        # GroupNorm (per-sample, per-group, biased centered two-pass variance) + ReLU.
        # x: (C, NS) f32.  seg_ref: (N, NS) 0/1 f32 sample-membership masks.
        def per_sample_map(make_col):
            out = None
            for n in range(N):                      # N is tiny & static
                seg = seg_ref[n:n + 1, :]           # (1, NS)
                term = make_col(seg) * seg          # (C, 1) * (1, NS) -> (C, NS)
                out = term if out is None else out + term
            return out

        # fold the cg channels of each group (lane dim unchanged -> cheap relayout)
        xgs = jnp.sum(x.reshape(G, cg, NS), axis=1)                       # (G, NS)
        mean_map = per_sample_map(
            lambda seg: expand_groups(
                jnp.sum(xgs * seg, axis=1, keepdims=True) * inv_cnt))     # (C, NS)
        xc = x - mean_map
        vgs = jnp.sum((xc * xc).reshape(G, cg, NS), axis=1)               # (G, NS)
        rstd_map = per_sample_map(
            lambda seg: expand_groups(
                lax.rsqrt(jnp.sum(vgs * seg, axis=1, keepdims=True) * inv_cnt + eps)))
        return jnp.maximum(xc * rstd_map * gamma_col + beta_col, 0.0)

    def conv3x3(act, w_ref, bias_col, tapm_ref):
        # k=3 s=1 p=1 conv on the flat (C, NS) activation: per-tap XLU lane roll +
        # precomputed per-sample boundary mask, accumulated in 8-tap (K=128) MXU chunks.
        out = None
        for c0 in range(0, 27, TAP_CHUNK):
            c1 = min(c0 + TAP_CHUNK, 27)
            rows = []
            for t in range(c0, c1):
                dz, dy, dx = TAPS_3[t]
                sh = (-(dz * HW + dy * Wo + dx)) % NS
                shifted = pltpu.roll(act, shift=sh, axis=1) if sh else act
                rows.append((shifted * tapm_ref[t:t + 1, :]).astype(jnp.bfloat16))
            patch = jnp.concatenate(rows, axis=0)                # ((c1-c0)*C, NS) bf16
            part = jnp.dot(w_ref[:, c0 * C:c1 * C], patch,
                           preferred_element_type=jnp.float32)   # (C, NS) f32
            out = part if out is None else out + part
        return out + bias_col

    def kernel(p0_ref, w0_ref, w1_ref, w2_ref, pcol_ref, tapm_ref, seg_ref, o_ref):
        pc = pcol_ref[...]                                       # (C, 6) f32
        gamma1, beta1, cbias1 = pc[:, 0:1], pc[:, 1:2], pc[:, 2:3]
        gamma2, beta2, cbias2 = pc[:, 3:4], pc[:, 4:5], pc[:, 5:6]

        # conv_init (k4 s2 p1, no bias): one MXU matmul on the prebuilt bf16 patch.
        y0 = jnp.dot(w0_ref[...], p0_ref[...],
                     preferred_element_type=jnp.float32)         # (C, NS) f32 (residual)

        y = gn_relu(y0, gamma1, beta1, seg_ref)                  # GN1 + ReLU
        y = conv3x3(y, w1_ref, cbias1, tapm_ref)                 # conv1 (k3 p1) + bias
        y = gn_relu(y, gamma2, beta2, seg_ref)                   # GN2 + ReLU
        y = conv3x3(y, w2_ref, cbias2, tapm_ref) + y0            # conv2 + bias + residual

        o_ref[...] = y.astype(o_ref.dtype)

    return kernel


# ---------------------------------------------------------------------------
# Parameter preparation (hoisted out of the jitted forward: done once)
# ---------------------------------------------------------------------------


def prepare_params(params):
    cout = params["w_init"].shape[0]
    # (O, I, kD, kH, kW) -> (O, kD*kH*kW*I), bf16, matching the patch row ordering.
    w0t = jnp.transpose(params["w_init"], (0, 2, 3, 4, 1)).reshape(cout, -1).astype(jnp.bfloat16)
    w1t = jnp.transpose(params["w1"], (0, 2, 3, 4, 1)).reshape(cout, -1).astype(jnp.bfloat16)
    w2t = jnp.transpose(params["w2"], (0, 2, 3, 4, 1)).reshape(cout, -1).astype(jnp.bfloat16)
    # Per-channel table: [gamma1, gn_beta1, conv_bias1, gamma2, gn_beta2, conv_bias2]
    pcol = jnp.stack([params["g1"], params["b1"], params["bias1"],
                      params["g2"], params["b2"], params["bias2"]], axis=1).astype(jnp.float32)
    return {"w0t": w0t, "w1t": w1t, "w2t": w2t, "pcol": pcol}


# ---------------------------------------------------------------------------
# Forward pass
# ---------------------------------------------------------------------------


def basic_block_forward(x, prep, n_groups=8):
    """x: (N, Cin, D, H, W) f32, prep: output of prepare_params."""
    N, Cin, D, H, W = x.shape
    Cout, K0 = prep["w0t"].shape
    K1 = prep["w1t"].shape[1]
    Do, Ho, Wo = D // 2, H // 2, W // 2
    S = Do * Ho * Wo
    NS = N * S

    # conv_init (k4, s2, p1) im2col: a strided 3-D gather that a roll cannot express,
    # kept as tiny XLA glue -- emitted directly in bf16, already transposed to (K0, N*S).
    xp = jnp.pad(x.astype(jnp.float32), ((0, 0), (0, 0), (1, 1), (1, 1), (1, 1)))
    taps = []
    for dz in range(4):
        for dy in range(4):
            for dx in range(4):
                taps.append(xp[:, :, dz:dz + 2 * Do:2,
                                     dy:dy + 2 * Ho:2,
                                     dx:dx + 2 * Wo:2])
    p0 = jnp.stack(taps, axis=1).reshape(N, K0, S)                   # (N, K0, S)
    p0 = jnp.transpose(p0, (1, 0, 2)).reshape(K0, NS).astype(jnp.bfloat16)

    # Shape-only mask tables (trace-time numpy constants, fetched into VMEM once):
    #  * tap_mask[t, n*S + sp] = 1 iff 3x3x3 tap t is in-bounds at spatial sp of sample n.
    #  * seg_mask[n, l]        = 1 iff lane l belongs to sample n.
    sp = np.arange(S)
    d_i, h_i, w_i = sp // (Ho * Wo), (sp // Wo) % Ho, sp % Wo
    m = np.zeros((27, S), np.float32)
    for t, (dz, dy, dx) in enumerate(TAPS_3):
        m[t] = ((d_i + dz >= 0) & (d_i + dz < Do) &
                (h_i + dy >= 0) & (h_i + dy < Ho) &
                (w_i + dx >= 0) & (w_i + dx < Wo)).astype(np.float32)
    tap_mask = jnp.asarray(np.tile(m, (1, N)))                               # (27, NS)
    seg_mask = jnp.asarray(np.repeat(np.eye(N, dtype=np.float32), S, axis=1))  # (N, NS)

    kernel = make_basic_block_kernel(Cout, N, S, Do, Ho, Wo, n_groups)

    out2d = pl.pallas_call(
        kernel,
        out_shape=jax.ShapeDtypeStruct((Cout, NS), jnp.float32),
        grid=(1,),
        in_specs=[
            pl.BlockSpec((K0, NS), lambda i: (0, 0)),     # conv_init patches (whole batch)
            pl.BlockSpec((Cout, K0), lambda i: (0, 0)),   # w0t (fetched once)
            pl.BlockSpec((Cout, K1), lambda i: (0, 0)),   # w1t
            pl.BlockSpec((Cout, K1), lambda i: (0, 0)),   # w2t
            pl.BlockSpec((Cout, 6), lambda i: (0, 0)),    # gamma/beta/bias table
            pl.BlockSpec((27, NS), lambda i: (0, 0)),     # 3x3x3 tap boundary masks
            pl.BlockSpec((N, NS), lambda i: (0, 0)),      # per-sample segment masks
        ],
        out_specs=pl.BlockSpec((Cout, NS), lambda i: (0, 0)),
        compiler_params=pltpu.CompilerParams(
            dimension_semantics=("arbitrary",),
            # Explicit budget guard; at realistic spatial sizes, tile S (128-multiples)
            # with an extra grid axis before this limit is approached.
            vmem_limit_bytes=32 * 1024 * 1024,
        ),
    )(p0, prep["w0t"], prep["w1t"], prep["w2t"], prep["pcol"], tap_mask, seg_mask)

    # (C, N*S) -> (N, C, Do, Ho, Wo)
    return jnp.transpose(out2d.reshape(Cout, N, Do, Ho, Wo), (1, 0, 2, 3, 4))


# ---------------------------------------------------------------------------
# Pure-JAX reference (correctness check only)
# ---------------------------------------------------------------------------


def _gn_ref(x, gamma, beta, groups, eps=1e-5):
    n, c = x.shape[:2]
    xr = x.reshape(n, groups, -1)
    mean = xr.mean(axis=2, keepdims=True)
    var = ((xr - mean) ** 2).mean(axis=2, keepdims=True)
    xn = ((xr - mean) / jnp.sqrt(var + eps)).reshape(x.shape)
    return xn * gamma.reshape(1, c, 1, 1, 1) + beta.reshape(1, c, 1, 1, 1)


def ref_forward(x, params, n_groups=8):
    dn = ("NCDHW", "OIDHW", "NCDHW")
    y = lax.conv_general_dilated(x, params["w_init"], (2, 2, 2),
                                 [(1, 1)] * 3, dimension_numbers=dn)
    res = y
    y = jax.nn.relu(_gn_ref(y, params["g1"], params["b1"], n_groups))
    y = lax.conv_general_dilated(y, params["w1"], (1, 1, 1),
                                 [(1, 1)] * 3, dimension_numbers=dn)
    y = y + params["bias1"].reshape(1, -1, 1, 1, 1)
    y = jax.nn.relu(_gn_ref(y, params["g2"], params["b2"], n_groups))
    y = lax.conv_general_dilated(y, params["w2"], (1, 1, 1),
                                 [(1, 1)] * 3, dimension_numbers=dn)
    y = y + params["bias2"].reshape(1, -1, 1, 1, 1)
    return y + res


# ---------------------------------------------------------------------------
# Main
# ---------------------------------------------------------------------------

if __name__ == "__main__":
    key = jax.random.PRNGKey(0)
    in_channels, out_channels, n_groups = 4, 16, 8
    N, D, H, W = 2, 8, 8, 8

    ks = jax.random.split(key, 10)
    params = {
        "w_init": 0.1 * jax.random.normal(ks[0], (out_channels, in_channels, 4, 4, 4), jnp.float32),
        "w1":     0.1 * jax.random.normal(ks[1], (out_channels, out_channels, 3, 3, 3), jnp.float32),
        "bias1":  0.1 * jax.random.normal(ks[2], (out_channels,), jnp.float32),
        "w2":     0.1 * jax.random.normal(ks[3], (out_channels, out_channels, 3, 3, 3), jnp.float32),
        "bias2":  0.1 * jax.random.normal(ks[4], (out_channels,), jnp.float32),
        "g1": 1.0 + 0.1 * jax.random.normal(ks[5], (out_channels,), jnp.float32),
        "b1": 0.1 * jax.random.normal(ks[6], (out_channels,), jnp.float32),
        "g2": 1.0 + 0.1 * jax.random.normal(ks[7], (out_channels,), jnp.float32),
        "b2": 0.1 * jax.random.normal(ks[8], (out_channels,), jnp.float32),
    }
    x = jax.random.normal(ks[9], (N, in_channels, D, H, W), jnp.float32)  # NCDHW

    prep = prepare_params(params)                 # weight reorder/cast hoisted out of jit
    fwd = jax.jit(functools.partial(basic_block_forward, n_groups=n_groups))
    out = jax.block_until_ready(fwd(x, prep))

    ref = jax.block_until_ready(ref_forward(x, params, n_groups))
    assert out.shape == (N, out_channels, D // 2, H // 2, W // 2), out.shape
    # Tolerance sized for bf16 MXU operands (f32 accumulation) vs the pure-f32 reference.
    np.testing.assert_allclose(np.asarray(out), np.asarray(ref), rtol=3e-2, atol=3e-2)

    print("KERNEL_OK")
</pallas_src>

<mosaic_0001>
module attributes {stable_mosaic.version = 11 : i64} {
  func.func @kernel(%arg0: i32, %arg1: memref<256x128xbf16, #tpu.memory_space<vmem>>, %arg2: memref<16x256xbf16, #tpu.memory_space<vmem>>, %arg3: memref<16x432xbf16, #tpu.memory_space<vmem>>, %arg4: memref<16x432xbf16, #tpu.memory_space<vmem>>, %arg5: memref<16x6xf32, #tpu.memory_space<vmem>>, %arg6: memref<27x128xf32, #tpu.memory_space<vmem>>, %arg7: memref<2x128xf32, #tpu.memory_space<vmem>>, %arg8: memref<16x128xf32, #tpu.memory_space<vmem>>) attributes {dimension_semantics = [#tpu.dimension_semantics<arbitrary>], iteration_bounds = array<i64: 1>, scalar_prefetch = 0 : i64, scratch_operands = 0 : i64, tpu.core_type = #tpu.core_type<tc>, window_params = [{pipeline_mode = #tpu.pipeline_mode<synchronous>, transform_indices = @transform_0, window_bounds = array<i64: 256, 128>}, {pipeline_mode = #tpu.pipeline_mode<synchronous>, transform_indices = @transform_1, window_bounds = array<i64: 16, 256>}, {pipeline_mode = #tpu.pipeline_mode<synchronous>, transform_indices = @transform_2, window_bounds = array<i64: 16, 432>}, {pipeline_mode = #tpu.pipeline_mode<synchronous>, transform_indices = @transform_3, window_bounds = array<i64: 16, 432>}, {pipeline_mode = #tpu.pipeline_mode<synchronous>, transform_indices = @transform_4, window_bounds = array<i64: 16, 6>}, {pipeline_mode = #tpu.pipeline_mode<synchronous>, transform_indices = @transform_5, window_bounds = array<i64: 27, 128>}, {pipeline_mode = #tpu.pipeline_mode<synchronous>, transform_indices = @transform_6, window_bounds = array<i64: 2, 128>}, {pipeline_mode = #tpu.pipeline_mode<synchronous>, transform_indices = @transform_7, window_bounds = array<i64: 16, 128>}]} {
    %c0 = arith.constant 0 : index
    %c0_0 = arith.constant 0 : index
    %0 = vector.load %arg5[%c0, %c0_0] : memref<16x6xf32, #tpu.memory_space<vmem>>, vector<16x6xf32>
    %1 = vector.extract_strided_slice %0 {offsets = [0, 0], sizes = [16, 1], strides = [1, 1]} : vector<16x6xf32> to vector<16x1xf32>
    %2 = vector.extract_strided_slice %0 {offsets = [0, 1], sizes = [16, 1], strides = [1, 1]} : vector<16x6xf32> to vector<16x1xf32>
    %3 = vector.extract_strided_slice %0 {offsets = [0, 2], sizes = [16, 1], strides = [1, 1]} : vector<16x6xf32> to vector<16x1xf32>
    %4 = vector.extract_strided_slice %0 {offsets = [0, 3], sizes = [16, 1], strides = [1, 1]} : vector<16x6xf32> to vector<16x1xf32>
    %5 = vector.extract_strided_slice %0 {offsets = [0, 4], sizes = [16, 1], strides = [1, 1]} : vector<16x6xf32> to vector<16x1xf32>
    %6 = vector.extract_strided_slice %0 {offsets = [0, 5], sizes = [16, 1], strides = [1, 1]} : vector<16x6xf32> to vector<16x1xf32>
    %c0_1 = arith.constant 0 : index
    %c0_2 = arith.constant 0 : index
    %7 = vector.load %arg2[%c0_1, %c0_2] : memref<16x256xbf16, #tpu.memory_space<vmem>>, vector<16x256xbf16>
    %c0_3 = arith.constant 0 : index
    %c0_4 = arith.constant 0 : index
    %8 = vector.load %arg1[%c0_3, %c0_4] : memref<256x128xbf16, #tpu.memory_space<vmem>>, vector<256x128xbf16>
    %cst = arith.constant dense<0.000000e+00> : vector<16x128xf32>
    %9 = tpu.matmul %7, %8, %cst {dimension_numbers = #tpu.dot_dimension_numbers<[1], [0], [0], [1], [0, 0, 1, 1], [], []>} : vector<16x256xbf16>, vector<256x128xbf16>, vector<16x128xf32> -> vector<16x128xf32>
    %10 = vector.shape_cast %9 : vector<16x128xf32> to vector<8x2x128xf32>
    %cst_5 = arith.constant dense<0.000000e+00> : vector<8x128xf32>
    %11 = vector.multi_reduction <add>, %10, %cst_5 [1] : vector<8x2x128xf32> to vector<8x128xf32>
    %c0_6 = arith.constant 0 : index
    %c0_7 = arith.constant 0 : index
    %12 = vector.load %arg7[%c0_6, %c0_7] : memref<2x128xf32, #tpu.memory_space<vmem>>, vector<1x128xf32>
    %13 = vector.broadcast %12 : vector<1x128xf32> to vector<8x128xf32>
    %14 = arith.mulf %11, %13 : vector<8x128xf32>
    %cst_8 = arith.constant dense<0.000000e+00> : vector<8xf32>
    %15 = vector.multi_reduction <add>, %14, %cst_8 [1] : vector<8x128xf32> to vector<8xf32>
    %16 = vector.shape_cast %15 : vector<8xf32> to vector<8x1xf32>
    %cst_9 = arith.constant 7.812500e-03 : f32
    %17 = vector.broadcast %cst_9 : f32 to vector<8x1xf32>
    %18 = arith.mulf %16, %17 : vector<8x1xf32>
    %19 = vector.shape_cast %18 : vector<8x1xf32> to vector<8x1x1xf32>
    %20 = vector.shape_cast %19 : vector<8x1x1xf32> to vector<8x1x1xf32>
    %21 = vector.broadcast %20 : vector<8x1x1xf32> to vector<8x2x1xf32>
    %22 = vector.shape_cast %21 : vector<8x2x1xf32> to vector<16x1xf32>
    %23 = vector.broadcast %22 : vector<16x1xf32> to vector<16x128xf32>
    %24 = vector.broadcast %12 : vector<1x128xf32> to vector<16x128xf32>
    %25 = arith.mulf %23, %24 : vector<16x128xf32>
    %c1 = arith.constant 1 : index
    %c0_10 = arith.constant 0 : index
    %26 = vector.load %arg7[%c1, %c0_10] : memref<2x128xf32, #tpu.memory_space<vmem>>, vector<1x128xf32>
    %27 = vector.broadcast %26 : vector<1x128xf32> to vector<8x128xf32>
    %28 = arith.mulf %11, %27 : vector<8x128xf32>
    %cst_11 = arith.constant dense<0.000000e+00> : vector<8xf32>
    %29 = vector.multi_reduction <add>, %28, %cst_11 [1] : vector<8x128xf32> to vector<8xf32>
    %30 = vector.shape_cast %29 : vector<8xf32> to vector<8x1xf32>
    %cst_12 = arith.constant 7.812500e-03 : f32
    %31 = vector.broadcast %cst_12 : f32 to vector<8x1xf32>
    %32 = arith.mulf %30, %31 : vector<8x1xf32>
    %33 = vector.shape_cast %32 : vector<8x1xf32> to vector<8x1x1xf32>
    %34 = vector.shape_cast %33 : vector<8x1x1xf32> to vector<8x1x1xf32>
    %35 = vector.broadcast %34 : vector<8x1x1xf32> to vector<8x2x1xf32>
    %36 = vector.shape_cast %35 : vector<8x2x1xf32> to vector<16x1xf32>
    %37 = vector.broadcast %36 : vector<16x1xf32> to vector<16x128xf32>
    %38 = vector.broadcast %26 : vector<1x128xf32> to vector<16x128xf32>
    %39 = arith.mulf %37, %38 : vector<16x128xf32>
    %40 = arith.addf %25, %39 : vector<16x128xf32>
    %41 = arith.subf %9, %40 : vector<16x128xf32>
    %42 = arith.mulf %41, %41 : vector<16x128xf32>
    %43 = vector.shape_cast %42 : vector<16x128xf32> to vector<8x2x128xf32>
    %cst_13 = arith.constant dense<0.000000e+00> : vector<8x128xf32>
    %44 = vector.multi_reduction <add>, %43, %cst_13 [1] : vector<8x2x128xf32> to vector<8x128xf32>
    %c0_14 = arith.constant 0 : index
    %c0_15 = arith.constant 0 : index
    %45 = vector.load %arg7[%c0_14, %c0_15] : memref<2x128xf32, #tpu.memory_space<vmem>>, vector<1x128xf32>
    %46 = vector.broadcast %45 : vector<1x128xf32> to vector<8x128xf32>
    %47 = arith.mulf %44, %46 : vector<8x128xf32>
    %cst_16 = arith.constant dense<0.000000e+00> : vector<8xf32>
    %48 = vector.multi_reduction <add>, %47, %cst_16 [1] : vector<8x128xf32> to vector<8xf32>
    %49 = vector.shape_cast %48 : vector<8xf32> to vector<8x1xf32>
    %cst_17 = arith.constant 7.812500e-03 : f32
    %50 = vector.broadcast %cst_17 : f32 to vector<8x1xf32>
    %51 = arith.mulf %49, %50 : vector<8x1xf32>
    %cst_18 = arith.constant 9.99999974E-6 : f32
    %52 = vector.broadcast %cst_18 : f32 to vector<8x1xf32>
    %53 = arith.addf %51, %52 : vector<8x1xf32>
    %54 = math.rsqrt %53 : vector<8x1xf32>
    %55 = vector.shape_cast %54 : vector<8x1xf32> to vector<8x1x1xf32>
    %56 = vector.shape_cast %55 : vector<8x1x1xf32> to vector<8x1x1xf32>
    %57 = vector.broadcast %56 : vector<8x1x1xf32> to vector<8x2x1xf32>
    %58 = vector.shape_cast %57 : vector<8x2x1xf32> to vector<16x1xf32>
    %59 = vector.broadcast %58 : vector<16x1xf32> to vector<16x128xf32>
    %60 = vector.broadcast %45 : vector<1x128xf32> to vector<16x128xf32>
    %61 = arith.mulf %59, %60 : vector<16x128xf32>
    %c1_19 = arith.constant 1 : index
    %c0_20 = arith.constant 0 : index
    %62 = vector.load %arg7[%c1_19, %c0_20] : memref<2x128xf32, #tpu.memory_space<vmem>>, vector<1x128xf32>
    %63 = vector.broadcast %62 : vector<1x128xf32> to vector<8x128xf32>
    %64 = arith.mulf %44, %63 : vector<8x128xf32>
    %cst_21 = arith.constant dense<0.000000e+00> : vector<8xf32>
    %65 = vector.multi_reduction <add>, %64, %cst_21 [1] : vector<8x128xf32> to vector<8xf32>
    %66 = vector.shape_cast %65 : vector<8xf32> to vector<8x1xf32>
    %cst_22 = arith.constant 7.812500e-03 : f32
    %67 = vector.broadcast %cst_22 : f32 to vector<8x1xf32>
    %68 = arith.mulf %66, %67 : vector<8x1xf32>
    %cst_23 = arith.constant 9.99999974E-6 : f32
    %69 = vector.broadcast %cst_23 : f32 to vector<8x1xf32>
    %70 = arith.addf %68, %69 : vector<8x1xf32>
    %71 = math.rsqrt %70 : vector<8x1xf32>
    %72 = vector.shape_cast %71 : vector<8x1xf32> to vector<8x1x1xf32>
    %73 = vector.shape_cast %72 : vector<8x1x1xf32> to vector<8x1x1xf32>
    %74 = vector.broadcast %73 : vector<8x1x1xf32> to vector<8x2x1xf32>
    %75 = vector.shape_cast %74 : vector<8x2x1xf32> to vector<16x1xf32>
    %76 = vector.broadcast %75 : vector<16x1xf32> to vector<16x128xf32>
    %77 = vector.broadcast %62 : vector<1x128xf32> to vector<16x128xf32>
    %78 = arith.mulf %76, %77 : vector<16x128xf32>
    %79 = arith.addf %61, %78 : vector<16x128xf32>
    %80 = arith.mulf %41, %79 : vector<16x128xf32>
    %81 = vector.broadcast %1 : vector<16x1xf32> to vector<16x128xf32>
    %82 = arith.mulf %80, %81 : vector<16x128xf32>
    %83 = vector.broadcast %2 : vector<16x1xf32> to vector<16x128xf32>
    %84 = arith.addf %82, %83 : vector<16x128xf32>
    %cst_24 = arith.constant 0.000000e+00 : f32
    %85 = vector.broadcast %cst_24 : f32 to vector<16x128xf32>
    %86 = arith.maximumf %84, %85 : vector<16x128xf32>
    %c21_i32 = arith.constant 21 : i32
    %87 = tpu.dynamic_rotate %86 by %c21_i32 dim 1 : vector<16x128xf32>, i32 -> vector<16x128xf32>
    %c0_25 = arith.constant 0 : index
    %c0_26 = arith.constant 0 : index
    %88 = vector.load %arg6[%c0_25, %c0_26] : memref<27x128xf32, #tpu.memory_space<vmem>>, vector<1x128xf32>
    %89 = vector.broadcast %88 : vector<1x128xf32> to vector<16x128xf32>
    %90 = arith.mulf %87, %89 : vector<16x128xf32>
    %91 = arith.truncf %90 : vector<16x128xf32> to vector<16x128xbf16>
    %c20_i32 = arith.constant 20 : i32
    %92 = tpu.dynamic_rotate %86 by %c20_i32 dim 1 : vector<16x128xf32>, i32 -> vector<16x128xf32>
    %c1_27 = arith.constant 1 : index
    %c0_28 = arith.constant 0 : index
    %93 = vector.load %arg6[%c1_27, %c0_28] : memref<27x128xf32, #tpu.memory_space<vmem>>, vector<1x128xf32>
    %94 = vector.broadcast %93 : vector<1x128xf32> to vector<16x128xf32>
    %95 = arith.mulf %92, %94 : vector<16x128xf32>
    %96 = arith.truncf %95 : vector<16x128xf32> to vector<16x128xbf16>
    %c19_i32 = arith.constant 19 : i32
    %97 = tpu.dynamic_rotate %86 by %c19_i32 dim 1 : vector<16x128xf32>, i32 -> vector<16x128xf32>
    %c2 = arith.constant 2 : index
    %c0_29 = arith.constant 0 : index
    %98 = vector.load %arg6[%c2, %c0_29] : memref<27x128xf32, #tpu.memory_space<vmem>>, vector<1x128xf32>
    %99 = vector.broadcast %98 : vector<1x128xf32> to vector<16x128xf32>
    %100 = arith.mulf %97, %99 : vector<16x128xf32>
    %101 = arith.truncf %100 : vector<16x128xf32> to vector<16x128xbf16>
    %c17_i32 = arith.constant 17 : i32
    %102 = tpu.dynamic_rotate %86 by %c17_i32 dim 1 : vector<16x128xf32>, i32 -> vector<16x128xf32>
    %c3 = arith.constant 3 : index
    %c0_30 = arith.constant 0 : index
    %103 = vector.load %arg6[%c3, %c0_30] : memref<27x128xf32, #tpu.memory_space<vmem>>, vector<1x128xf32>
    %104 = vector.broadcast %103 : vector<1x128xf32> to vector<16x128xf32>
    %105 = arith.mulf %102, %104 : vector<16x128xf32>
    %106 = arith.truncf %105 : vector<16x128xf32> to vector<16x128xbf16>
    %c16_i32 = arith.constant 16 : i32
    %107 = tpu.dynamic_rotate %86 by %c16_i32 dim 1 : vector<16x128xf32>, i32 -> vector<16x128xf32>
    %c4 = arith.constant 4 : index
    %c0_31 = arith.constant 0 : index
    %108 = vector.load %arg6[%c4, %c0_31] : memref<27x128xf32, #tpu.memory_space<vmem>>, vector<1x128xf32>
    %109 = vector.broadcast %108 : vector<1x128xf32> to vector<16x128xf32>
    %110 = arith.mulf %107, %109 : vector<16x128xf32>
    %111 = arith.truncf %110 : vector<16x128xf32> to vector<16x128xbf16>
    %c15_i32 = arith.constant 15 : i32
    %112 = tpu.dynamic_rotate %86 by %c15_i32 dim 1 : vector<16x128xf32>, i32 -> vector<16x128xf32>
    %c5 = arith.constant 5 : index
    %c0_32 = arith.constant 0 : index
    %113 = vector.load %arg6[%c5, %c0_32] : memref<27x128xf32, #tpu.memory_space<vmem>>, vector<1x128xf32>
    %114 = vector.broadcast %113 : vector<1x128xf32> to vector<16x128xf32>
    %115 = arith.mulf %112, %114 : vector<16x128xf32>
    %116 = arith.truncf %115 : vector<16x128xf32> to vector<16x128xbf16>
    %c13_i32 = arith.constant 13 : i32
    %117 = tpu.dynamic_rotate %86 by %c13_i32 dim 1 : vector<16x128xf32>, i32 -> vector<16x128xf32>
    %c6 = arith.constant 6 : index
    %c0_33 = arith.constant 0 : index
    %118 = vector.load %arg6[%c6, %c0_33] : memref<27x128xf32, #tpu.memory_space<vmem>>, vector<1x128xf32>
    %119 = vector.broadcast %118 : vector<1x128xf32> to vector<16x128xf32>
    %120 = arith.mulf %117, %119 : vector<16x128xf32>
    %121 = arith.truncf %120 : vector<16x128xf32> to vector<16x128xbf16>
    %c12_i32 = arith.constant 12 : i32
    %122 = tpu.dynamic_rotate %86 by %c12_i32 dim 1 : vector<16x128xf32>, i32 -> vector<16x128xf32>
    %c7 = arith.constant 7 : index
    %c0_34 = arith.constant 0 : index
    %123 = vector.load %arg6[%c7, %c0_34] : memref<27x128xf32, #tpu.memory_space<vmem>>, vector<1x128xf32>
    %124 = vector.broadcast %123 : vector<1x128xf32> to vector<16x128xf32>
    %125 = arith.mulf %122, %124 : vector<16x128xf32>
    %126 = arith.truncf %125 : vector<16x128xf32> to vector<16x128xbf16>
    %127 = tpu.concatenate %91, %96, %101, %106, %111, %116, %121, %126 in 0 : vector<16x128xbf16>, vector<16x128xbf16>, vector<16x128xbf16>, vector<16x128xbf16>, vector<16x128xbf16>, vector<16x128xbf16>, vector<16x128xbf16>, vector<16x128xbf16> -> vector<128x128xbf16>
    %c0_35 = arith.constant 0 : index
    %c0_36 = arith.constant 0 : index
    %128 = vector.load %arg3[%c0_35, %c0_36] : memref<16x432xbf16, #tpu.memory_space<vmem>>, vector<16x128xbf16>
    %cst_37 = arith.constant dense<0.000000e+00> : vector<16x128xf32>
    %129 = tpu.matmul %128, %127, %cst_37 {dimension_numbers = #tpu.dot_dimension_numbers<[1], [0], [0], [1], [0, 0, 1, 1], [], []>} : vector<16x128xbf16>, vector<128x128xbf16>, vector<16x128xf32> -> vector<16x128xf32>
    %c11_i32 = arith.constant 11 : i32
    %130 = tpu.dynamic_rotate %86 by %c11_i32 dim 1 : vector<16x128xf32>, i32 -> vector<16x128xf32>
    %c8 = arith.constant 8 : index
    %c0_38 = arith.constant 0 : index
    %131 = vector.load %arg6[%c8, %c0_38] : memref<27x128xf32, #tpu.memory_space<vmem>>, vector<1x128xf32>
    %132 = vector.broadcast %131 : vector<1x128xf32> to vector<16x128xf32>
    %133 = arith.mulf %130, %132 : vector<16x128xf32>
    %134 = arith.truncf %133 : vector<16x128xf32> to vector<16x128xbf16>
    %c5_i32 = arith.constant 5 : i32
    %135 = tpu.dynamic_rotate %86 by %c5_i32 dim 1 : vector<16x128xf32>, i32 -> vector<16x128xf32>
    %c9 = arith.constant 9 : index
    %c0_39 = arith.constant 0 : index
    %136 = vector.load %arg6[%c9, %c0_39] : memref<27x128xf32, #tpu.memory_space<vmem>>, vector<1x128xf32>
    %137 = vector.broadcast %136 : vector<1x128xf32> to vector<16x128xf32>
    %138 = arith.mulf %135, %137 : vector<16x128xf32>
    %139 = arith.truncf %138 : vector<16x128xf32> to vector<16x128xbf16>
    %c4_i32 = arith.constant 4 : i32
    %140 = tpu.dynamic_rotate %86 by %c4_i32 dim 1 : vector<16x128xf32>, i32 -> vector<16x128xf32>
    %c10 = arith.constant 10 : index
    %c0_40 = arith.constant 0 : index
    %141 = vector.load %arg6[%c10, %c0_40] : memref<27x128xf32, #tpu.memory_space<vmem>>, vector<1x128xf32>
    %142 = vector.broadcast %141 : vector<1x128xf32> to vector<16x128xf32>
    %143 = arith.mulf %140, %142 : vector<16x128xf32>
    %144 = arith.truncf %143 : vector<16x128xf32> to vector<16x128xbf16>
    %c3_i32 = arith.constant 3 : i32
    %145 = tpu.dynamic_rotate %86 by %c3_i32 dim 1 : vector<16x128xf32>, i32 -> vector<16x128xf32>
    %c11 = arith.constant 11 : index
    %c0_41 = arith.constant 0 : index
    %146 = vector.load %arg6[%c11, %c0_41] : memref<27x128xf32, #tpu.memory_space<vmem>>, vector<1x128xf32>
    %147 = vector.broadcast %146 : vector<1x128xf32> to vector<16x128xf32>
    %148 = arith.mulf %145, %147 : vector<16x128xf32>
    %149 = arith.truncf %148 : vector<16x128xf32> to vector<16x128xbf16>
    %c1_i32 = arith.constant 1 : i32
    %150 = tpu.dynamic_rotate %86 by %c1_i32 dim 1 : vector<16x128xf32>, i32 -> vector<16x128xf32>
    %c12 = arith.constant 12 : index
    %c0_42 = arith.constant 0 : index
    %151 = vector.load %arg6[%c12, %c0_42] : memref<27x128xf32, #tpu.memory_space<vmem>>, vector<1x128xf32>
    %152 = vector.broadcast %151 : vector<1x128xf32> to vector<16x128xf32>
    %153 = arith.mulf %150, %152 : vector<16x128xf32>
    %154 = arith.truncf %153 : vector<16x128xf32> to vector<16x128xbf16>
    %c13 = arith.constant 13 : index
    %c0_43 = arith.constant 0 : index
    %155 = vector.load %arg6[%c13, %c0_43] : memref<27x128xf32, #tpu.memory_space<vmem>>, vector<1x128xf32>
    %156 = vector.broadcast %155 : vector<1x128xf32> to vector<16x128xf32>
    %157 = arith.mulf %86, %156 : vector<16x128xf32>
    %158 = arith.truncf %157 : vector<16x128xf32> to vector<16x128xbf16>
    %c127_i32 = arith.constant 127 : i32
    %159 = tpu.dynamic_rotate %86 by %c127_i32 dim 1 : vector<16x128xf32>, i32 -> vector<16x128xf32>
    %c14 = arith.constant 14 : index
    %c0_44 = arith.constant 0 : index
    %160 = vector.load %arg6[%c14, %c0_44] : memref<27x128xf32, #tpu.memory_space<vmem>>, vector<1x128xf32>
    %161 = vector.broadcast %160 : vector<1x128xf32> to vector<16x128xf32>
    %162 = arith.mulf %159, %161 : vector<16x128xf32>
    %163 = arith.truncf %162 : vector<16x128xf32> to vector<16x128xbf16>
    %c125_i32 = arith.constant 125 : i32
    %164 = tpu.dynamic_rotate %86 by %c125_i32 dim 1 : vector<16x128xf32>, i32 -> vector<16x128xf32>
    %c15 = arith.constant 15 : index
    %c0_45 = arith.constant 0 : index
    %165 = vector.load %arg6[%c15, %c0_45] : memref<27x128xf32, #tpu.memory_space<vmem>>, vector<1x128xf32>
    %166 = vector.broadcast %165 : vector<1x128xf32> to vector<16x128xf32>
    %167 = arith.mulf %164, %166 : vector<16x128xf32>
    %168 = arith.truncf %167 : vector<16x128xf32> to vector<16x128xbf16>
    %169 = tpu.concatenate %134, %139, %144, %149, %154, %158, %163, %168 in 0 : vector<16x128xbf16>, vector<16x128xbf16>, vector<16x128xbf16>, vector<16x128xbf16>, vector<16x128xbf16>, vector<16x128xbf16>, vector<16x128xbf16>, vector<16x128xbf16> -> vector<128x128xbf16>
    %c0_46 = arith.constant 0 : index
    %c128 = arith.constant 128 : index
    %170 = vector.load %arg3[%c0_46, %c128] : memref<16x432xbf16, #tpu.memory_space<vmem>>, vector<16x128xbf16>
    %cst_47 = arith.constant dense<0.000000e+00> : vector<16x128xf32>
    %171 = tpu.matmul %170, %169, %cst_47 {dimension_numbers = #tpu.dot_dimension_numbers<[1], [0], [0], [1], [0, 0, 1, 1], [], []>} : vector<16x128xbf16>, vector<128x128xbf16>, vector<16x128xf32> -> vector<16x128xf32>
    %172 = arith.addf %129, %171 : vector<16x128xf32>
    %c124_i32 = arith.constant 124 : i32
    %173 = tpu.dynamic_rotate %86 by %c124_i32 dim 1 : vector<16x128xf32>, i32 -> vector<16x128xf32>
    %c16 = arith.constant 16 : index
    %c0_48 = arith.constant 0 : index
    %174 = vector.load %arg6[%c16, %c0_48] : memref<27x128xf32, #tpu.memory_space<vmem>>, vector<1x128xf32>
    %175 = vector.broadcast %174 : vector<1x128xf32> to vector<16x128xf32>
    %176 = arith.mulf %173, %175 : vector<16x128xf32>
    %177 = arith.truncf %176 : vector<16x128xf32> to vector<16x128xbf16>
    %c123_i32 = arith.constant 123 : i32
    %178 = tpu.dynamic_rotate %86 by %c123_i32 dim 1 : vector<16x128xf32>, i32 -> vector<16x128xf32>
    %c17 = arith.constant 17 : index
    %c0_49 = arith.constant 0 : index
    %179 = vector.load %arg6[%c17, %c0_49] : memref<27x128xf32, #tpu.memory_space<vmem>>, vector<1x128xf32>
    %180 = vector.broadcast %179 : vector<1x128xf32> to vector<16x128xf32>
    %181 = arith.mulf %178, %180 : vector<16x128xf32>
    %182 = arith.truncf %181 : vector<16x128xf32> to vector<16x128xbf16>
    %c117_i32 = arith.constant 117 : i32
    %183 = tpu.dynamic_rotate %86 by %c117_i32 dim 1 : vector<16x128xf32>, i32 -> vector<16x128xf32>
    %c18 = arith.constant 18 : index
    %c0_50 = arith.constant 0 : index
    %184 = vector.load %arg6[%c18, %c0_50] : memref<27x128xf32, #tpu.memory_space<vmem>>, vector<1x128xf32>
    %185 = vector.broadcast %184 : vector<1x128xf32> to vector<16x128xf32>
    %186 = arith.mulf %183, %185 : vector<16x128xf32>
    %187 = arith.truncf %186 : vector<16x128xf32> to vector<16x128xbf16>
    %c116_i32 = arith.constant 116 : i32
    %188 = tpu.dynamic_rotate %86 by %c116_i32 dim 1 : vector<16x128xf32>, i32 -> vector<16x128xf32>
    %c19 = arith.constant 19 : index
    %c0_51 = arith.constant 0 : index
    %189 = vector.load %arg6[%c19, %c0_51] : memref<27x128xf32, #tpu.memory_space<vmem>>, vector<1x128xf32>
    %190 = vector.broadcast %189 : vector<1x128xf32> to vector<16x128xf32>
    %191 = arith.mulf %188, %190 : vector<16x128xf32>
    %192 = arith.truncf %191 : vector<16x128xf32> to vector<16x128xbf16>
    %c115_i32 = arith.constant 115 : i32
    %193 = tpu.dynamic_rotate %86 by %c115_i32 dim 1 : vector<16x128xf32>, i32 -> vector<16x128xf32>
    %c20 = arith.constant 20 : index
    %c0_52 = arith.constant 0 : index
    %194 = vector.load %arg6[%c20, %c0_52] : memref<27x128xf32, #tpu.memory_space<vmem>>, vector<1x128xf32>
    %195 = vector.broadcast %194 : vector<1x128xf32> to vector<16x128xf32>
    %196 = arith.mulf %193, %195 : vector<16x128xf32>
    %197 = arith.truncf %196 : vector<16x128xf32> to vector<16x128xbf16>
    %c113_i32 = arith.constant 113 : i32
    %198 = tpu.dynamic_rotate %86 by %c113_i32 dim 1 : vector<16x128xf32>, i32 -> vector<16x128xf32>
    %c21 = arith.constant 21 : index
    %c0_53 = arith.constant 0 : index
    %199 = vector.load %arg6[%c21, %c0_53] : memref<27x128xf32, #tpu.memory_space<vmem>>, vector<1x128xf32>
    %200 = vector.broadcast %199 : vector<1x128xf32> to vector<16x128xf32>
    %201 = arith.mulf %198, %200 : vector<16x128xf32>
    %202 = arith.truncf %201 : vector<16x128xf32> to vector<16x128xbf16>
    %c112_i32 = arith.constant 112 : i32
    %203 = tpu.dynamic_rotate %86 by %c112_i32 dim 1 : vector<16x128xf32>, i32 -> vector<16x128xf32>
    %c22 = arith.constant 22 : index
    %c0_54 = arith.constant 0 : index
    %204 = vector.load %arg6[%c22, %c0_54] : memref<27x128xf32, #tpu.memory_space<vmem>>, vector<1x128xf32>
    %205 = vector.broadcast %204 : vector<1x128xf32> to vector<16x128xf32>
    %206 = arith.mulf %203, %205 : vector<16x128xf32>
    %207 = arith.truncf %206 : vector<16x128xf32> to vector<16x128xbf16>
    %c111_i32 = arith.constant 111 : i32
    %208 = tpu.dynamic_rotate %86 by %c111_i32 dim 1 : vector<16x128xf32>, i32 -> vector<16x128xf32>
    %c23 = arith.constant 23 : index
    %c0_55 = arith.constant 0 : index
    %209 = vector.load %arg6[%c23, %c0_55] : memref<27x128xf32, #tpu.memory_space<vmem>>, vector<1x128xf32>
    %210 = vector.broadcast %209 : vector<1x128xf32> to vector<16x128xf32>
    %211 = arith.mulf %208, %210 : vector<16x128xf32>
    %212 = arith.truncf %211 : vector<16x128xf32> to vector<16x128xbf16>
    %213 = tpu.concatenate %177, %182, %187, %192, %197, %202, %207, %212 in 0 : vector<16x128xbf16>, vector<16x128xbf16>, vector<16x128xbf16>, vector<16x128xbf16>, vector<16x128xbf16>, vector<16x128xbf16>, vector<16x128xbf16>, vector<16x128xbf16> -> vector<128x128xbf16>
    %c0_56 = arith.constant 0 : index
    %c256 = arith.constant 256 : index
    %214 = vector.load %arg3[%c0_56, %c256] : memref<16x432xbf16, #tpu.memory_space<vmem>>, vector<16x128xbf16>
    %cst_57 = arith.constant dense<0.000000e+00> : vector<16x128xf32>
    %215 = tpu.matmul %214, %213, %cst_57 {dimension_numbers = #tpu.dot_dimension_numbers<[1], [0], [0], [1], [0, 0, 1, 1], [], []>} : vector<16x128xbf16>, vector<128x128xbf16>, vector<16x128xf32> -> vector<16x128xf32>
    %216 = arith.addf %172, %215 : vector<16x128xf32>
    %c109_i32 = arith.constant 109 : i32
    %217 = tpu.dynamic_rotate %86 by %c109_i32 dim 1 : vector<16x128xf32>, i32 -> vector<16x128xf32>
    %c24 = arith.constant 24 : index
    %c0_58 = arith.constant 0 : index
    %218 = vector.load %arg6[%c24, %c0_58] : memref<27x128xf32, #tpu.memory_space<vmem>>, vector<1x128xf32>
    %219 = vector.broadcast %218 : vector<1x128xf32> to vector<16x128xf32>
    %220 = arith.mulf %217, %219 : vector<16x128xf32>
    %221 = arith.truncf %220 : vector<16x128xf32> to vector<16x128xbf16>
    %c108_i32 = arith.constant 108 : i32
    %222 = tpu.dynamic_rotate %86 by %c108_i32 dim 1 : vector<16x128xf32>, i32 -> vector<16x128xf32>
    %c25 = arith.constant 25 : index
    %c0_59 = arith.constant 0 : index
    %223 = vector.load %arg6[%c25, %c0_59] : memref<27x128xf32, #tpu.memory_space<vmem>>, vector<1x128xf32>
    %224 = vector.broadcast %223 : vector<1x128xf32> to vector<16x128xf32>
    %225 = arith.mulf %222, %224 : vector<16x128xf32>
    %226 = arith.truncf %225 : vector<16x128xf32> to vector<16x128xbf16>
    %c107_i32 = arith.constant 107 : i32
    %227 = tpu.dynamic_rotate %86 by %c107_i32 dim 1 : vector<16x128xf32>, i32 -> vector<16x128xf32>
    %c26 = arith.constant 26 : index
    %c0_60 = arith.constant 0 : index
    %228 = vector.load %arg6[%c26, %c0_60] : memref<27x128xf32, #tpu.memory_space<vmem>>, vector<1x128xf32>
    %229 = vector.broadcast %228 : vector<1x128xf32> to vector<16x128xf32>
    %230 = arith.mulf %227, %229 : vector<16x128xf32>
    %231 = arith.truncf %230 : vector<16x128xf32> to vector<16x128xbf16>
    %232 = tpu.concatenate %221, %226, %231 in 0 : vector<16x128xbf16>, vector<16x128xbf16>, vector<16x128xbf16> -> vector<48x128xbf16>
    %c0_61 = arith.constant 0 : index
    %c384 = arith.constant 384 : index
    %233 = vector.load %arg3[%c0_61, %c384] : memref<16x432xbf16, #tpu.memory_space<vmem>>, vector<16x48xbf16>
    %cst_62 = arith.constant dense<0.000000e+00> : vector<16x128xf32>
    %234 = tpu.matmul %233, %232, %cst_62 {dimension_numbers = #tpu.dot_dimension_numbers<[1], [0], [0], [1], [0, 0, 1, 1], [], []>} : vector<16x48xbf16>, vector<48x128xbf16>, vector<16x128xf32> -> vector<16x128xf32>
    %235 = arith.addf %216, %234 : vector<16x128xf32>
    %236 = vector.broadcast %3 : vector<16x1xf32> to vector<16x128xf32>
    %237 = arith.addf %235, %236 : vector<16x128xf32>
    %238 = vector.shape_cast %237 : vector<16x128xf32> to vector<8x2x128xf32>
    %cst_63 = arith.constant dense<0.000000e+00> : vector<8x128xf32>
    %239 = vector.multi_reduction <add>, %238, %cst_63 [1] : vector<8x2x128xf32> to vector<8x128xf32>
    %c0_64 = arith.constant 0 : index
    %c0_65 = arith.constant 0 : index
    %240 = vector.load %arg7[%c0_64, %c0_65] : memref<2x128xf32, #tpu.memory_space<vmem>>, vector<1x128xf32>
    %241 = vector.broadcast %240 : vector<1x128xf32> to vector<8x128xf32>
    %242 = arith.mulf %239, %241 : vector<8x128xf32>
    %cst_66 = arith.constant dense<0.000000e+00> : vector<8xf32>
    %243 = vector.multi_reduction <add>, %242, %cst_66 [1] : vector<8x128xf32> to vector<8xf32>
    %244 = vector.shape_cast %243 : vector<8xf32> to vector<8x1xf32>
    %cst_67 = arith.constant 7.812500e-03 : f32
    %245 = vector.broadcast %cst_67 : f32 to vector<8x1xf32>
    %246 = arith.mulf %244, %245 : vector<8x1xf32>
    %247 = vector.shape_cast %246 : vector<8x1xf32> to vector<8x1x1xf32>
    %248 = vector.shape_cast %247 : vector<8x1x1xf32> to vector<8x1x1xf32>
    %249 = vector.broadcast %248 : vector<8x1x1xf32> to vector<8x2x1xf32>
    %250 = vector.shape_cast %249 : vector<8x2x1xf32> to vector<16x1xf32>
    %251 = vector.broadcast %250 : vector<16x1xf32> to vector<16x128xf32>
    %252 = vector.broadcast %240 : vector<1x128xf32> to vector<16x128xf32>
    %253 = arith.mulf %251, %252 : vector<16x128xf32>
    %c1_68 = arith.constant 1 : index
    %c0_69 = arith.constant 0 : index
    %254 = vector.load %arg7[%c1_68, %c0_69] : memref<2x128xf32, #tpu.memory_space<vmem>>, vector<1x128xf32>
    %255 = vector.broadcast %254 : vector<1x128xf32> to vector<8x128xf32>
    %256 = arith.mulf %239, %255 : vector<8x128xf32>
    %cst_70 = arith.constant dense<0.000000e+00> : vector<8xf32>
    %257 = vector.multi_reduction <add>, %256, %cst_70 [1] : vector<8x128xf32> to vector<8xf32>
    %258 = vector.shape_cast %257 : vector<8xf32> to vector<8x1xf32>
    %cst_71 = arith.constant 7.812500e-03 : f32
    %259 = vector.broadcast %cst_71 : f32 to vector<8x1xf32>
    %260 = arith.mulf %258, %259 : vector<8x1xf32>
    %261 = vector.shape_cast %260 : vector<8x1xf32> to vector<8x1x1xf32>
    %262 = vector.shape_cast %261 : vector<8x1x1xf32> to vector<8x1x1xf32>
    %263 = vector.broadcast %262 : vector<8x1x1xf32> to vector<8x2x1xf32>
    %264 = vector.shape_cast %263 : vector<8x2x1xf32> to vector<16x1xf32>
    %265 = vector.broadcast %264 : vector<16x1xf32> to vector<16x128xf32>
    %266 = vector.broadcast %254 : vector<1x128xf32> to vector<16x128xf32>
    %267 = arith.mulf %265, %266 : vector<16x128xf32>
    %268 = arith.addf %253, %267 : vector<16x128xf32>
    %269 = arith.subf %237, %268 : vector<16x128xf32>
    %270 = arith.mulf %269, %269 : vector<16x128xf32>
    %271 = vector.shape_cast %270 : vector<16x128xf32> to vector<8x2x128xf32>
    %cst_72 = arith.constant dense<0.000000e+00> : vector<8x128xf32>
    %272 = vector.multi_reduction <add>, %271, %cst_72 [1] : vector<8x2x128xf32> to vector<8x128xf32>
    %c0_73 = arith.constant 0 : index
    %c0_74 = arith.constant 0 : index
    %273 = vector.load %arg7[%c0_73, %c0_74] : memref<2x128xf32, #tpu.memory_space<vmem>>, vector<1x128xf32>
    %274 = vector.broadcast %273 : vector<1x128xf32> to vector<8x128xf32>
    %275 = arith.mulf %272, %274 : vector<8x128xf32>
    %cst_75 = arith.constant dense<0.000000e+00> : vector<8xf32>
    %276 = vector.multi_reduction <add>, %275, %cst_75 [1] : vector<8x128xf32> to vector<8xf32>
    %277 = vector.shape_cast %276 : vector<8xf32> to vector<8x1xf32>
    %cst_76 = arith.constant 7.812500e-03 : f32
    %278 = vector.broadcast %cst_76 : f32 to vector<8x1xf32>
    %279 = arith.mulf %277, %278 : vector<8x1xf32>
    %cst_77 = arith.constant 9.99999974E-6 : f32
    %280 = vector.broadcast %cst_77 : f32 to vector<8x1xf32>
    %281 = arith.addf %279, %280 : vector<8x1xf32>
    %282 = math.rsqrt %281 : vector<8x1xf32>
    %283 = vector.shape_cast %282 : vector<8x1xf32> to vector<8x1x1xf32>
    %284 = vector.shape_cast %283 : vector<8x1x1xf32> to vector<8x1x1xf32>
    %285 = vector.broadcast %284 : vector<8x1x1xf32> to vector<8x2x1xf32>
    %286 = vector.shape_cast %285 : vector<8x2x1xf32> to vector<16x1xf32>
    %287 = vector.broadcast %286 : vector<16x1xf32> to vector<16x128xf32>
    %288 = vector.broadcast %273 : vector<1x128xf32> to vector<16x128xf32>
    %289 = arith.mulf %287, %288 : vector<16x128xf32>
    %c1_78 = arith.constant 1 : index
    %c0_79 = arith.constant 0 : index
    %290 = vector.load %arg7[%c1_78, %c0_79] : memref<2x128xf32, #tpu.memory_space<vmem>>, vector<1x128xf32>
    %291 = vector.broadcast %290 : vector<1x128xf32> to vector<8x128xf32>
    %292 = arith.mulf %272, %291 : vector<8x128xf32>
    %cst_80 = arith.constant dense<0.000000e+00> : vector<8xf32>
    %293 = vector.multi_reduction <add>, %292, %cst_80 [1] : vector<8x128xf32> to vector<8xf32>
    %294 = vector.shape_cast %293 : vector<8xf32> to vector<8x1xf32>
    %cst_81 = arith.constant 7.812500e-03 : f32
    %295 = vector.broadcast %cst_81 : f32 to vector<8x1xf32>
    %296 = arith.mulf %294, %295 : vector<8x1xf32>
    %cst_82 = arith.constant 9.99999974E-6 : f32
    %297 = vector.broadcast %cst_82 : f32 to vector<8x1xf32>
    %298 = arith.addf %296, %297 : vector<8x1xf32>
    %299 = math.rsqrt %298 : vector<8x1xf32>
    %300 = vector.shape_cast %299 : vector<8x1xf32> to vector<8x1x1xf32>
    %301 = vector.shape_cast %300 : vector<8x1x1xf32> to vector<8x1x1xf32>
    %302 = vector.broadcast %301 : vector<8x1x1xf32> to vector<8x2x1xf32>
    %303 = vector.shape_cast %302 : vector<8x2x1xf32> to vector<16x1xf32>
    %304 = vector.broadcast %303 : vector<16x1xf32> to vector<16x128xf32>
    %305 = vector.broadcast %290 : vector<1x128xf32> to vector<16x128xf32>
    %306 = arith.mulf %304, %305 : vector<16x128xf32>
    %307 = arith.addf %289, %306 : vector<16x128xf32>
    %308 = arith.mulf %269, %307 : vector<16x128xf32>
    %309 = vector.broadcast %4 : vector<16x1xf32> to vector<16x128xf32>
    %310 = arith.mulf %308, %309 : vector<16x128xf32>
    %311 = vector.broadcast %5 : vector<16x1xf32> to vector<16x128xf32>
    %312 = arith.addf %310, %311 : vector<16x128xf32>
    %cst_83 = arith.constant 0.000000e+00 : f32
    %313 = vector.broadcast %cst_83 : f32 to vector<16x128xf32>
    %314 = arith.maximumf %312, %313 : vector<16x128xf32>
    %c21_i32_84 = arith.constant 21 : i32
    %315 = tpu.dynamic_rotate %314 by %c21_i32_84 dim 1 : vector<16x128xf32>, i32 -> vector<16x128xf32>
    %c0_85 = arith.constant 0 : index
    %c0_86 = arith.constant 0 : index
    %316 = vector.load %arg6[%c0_85, %c0_86] : memref<27x128xf32, #tpu.memory_space<vmem>>, vector<1x128xf32>
    %317 = vector.broadcast %316 : vector<1x128xf32> to vector<16x128xf32>
    %318 = arith.mulf %315, %317 : vector<16x128xf32>
    %319 = arith.truncf %318 : vector<16x128xf32> to vector<16x128xbf16>
    %c20_i32_87 = arith.constant 20 : i32
    %320 = tpu.dynamic_rotate %314 by %c20_i32_87 dim 1 : vector<16x128xf32>, i32 -> vector<16x128xf32>
    %c1_88 = arith.constant 1 : index
    %c0_89 = arith.constant 0 : index
    %321 = vector.load %arg6[%c1_88, %c0_89] : memref<27x128xf32, #tpu.memory_space<vmem>>, vector<1x128xf32>
    %322 = vector.broadcast %321 : vector<1x128xf32> to vector<16x128xf32>
    %323 = arith.mulf %320, %322 : vector<16x128xf32>
    %324 = arith.truncf %323 : vector<16x128xf32> to vector<16x128xbf16>
    %c19_i32_90 = arith.constant 19 : i32
    %325 = tpu.dynamic_rotate %314 by %c19_i32_90 dim 1 : vector<16x128xf32>, i32 -> vector<16x128xf32>
    %c2_91 = arith.constant 2 : index
    %c0_92 = arith.constant 0 : index
    %326 = vector.load %arg6[%c2_91, %c0_92] : memref<27x128xf32, #tpu.memory_space<vmem>>, vector<1x128xf32>
    %327 = vector.broadcast %326 : vector<1x128xf32> to vector<16x128xf32>
    %328 = arith.mulf %325, %327 : vector<16x128xf32>
    %329 = arith.truncf %328 : vector<16x128xf32> to vector<16x128xbf16>
    %c17_i32_93 = arith.constant 17 : i32
    %330 = tpu.dynamic_rotate %314 by %c17_i32_93 dim 1 : vector<16x128xf32>, i32 -> vector<16x128xf32>
    %c3_94 = arith.constant 3 : index
    %c0_95 = arith.constant 0 : index
    %331 = vector.load %arg6[%c3_94, %c0_95] : memref<27x128xf32, #tpu.memory_space<vmem>>, vector<1x128xf32>
    %332 = vector.broadcast %331 : vector<1x128xf32> to vector<16x128xf32>
    %333 = arith.mulf %330, %332 : vector<16x128xf32>
    %334 = arith.truncf %333 : vector<16x128xf32> to vector<16x128xbf16>
    %c16_i32_96 = arith.constant 16 : i32
    %335 = tpu.dynamic_rotate %314 by %c16_i32_96 dim 1 : vector<16x128xf32>, i32 -> vector<16x128xf32>
    %c4_97 = arith.constant 4 : index
    %c0_98 = arith.constant 0 : index
    %336 = vector.load %arg6[%c4_97, %c0_98] : memref<27x128xf32, #tpu.memory_space<vmem>>, vector<1x128xf32>
    %337 = vector.broadcast %336 : vector<1x128xf32> to vector<16x128xf32>
    %338 = arith.mulf %335, %337 : vector<16x128xf32>
    %339 = arith.truncf %338 : vector<16x128xf32> to vector<16x128xbf16>
    %c15_i32_99 = arith.constant 15 : i32
    %340 = tpu.dynamic_rotate %314 by %c15_i32_99 dim 1 : vector<16x128xf32>, i32 -> vector<16x128xf32>
    %c5_100 = arith.constant 5 : index
    %c0_101 = arith.constant 0 : index
    %341 = vector.load %arg6[%c5_100, %c0_101] : memref<27x128xf32, #tpu.memory_space<vmem>>, vector<1x128xf32>
    %342 = vector.broadcast %341 : vector<1x128xf32> to vector<16x128xf32>
    %343 = arith.mulf %340, %342 : vector<16x128xf32>
    %344 = arith.truncf %343 : vector<16x128xf32> to vector<16x128xbf16>
    %c13_i32_102 = arith.constant 13 : i32
    %345 = tpu.dynamic_rotate %314 by %c13_i32_102 dim 1 : vector<16x128xf32>, i32 -> vector<16x128xf32>
    %c6_103 = arith.constant 6 : index
    %c0_104 = arith.constant 0 : index
    %346 = vector.load %arg6[%c6_103, %c0_104] : memref<27x128xf32, #tpu.memory_space<vmem>>, vector<1x128xf32>
    %347 = vector.broadcast %346 : vector<1x128xf32> to vector<16x128xf32>
    %348 = arith.mulf %345, %347 : vector<16x128xf32>
    %349 = arith.truncf %348 : vector<16x128xf32> to vector<16x128xbf16>
    %c12_i32_105 = arith.constant 12 : i32
    %350 = tpu.dynamic_rotate %314 by %c12_i32_105 dim 1 : vector<16x128xf32>, i32 -> vector<16x128xf32>
    %c7_106 = arith.constant 7 : index
    %c0_107 = arith.constant 0 : index
    %351 = vector.load %arg6[%c7_106, %c0_107] : memref<27x128xf32, #tpu.memory_space<vmem>>, vector<1x128xf32>
    %352 = vector.broadcast %351 : vector<1x128xf32> to vector<16x128xf32>
    %353 = arith.mulf %350, %352 : vector<16x128xf32>
    %354 = arith.truncf %353 : vector<16x128xf32> to vector<16x128xbf16>
    %355 = tpu.concatenate %319, %324, %329, %334, %339, %344, %349, %354 in 0 : vector<16x128xbf16>, vector<16x128xbf16>, vector<16x128xbf16>, vector<16x128xbf16>, vector<16x128xbf16>, vector<16x128xbf16>, vector<16x128xbf16>, vector<16x128xbf16> -> vector<128x128xbf16>
    %c0_108 = arith.constant 0 : index
    %c0_109 = arith.constant 0 : index
    %356 = vector.load %arg4[%c0_108, %c0_109] : memref<16x432xbf16, #tpu.memory_space<vmem>>, vector<16x128xbf16>
    %cst_110 = arith.constant dense<0.000000e+00> : vector<16x128xf32>
    %357 = tpu.matmul %356, %355, %cst_110 {dimension_numbers = #tpu.dot_dimension_numbers<[1], [0], [0], [1], [0, 0, 1, 1], [], []>} : vector<16x128xbf16>, vector<128x128xbf16>, vector<16x128xf32> -> vector<16x128xf32>
    %c11_i32_111 = arith.constant 11 : i32
    %358 = tpu.dynamic_rotate %314 by %c11_i32_111 dim 1 : vector<16x128xf32>, i32 -> vector<16x128xf32>
    %c8_112 = arith.constant 8 : index
    %c0_113 = arith.constant 0 : index
    %359 = vector.load %arg6[%c8_112, %c0_113] : memref<27x128xf32, #tpu.memory_space<vmem>>, vector<1x128xf32>
    %360 = vector.broadcast %359 : vector<1x128xf32> to vector<16x128xf32>
    %361 = arith.mulf %358, %360 : vector<16x128xf32>
    %362 = arith.truncf %361 : vector<16x128xf32> to vector<16x128xbf16>
    %c5_i32_114 = arith.constant 5 : i32
    %363 = tpu.dynamic_rotate %314 by %c5_i32_114 dim 1 : vector<16x128xf32>, i32 -> vector<16x128xf32>
    %c9_115 = arith.constant 9 : index
    %c0_116 = arith.constant 0 : index
    %364 = vector.load %arg6[%c9_115, %c0_116] : memref<27x128xf32, #tpu.memory_space<vmem>>, vector<1x128xf32>
    %365 = vector.broadcast %364 : vector<1x128xf32> to vector<16x128xf32>
    %366 = arith.mulf %363, %365 : vector<16x128xf32>
    %367 = arith.truncf %366 : vector<16x128xf32> to vector<16x128xbf16>
    %c4_i32_117 = arith.constant 4 : i32
    %368 = tpu.dynamic_rotate %314 by %c4_i32_117 dim 1 : vector<16x128xf32>, i32 -> vector<16x128xf32>
    %c10_118 = arith.constant 10 : index
    %c0_119 = arith.constant 0 : index
    %369 = vector.load %arg6[%c10_118, %c0_119] : memref<27x128xf32, #tpu.memory_space<vmem>>, vector<1x128xf32>
    %370 = vector.broadcast %369 : vector<1x128xf32> to vector<16x128xf32>
    %371 = arith.mulf %368, %370 : vector<16x128xf32>
    %372 = arith.truncf %371 : vector<16x128xf32> to vector<16x128xbf16>
    %c3_i32_120 = arith.constant 3 : i32
    %373 = tpu.dynamic_rotate %314 by %c3_i32_120 dim 1 : vector<16x128xf32>, i32 -> vector<16x128xf32>
    %c11_121 = arith.constant 11 : index
    %c0_122 = arith.constant 0 : index
    %374 = vector.load %arg6[%c11_121, %c0_122] : memref<27x128xf32, #tpu.memory_space<vmem>>, vector<1x128xf32>
    %375 = vector.broadcast %374 : vector<1x128xf32> to vector<16x128xf32>
    %376 = arith.mulf %373, %375 : vector<16x128xf32>
    %377 = arith.truncf %376 : vector<16x128xf32> to vector<16x128xbf16>
    %c1_i32_123 = arith.constant 1 : i32
    %378 = tpu.dynamic_rotate %314 by %c1_i32_123 dim 1 : vector<16x128xf32>, i32 -> vector<16x128xf32>
    %c12_124 = arith.constant 12 : index
    %c0_125 = arith.constant 0 : index
    %379 = vector.load %arg6[%c12_124, %c0_125] : memref<27x128xf32, #tpu.memory_space<vmem>>, vector<1x128xf32>
    %380 = vector.broadcast %379 : vector<1x128xf32> to vector<16x128xf32>
    %381 = arith.mulf %378, %380 : vector<16x128xf32>
    %382 = arith.truncf %381 : vector<16x128xf32> to vector<16x128xbf16>
    %c13_126 = arith.constant 13 : index
    %c0_127 = arith.constant 0 : index
    %383 = vector.load %arg6[%c13_126, %c0_127] : memref<27x128xf32, #tpu.memory_space<vmem>>, vector<1x128xf32>
    %384 = vector.broadcast %383 : vector<1x128xf32> to vector<16x128xf32>
    %385 = arith.mulf %314, %384 : vector<16x128xf32>
    %386 = arith.truncf %385 : vector<16x128xf32> to vector<16x128xbf16>
    %c127_i32_128 = arith.constant 127 : i32
    %387 = tpu.dynamic_rotate %314 by %c127_i32_128 dim 1 : vector<16x128xf32>, i32 -> vector<16x128xf32>
    %c14_129 = arith.constant 14 : index
    %c0_130 = arith.constant 0 : index
    %388 = vector.load %arg6[%c14_129, %c0_130] : memref<27x128xf32, #tpu.memory_space<vmem>>, vector<1x128xf32>
    %389 = vector.broadcast %388 : vector<1x128xf32> to vector<16x128xf32>
    %390 = arith.mulf %387, %389 : vector<16x128xf32>
    %391 = arith.truncf %390 : vector<16x128xf32> to vector<16x128xbf16>
    %c125_i32_131 = arith.constant 125 : i32
    %392 = tpu.dynamic_rotate %314 by %c125_i32_131 dim 1 : vector<16x128xf32>, i32 -> vector<16x128xf32>
    %c15_132 = arith.constant 15 : index
    %c0_133 = arith.constant 0 : index
    %393 = vector.load %arg6[%c15_132, %c0_133] : memref<27x128xf32, #tpu.memory_space<vmem>>, vector<1x128xf32>
    %394 = vector.broadcast %393 : vector<1x128xf32> to vector<16x128xf32>
    %395 = arith.mulf %392, %394 : vector<16x128xf32>
    %396 = arith.truncf %395 : vector<16x128xf32> to vector<16x128xbf16>
    %397 = tpu.concatenate %362, %367, %372, %377, %382, %386, %391, %396 in 0 : vector<16x128xbf16>, vector<16x128xbf16>, vector<16x128xbf16>, vector<16x128xbf16>, vector<16x128xbf16>, vector<16x128xbf16>, vector<16x128xbf16>, vector<16x128xbf16> -> vector<128x128xbf16>
    %c0_134 = arith.constant 0 : index
    %c128_135 = arith.constant 128 : index
    %398 = vector.load %arg4[%c0_134, %c128_135] : memref<16x432xbf16, #tpu.memory_space<vmem>>, vector<16x128xbf16>
    %cst_136 = arith.constant dense<0.000000e+00> : vector<16x128xf32>
    %399 = tpu.matmul %398, %397, %cst_136 {dimension_numbers = #tpu.dot_dimension_numbers<[1], [0], [0], [1], [0, 0, 1, 1], [], []>} : vector<16x128xbf16>, vector<128x128xbf16>, vector<16x128xf32> -> vector<16x128xf32>
    %400 = arith.addf %357, %399 : vector<16x128xf32>
    %c124_i32_137 = arith.constant 124 : i32
    %401 = tpu.dynamic_rotate %314 by %c124_i32_137 dim 1 : vector<16x128xf32>, i32 -> vector<16x128xf32>
    %c16_138 = arith.constant 16 : index
    %c0_139 = arith.constant 0 : index
    %402 = vector.load %arg6[%c16_138, %c0_139] : memref<27x128xf32, #tpu.memory_space<vmem>>, vector<1x128xf32>
    %403 = vector.broadcast %402 : vector<1x128xf32> to vector<16x128xf32>
    %404 = arith.mulf %401, %403 : vector<16x128xf32>
    %405 = arith.truncf %404 : vector<16x128xf32> to vector<16x128xbf16>
    %c123_i32_140 = arith.constant 123 : i32
    %406 = tpu.dynamic_rotate %314 by %c123_i32_140 dim 1 : vector<16x128xf32>, i32 -> vector<16x128xf32>
    %c17_141 = arith.constant 17 : index
    %c0_142 = arith.constant 0 : index
    %407 = vector.load %arg6[%c17_141, %c0_142] : memref<27x128xf32, #tpu.memory_space<vmem>>, vector<1x128xf32>
    %408 = vector.broadcast %407 : vector<1x128xf32> to vector<16x128xf32>
    %409 = arith.mulf %406, %408 : vector<16x128xf32>
    %410 = arith.truncf %409 : vector<16x128xf32> to vector<16x128xbf16>
    %c117_i32_143 = arith.constant 117 : i32
    %411 = tpu.dynamic_rotate %314 by %c117_i32_143 dim 1 : vector<16x128xf32>, i32 -> vector<16x128xf32>
    %c18_144 = arith.constant 18 : index
    %c0_145 = arith.constant 0 : index
    %412 = vector.load %arg6[%c18_144, %c0_145] : memref<27x128xf32, #tpu.memory_space<vmem>>, vector<1x128xf32>
    %413 = vector.broadcast %412 : vector<1x128xf32> to vector<16x128xf32>
    %414 = arith.mulf %411, %413 : vector<16x128xf32>
    %415 = arith.truncf %414 : vector<16x128xf32> to vector<16x128xbf16>
    %c116_i32_146 = arith.constant 116 : i32
    %416 = tpu.dynamic_rotate %314 by %c116_i32_146 dim 1 : vector<16x128xf32>, i32 -> vector<16x128xf32>
    %c19_147 = arith.constant 19 : index
    %c0_148 = arith.constant 0 : index
    %417 = vector.load %arg6[%c19_147, %c0_148] : memref<27x128xf32, #tpu.memory_space<vmem>>, vector<1x128xf32>
    %418 = vector.broadcast %417 : vector<1x128xf32> to vector<16x128xf32>
    %419 = arith.mulf %416, %418 : vector<16x128xf32>
    %420 = arith.truncf %419 : vector<16x128xf32> to vector<16x128xbf16>
    %c115_i32_149 = arith.constant 115 : i32
    %421 = tpu.dynamic_rotate %314 by %c115_i32_149 dim 1 : vector<16x128xf32>, i32 -> vector<16x128xf32>
    %c20_150 = arith.constant 20 : index
    %c0_151 = arith.constant 0 : index
    %422 = vector.load %arg6[%c20_150, %c0_151] : memref<27x128xf32, #tpu.memory_space<vmem>>, vector<1x128xf32>
    %423 = vector.broadcast %422 : vector<1x128xf32> to vector<16x128xf32>
    %424 = arith.mulf %421, %423 : vector<16x128xf32>
    %425 = arith.truncf %424 : vector<16x128xf32> to vector<16x128xbf16>
    %c113_i32_152 = arith.constant 113 : i32
    %426 = tpu.dynamic_rotate %314 by %c113_i32_152 dim 1 : vector<16x128xf32>, i32 -> vector<16x128xf32>
    %c21_153 = arith.constant 21 : index
    %c0_154 = arith.constant 0 : index
    %427 = vector.load %arg6[%c21_153, %c0_154] : memref<27x128xf32, #tpu.memory_space<vmem>>, vector<1x128xf32>
    %428 = vector.broadcast %427 : vector<1x128xf32> to vector<16x128xf32>
    %429 = arith.mulf %426, %428 : vector<16x128xf32>
    %430 = arith.truncf %429 : vector<16x128xf32> to vector<16x128xbf16>
    %c112_i32_155 = arith.constant 112 : i32
    %431 = tpu.dynamic_rotate %314 by %c112_i32_155 dim 1 : vector<16x128xf32>, i32 -> vector<16x128xf32>
    %c22_156 = arith.constant 22 : index
    %c0_157 = arith.constant 0 : index
    %432 = vector.load %arg6[%c22_156, %c0_157] : memref<27x128xf32, #tpu.memory_space<vmem>>, vector<1x128xf32>
    %433 = vector.broadcast %432 : vector<1x128xf32> to vector<16x128xf32>
    %434 = arith.mulf %431, %433 : vector<16x128xf32>
    %435 = arith.truncf %434 : vector<16x128xf32> to vector<16x128xbf16>
    %c111_i32_158 = arith.constant 111 : i32
    %436 = tpu.dynamic_rotate %314 by %c111_i32_158 dim 1 : vector<16x128xf32>, i32 -> vector<16x128xf32>
    %c23_159 = arith.constant 23 : index
    %c0_160 = arith.constant 0 : index
    %437 = vector.load %arg6[%c23_159, %c0_160] : memref<27x128xf32, #tpu.memory_space<vmem>>, vector<1x128xf32>
    %438 = vector.broadcast %437 : vector<1x128xf32> to vector<16x128xf32>
    %439 = arith.mulf %436, %438 : vector<16x128xf32>
    %440 = arith.truncf %439 : vector<16x128xf32> to vector<16x128xbf16>
    %441 = tpu.concatenate %405, %410, %415, %420, %425, %430, %435, %440 in 0 : vector<16x128xbf16>, vector<16x128xbf16>, vector<16x128xbf16>, vector<16x128xbf16>, vector<16x128xbf16>, vector<16x128xbf16>, vector<16x128xbf16>, vector<16x128xbf16> -> vector<128x128xbf16>
    %c0_161 = arith.constant 0 : index
    %c256_162 = arith.constant 256 : index
    %442 = vector.load %arg4[%c0_161, %c256_162] : memref<16x432xbf16, #tpu.memory_space<vmem>>, vector<16x128xbf16>
    %cst_163 = arith.constant dense<0.000000e+00> : vector<16x128xf32>
    %443 = tpu.matmul %442, %441, %cst_163 {dimension_numbers = #tpu.dot_dimension_numbers<[1], [0], [0], [1], [0, 0, 1, 1], [], []>} : vector<16x128xbf16>, vector<128x128xbf16>, vector<16x128xf32> -> vector<16x128xf32>
    %444 = arith.addf %400, %443 : vector<16x128xf32>
    %c109_i32_164 = arith.constant 109 : i32
    %445 = tpu.dynamic_rotate %314 by %c109_i32_164 dim 1 : vector<16x128xf32>, i32 -> vector<16x128xf32>
    %c24_165 = arith.constant 24 : index
    %c0_166 = arith.constant 0 : index
    %446 = vector.load %arg6[%c24_165, %c0_166] : memref<27x128xf32, #tpu.memory_space<vmem>>, vector<1x128xf32>
    %447 = vector.broadcast %446 : vector<1x128xf32> to vector<16x128xf32>
    %448 = arith.mulf %445, %447 : vector<16x128xf32>
    %449 = arith.truncf %448 : vector<16x128xf32> to vector<16x128xbf16>
    %c108_i32_167 = arith.constant 108 : i32
    %450 = tpu.dynamic_rotate %314 by %c108_i32_167 dim 1 : vector<16x128xf32>, i32 -> vector<16x128xf32>
    %c25_168 = arith.constant 25 : index
    %c0_169 = arith.constant 0 : index
    %451 = vector.load %arg6[%c25_168, %c0_169] : memref<27x128xf32, #tpu.memory_space<vmem>>, vector<1x128xf32>
    %452 = vector.broadcast %451 : vector<1x128xf32> to vector<16x128xf32>
    %453 = arith.mulf %450, %452 : vector<16x128xf32>
    %454 = arith.truncf %453 : vector<16x128xf32> to vector<16x128xbf16>
    %c107_i32_170 = arith.constant 107 : i32
    %455 = tpu.dynamic_rotate %314 by %c107_i32_170 dim 1 : vector<16x128xf32>, i32 -> vector<16x128xf32>
    %c26_171 = arith.constant 26 : index
    %c0_172 = arith.constant 0 : index
    %456 = vector.load %arg6[%c26_171, %c0_172] : memref<27x128xf32, #tpu.memory_space<vmem>>, vector<1x128xf32>
    %457 = vector.broadcast %456 : vector<1x128xf32> to vector<16x128xf32>
    %458 = arith.mulf %455, %457 : vector<16x128xf32>
    %459 = arith.truncf %458 : vector<16x128xf32> to vector<16x128xbf16>
    %460 = tpu.concatenate %449, %454, %459 in 0 : vector<16x128xbf16>, vector<16x128xbf16>, vector<16x128xbf16> -> vector<48x128xbf16>
    %c0_173 = arith.constant 0 : index
    %c384_174 = arith.constant 384 : index
    %461 = vector.load %arg4[%c0_173, %c384_174] : memref<16x432xbf16, #tpu.memory_space<vmem>>, vector<16x48xbf16>
    %cst_175 = arith.constant dense<0.000000e+00> : vector<16x128xf32>
    %462 = tpu.matmul %461, %460, %cst_175 {dimension_numbers = #tpu.dot_dimension_numbers<[1], [0], [0], [1], [0, 0, 1, 1], [], []>} : vector<16x48xbf16>, vector<48x128xbf16>, vector<16x128xf32> -> vector<16x128xf32>
    %463 = arith.addf %444, %462 : vector<16x128xf32>
    %464 = vector.broadcast %6 : vector<16x1xf32> to vector<16x128xf32>
    %465 = arith.addf %463, %464 : vector<16x128xf32>
    %466 = arith.addf %465, %9 : vector<16x128xf32>
    %c0_176 = arith.constant 0 : index
    %c0_177 = arith.constant 0 : index
    %467 = vector.load %arg8[%c0_176, %c0_177] : memref<16x128xf32, #tpu.memory_space<vmem>>, vector<16x128xf32>
    tpu.vector_store %arg8[%c0_176, %c0_177], %466 {strides = array<i32>} : memref<16x128xf32, #tpu.memory_space<vmem>>, vector<16x128xf32>,
    return
  }
  func.func @transform_0(%arg0: i32) -> (i32, i32) {
    %c0_i32 = arith.constant 0 : i32
    %c0_i32_0 = arith.constant 0 : i32
    %c0_i32_1 = arith.constant 0 : i32
    return %c0_i32, %c0_i32_0 : i32, i32
  }
  func.func @transform_1(%arg0: i32) -> (i32, i32) {
    %c0_i32 = arith.constant 0 : i32
    %c0_i32_0 = arith.constant 0 : i32
    %c0_i32_1 = arith.constant 0 : i32
    return %c0_i32, %c0_i32_0 : i32, i32
  }
  func.func @transform_2(%arg0: i32) -> (i32, i32) {
    %c0_i32 = arith.constant 0 : i32
    %c0_i32_0 = arith.constant 0 : i32
    %c0_i32_1 = arith.constant 0 : i32
    return %c0_i32, %c0_i32_0 : i32, i32
  }
  func.func @transform_3(%arg0: i32) -> (i32, i32) {
    %c0_i32 = arith.constant 0 : i32
    %c0_i32_0 = arith.constant 0 : i32
    %c0_i32_1 = arith.constant 0 : i32
    return %c0_i32, %c0_i32_0 : i32, i32
  }
  func.func @transform_4(%arg0: i32) -> (i32, i32) {
    %c0_i32 = arith.constant 0 : i32
    %c0_i32_0 = arith.constant 0 : i32
    %c0_i32_1 = arith.constant 0 : i32
    return %c0_i32, %c0_i32_0 : i32, i32
  }
  func.func @transform_5(%arg0: i32) -> (i32, i32) {
    %c0_i32 = arith.constant 0 : i32
    %c0_i32_0 = arith.constant 0 : i32
    %c0_i32_1 = arith.constant 0 : i32
    return %c0_i32, %c0_i32_0 : i32, i32
  }
  func.func @transform_6(%arg0: i32) -> (i32, i32) {
    %c0_i32 = arith.constant 0 : i32
    %c0_i32_0 = arith.constant 0 : i32
    %c0_i32_1 = arith.constant 0 : i32
    return %c0_i32, %c0_i32_0 : i32, i32
  }
  func.func @transform_7(%arg0: i32) -> (i32, i32) {
    %c0_i32 = arith.constant 0 : i32
    %c0_i32_0 = arith.constant 0 : i32
    %c0_i32_1 = arith.constant 0 : i32
    return %c0_i32, %c0_i32_0 : i32, i32
  }
}

</mosaic_0001>

<llo_original>
// kernel: basic_block_forward.1
$region0: #{basic_block_forward.1}
  #allocation0 [shape = 'u32[]', space=smem, size = 0x4, offset = 0x4, fixed_abs, tag = 'smem constant byte address 0x4 - core index']
  #allocation1 [shape = 'u32[144,128]{1,0:T(1,128)}', space=vmem, size = 0x12000, scoped, tag = 'internal scratch']
  %s0 = inlined_call_operand.vmem [shape: bf16[256,128], index: 0, kind: input, shape index: {}]
  %s1 = inlined_call_operand.vmem [shape: bf16[16,256], index: 1, kind: input, shape index: {}]
  %s2 = inlined_call_operand.vmem [shape: bf16[16,432], index: 2, kind: input, shape index: {}]
  %s3 = inlined_call_operand.vmem [shape: bf16[16,432], index: 3, kind: input, shape index: {}]
  %s4 = inlined_call_operand.vmem [shape: f32[16,6], index: 4, kind: input, shape index: {}]
  %s5 = inlined_call_operand.vmem [shape: f32[27,128], index: 5, kind: input, shape index: {}]
  %s6 = inlined_call_operand.vmem [shape: f32[2,128], index: 6, kind: input, shape index: {}]
  %s7 = inlined_call_operand.vmem [shape: f32[16,128], index: 7, kind: output, shape index: {}]
  %s8 = sld [smem:[#allocation0]]
  $region38: #{basic_block_forward.1} parent=0
    _
  %s10 = ssub.s32 1, %s8
  %s11 = scalar_select 0, %s10, %s8
  // Predicated region
  $region2: #{basic_block_forward.1} parent=0 // pred_check
    _
  $region3: #{basic_block_forward.1} parent=0 // pred_check_branch
    %13 = sbr.rel (0) target = $region5
  $region4: #{basic_block_forward.1} parent=0 // pred_region
    _
  $region5: #{basic_block_forward.1} parent=0 // pred_fallthru
    _
  // Predicated region
  $region6: #{basic_block_forward.1} parent=0 // pred_check
    _
  $region7: #{basic_block_forward.1} parent=0 // pred_check_branch
    %15 = sbr.rel (0) target = $region9
  $region8: #{basic_block_forward.1} parent=0 // pred_region
    _
  $region9: #{basic_block_forward.1} parent=0 // pred_fallthru
    _
  // Predicated region
  $region10: #{basic_block_forward.1} parent=0 // pred_check
    _
  $region11: #{basic_block_forward.1} parent=0 // pred_check_branch
    %17 = sbr.rel (0) target = $region13
  $region12: #{basic_block_forward.1} parent=0 // pred_region
    _
  $region13: #{basic_block_forward.1} parent=0 // pred_fallthru
    _
  // Predicated region
  $region14: #{basic_block_forward.1} parent=0 // pred_check
    _
  $region15: #{basic_block_forward.1} parent=0 // pred_check_branch
    %19 = sbr.rel (0) target = $region17
  $region16: #{basic_block_forward.1} parent=0 // pred_region
    _
  $region17: #{basic_block_forward.1} parent=0 // pred_fallthru
    _
  // Predicated region
  $region18: #{basic_block_forward.1} parent=0 // pred_check
    _
  $region19: #{basic_block_forward.1} parent=0 // pred_check_branch
    %21 = sbr.rel (0) target = $region21
  $region20: #{basic_block_forward.1} parent=0 // pred_region
    _
  $region21: #{basic_block_forward.1} parent=0 // pred_fallthru
    _
  // Predicated region
  $region22: #{basic_block_forward.1} parent=0 // pred_check
    _
  $region23: #{basic_block_forward.1} parent=0 // pred_check_branch
    %23 = sbr.rel (0) target = $region25
  $region24: #{basic_block_forward.1} parent=0 // pred_region
    _
  $region25: #{basic_block_forward.1} parent=0 // pred_fallthru
    _
  // Predicated region
  $region26: #{basic_block_forward.1} parent=0 // pred_check
    _
  $region27: #{basic_block_forward.1} parent=0 // pred_check_branch
    %25 = sbr.rel (0) target = $region29
  $region28: #{basic_block_forward.1} parent=0 // pred_region
    _
  $region29: #{basic_block_forward.1} parent=0 // pred_fallthru
    _
  %v27 = vld [vmem:[%s4] sm:$0xff]
  %v28 = vld [vmem:[%s4 + $0x8] sm:$0xff]
  %v29 = vld [vmem:[%s1] sm:$0xff]
  %v30 = vld [vmem:[%s1 + $0x8] sm:$0xff]
  %v31 = vld [vmem:[%s0] sm:$0xf]
  %v32 = vld [vmem:[%s0 + $0x4] sm:$0xf]
  %v33 = vld [vmem:[%s0 + $0x8] sm:$0xf]
  %v34 = vld [vmem:[%s0 + $0xc] sm:$0xf]
  %v35 = vld [vmem:[%s0 + $0x10] sm:$0xf]
  %v36 = vld [vmem:[%s0 + $0x14] sm:$0xf]
  %v37 = vld [vmem:[%s0 + $0x18] sm:$0xf]
  %v38 = vld [vmem:[%s0 + $0x1c] sm:$0xf]
  %v39 = vld [vmem:[%s0 + $0x20] sm:$0xf]
  %v40 = vld [vmem:[%s0 + $0x24] sm:$0xf]
  %v41 = vld [vmem:[%s0 + $0x28] sm:$0xf]
  %v42 = vld [vmem:[%s0 + $0x2c] sm:$0xf]
  %v43 = vld [vmem:[%s0 + $0x30] sm:$0xf]
  %v44 = vld [vmem:[%s0 + $0x34] sm:$0xf]
  %v45 = vld [vmem:[%s0 + $0x38] sm:$0xf]
  %v46 = vld [vmem:[%s0 + $0x3c] sm:$0xf]
  %v47 = vld [vmem:[%s0 + $0x40] sm:$0xf]
  %v48 = vld [vmem:[%s0 + $0x44] sm:$0xf]
  %v49 = vld [vmem:[%s0 + $0x48] sm:$0xf]
  %v50 = vld [vmem:[%s0 + $0x4c] sm:$0xf]
  %v51 = vld [vmem:[%s0 + $0x50] sm:$0xf]
  %v52 = vld [vmem:[%s0 + $0x54] sm:$0xf]
  %v53 = vld [vmem:[%s0 + $0x58] sm:$0xf]
  %v54 = vld [vmem:[%s0 + $0x5c] sm:$0xf]
  %v55 = vld [vmem:[%s0 + $0x60] sm:$0xf]
  %v56 = vld [vmem:[%s0 + $0x64] sm:$0xf]
  %v57 = vld [vmem:[%s0 + $0x68] sm:$0xf]
  %v58 = vld [vmem:[%s0 + $0x6c] sm:$0xf]
  %v59 = vld [vmem:[%s0 + $0x70] sm:$0xf]
  %v60 = vld [vmem:[%s0 + $0x74] sm:$0xf]
  %v61 = vld [vmem:[%s0 + $0x78] sm:$0xf]
  %v62 = vld [vmem:[%s0 + $0x7c] sm:$0xf]
  %v65 = vunpack.c.l.b16 %v29
  %v66 = vunpack.c.h.b16 %v29
  %v67 = vunpack.c.l.b16 %v30
  %v68 = vunpack.c.h.b16 %v30
  %v69 = vpack.c.b16 %v67, %v65
  %v70 = vpack.c.b16 %v68, %v66
  %v105 = vunpack.c.l.b16 %v31
  %v106 = vunpack.c.l.b16 %v32
  %v107 = vunpack.c.l.b16 %v33
  %v108 = vunpack.c.l.b16 %v34
  %v109 = vunpack.c.l.b16 %v35
  %v110 = vunpack.c.l.b16 %v36
  %v111 = vunpack.c.l.b16 %v37
  %v112 = vunpack.c.l.b16 %v38
  %v113 = vunpack.c.l.b16 %v39
  %v114 = vunpack.c.l.b16 %v40
  %v115 = vunpack.c.l.b16 %v41
  %v116 = vunpack.c.l.b16 %v42
  %v117 = vunpack.c.l.b16 %v43
  %v118 = vunpack.c.l.b16 %v44
  %v119 = vunpack.c.l.b16 %v45
  %v120 = vunpack.c.l.b16 %v46
  %v121 = vunpack.c.l.b16 %v47
  %v122 = vunpack.c.l.b16 %v48
  %v123 = vunpack.c.l.b16 %v49
  %v124 = vunpack.c.l.b16 %v50
  %v125 = vunpack.c.l.b16 %v51
  %v126 = vunpack.c.l.b16 %v52
  %v127 = vunpack.c.l.b16 %v53
  %v128 = vunpack.c.l.b16 %v54
  %v129 = vunpack.c.l.b16 %v55
  %v130 = vunpack.c.l.b16 %v56
  %v131 = vunpack.c.l.b16 %v57
  %v132 = vunpack.c.l.b16 %v58
  %v133 = vunpack.c.l.b16 %v59
  %v134 = vunpack.c.l.b16 %v60
  %v135 = vunpack.c.l.b16 %v61
  %v136 = vunpack.c.l.b16 %v62
  %v137 = vpack.c.b16 %v106, %v105
  %v138 = vpack.c.b16 %v108, %v107
  %v139 = vpack.c.b16 %v110, %v109
  %v140 = vpack.c.b16 %v112, %v111
  %v141 = vpack.c.b16 %v114, %v113
  %v142 = vpack.c.b16 %v116, %v115
  %v143 = vpack.c.b16 %v118, %v117
  %v144 = vpack.c.b16 %v120, %v119
  %v145 = vpack.c.b16 %v122, %v121
  %v146 = vpack.c.b16 %v124, %v123
  %v147 = vpack.c.b16 %v126, %v125
  %v148 = vpack.c.b16 %v128, %v127
  %v149 = vpack.c.b16 %v130, %v129
  %v150 = vpack.c.b16 %v132, %v131
  %v151 = vpack.c.b16 %v134, %v133
  %v152 = vpack.c.b16 %v136, %v135
  %169 = vmatprep.subr.bf16.mxu0 0
  %170 = vmatpush1.bf16.msra.mxu0 %v144
  %171 = vmatprep.subr.bf16.mxu0 0
  %172 = vmatpush1.bf16.msra.mxu0 %v143
  %173 = vmatprep.subr.bf16.mxu0 0
  %174 = vmatpush1.bf16.msra.mxu0 %v142
  %175 = vmatprep.subr.bf16.mxu0 0
  %176 = vmatpush1.bf16.msra.mxu0 %v141
  %177 = vmatprep.subr.bf16.mxu0 0
  %178 = vmatpush1.bf16.msra.mxu0 %v140
  %179 = vmatprep.subr.bf16.mxu0 0
  %180 = vmatpush1.bf16.msra.mxu0 %v139
  %181 = vmatprep.subr.bf16.mxu0 0
  %182 = vmatpush1.bf16.msra.mxu0 %v138
  %183 = vmatprep.subr.bf16.mxu0 0
  %184 = vmatpush1.bf16.msra.mxu0 %v137
  %185 = vmatprep.subr.bf16.mxu0 0
  %186 = vmatpush2.bf16.msra.mxu0 %v152
  %187 = vmatprep.subr.bf16.mxu0 0
  %188 = vmatpush2.bf16.msra.mxu0 %v151
  %189 = vmatprep.subr.bf16.mxu0 0
  %190 = vmatpush2.bf16.msra.mxu0 %v150
  %191 = vmatprep.subr.bf16.mxu0 0
  %192 = vmatpush2.bf16.msra.mxu0 %v149
  %193 = vmatprep.subr.bf16.mxu0 0
  %194 = vmatpush2.bf16.msra.mxu0 %v148
  %195 = vmatprep.subr.bf16.mxu0 0
  %196 = vmatpush2.bf16.msra.mxu0 %v147
  %197 = vmatprep.subr.bf16.mxu0 0
  %198 = vmatpush2.bf16.msra.mxu0 %v146
  %199 = vmatprep.subr.bf16.mxu0 0
  %200 = vmatpush2.bf16.msra.mxu0 %v145
  %201 = vmatprep.mubr.bf16.mxu0 %v70
  %202 = vmatmul.mubr.bf16.gmra.mxu0 %v69
  %v203 = vpop.f32.mrf.mxu0
  %v204 = vadd.f32 0.0, %v203
  %v205 = vpop.f32.mrf.mxu0
  %v206 = vpop.f32.mrf.mxu0
  %v207 = vadd.f32 0.0, %v206
  %v208 = vpop.f32.mrf.mxu0
  %209 = vdwg.mxu0
  %v212 = vcombine.high %v204, %v204
  %v214 = vunpack.c.l.s4 1983009808
  %v215 = vunpack.c.0.s8 %v214
  %v216 = vlaneseq
  %v217 = vshrl.u32 %v216, 7
  %v218 = vsub.s32 %v215, %v217
  %v219 = vrot.slane %v204, %v218
  %v221 = vunpack.c.l.s4 1983009808
  %v222 = vunpack.c.0.s8 %v221
  %v223 = vlaneseq
  %v224 = vshrl.u32 %v223, 7
  %v225 = vsub.s32 %v222, %v224
  %v226 = vrot.slane %v212, %v225
  %v227 = vcombine.high %v219, %v219
  %v228 = vcombine.high %v226, %v226
  %v229 = vcombine.high %v207, %v207
  %v231 = vunpack.c.l.s4 1983009808
  %v232 = vunpack.c.0.s8 %v231
  %v233 = vlaneseq
  %v234 = vshrl.u32 %v233, 7
  %v235 = vsub.s32 %v232, %v234
  %v236 = vrot.slane %v207, %v235
  %v238 = vunpack.c.l.s4 1983009808
  %v239 = vunpack.c.0.s8 %v238
  %v240 = vlaneseq
  %v241 = vshrl.u32 %v240, 7
  %v242 = vsub.s32 %v239, %v241
  %v243 = vrot.slane %v229, %v242
  %v244 = vcombine.high %v236, %v236
  %v245 = vcombine.high %v243, %v243
  %vm254 = vcmask 1041408
  %v255 = vsel %vm254, %v219, 0.0
  %v256 = vrot.slane %v255, 4
  %v257 = vadd.f32 %v255, %v256
  %v258 = vrot.slane %v257, 2
  %v259 = vadd.f32 %v257, %v258
  %v260 = vrot.slane %v259, 1
  %v261 = vadd.f32 %v259, %v260
  %v262 = vsel %vm254, %v227, 0.0
  %v263 = vrot.slane %v262, 4
  %v264 = vadd.f32 %v262, %v263
  %v265 = vrot.slane %v264, 2
  %v266 = vadd.f32 %v264, %v265
  %v267 = vrot.slane %v266, 1
  %v268 = vadd.f32 %v266, %v267
  %v269 = vsel %vm254, %v226, 0.0
  %v270 = vrot.slane %v269, 4
  %v271 = vadd.f32 %v269, %v270
  %v272 = vrot.slane %v271, 2
  %v273 = vadd.f32 %v271, %v272
  %v274 = vrot.slane %v273, 1
  %v275 = vadd.f32 %v273, %v274
  %v276 = vsel %vm254, %v228, 0.0
  %v277 = vrot.slane %v276, 4
  %v278 = vadd.f32 %v276, %v277
  %v279 = vrot.slane %v278, 2
  %v280 = vadd.f32 %v278, %v279
  %v281 = vrot.slane %v280, 1
  %v282 = vadd.f32 %v280, %v281
  %v283 = vsel %vm254, %v236, 0.0
  %v284 = vrot.slane %v283, 4
  %v285 = vadd.f32 %v283, %v284
  %v286 = vrot.slane %v285, 2
  %v287 = vadd.f32 %v285, %v286
  %v288 = vrot.slane %v287, 1
  %v289 = vadd.f32 %v287, %v288
  %v290 = vsel %vm254, %v244, 0.0
  %v291 = vrot.slane %v290, 4
  %v292 = vadd.f32 %v290, %v291
  %v293 = vrot.slane %v292, 2
  %v294 = vadd.f32 %v292, %v293
  %v295 = vrot.slane %v294, 1
  %v296 = vadd.f32 %v294, %v295
  %v297 = vsel %vm254, %v243, 0.0
  %v298 = vrot.slane %v297, 4
  %v299 = vadd.f32 %v297, %v298
  %v300 = vrot.slane %v299, 2
  %v301 = vadd.f32 %v299, %v300
  %v302 = vrot.slane %v301, 1
  %v303 = vadd.f32 %v301, %v302
  %v304 = vsel %vm254, %v245, 0.0
  %v305 = vrot.slane %v304, 4
  %v306 = vadd.f32 %v304, %v305
  %v307 = vrot.slane %v306, 2
  %v308 = vadd.f32 %v306, %v307
  %v309 = vrot.slane %v308, 1
  %v310 = vadd.f32 %v308, %v309
  %v311 = vld [vmem:[%s6] sm:$0x1]
  %v312 = vlaneseq
  %v313 = vshrl.u32 %v312, 7
  %v314 = vsub.s32 0, %v313
  %v315 = vrot.slane %v311, %v314
  %v316 = vmul.f32 %v261, %v315
  %v317 = vmul.f32 %v268, %v315
  %v318 = vmul.f32 %v275, %v315
  %v319 = vmul.f32 %v282, %v315
  %v320 = vmul.f32 %v289, %v315
  %v321 = vmul.f32 %v296, %v315
  %v322 = vmul.f32 %v303, %v315
  %v323 = vmul.f32 %v310, %v315
  %v332 = vrot.slane %v317, 7
  %vm333 = vcmask 1041409
  %v334 = vsel %vm333, %v332, %v316
  %v335 = vrot.slane %v318, 6
  %vm336 = vcmask 1042434
  %v337 = vsel %vm336, %v335, %v334
  %v338 = vrot.slane %v319, 5
  %vm339 = vcmask 1043459
  %v340 = vsel %vm339, %v338, %v337
  %v341 = vrot.slane %v320, 4
  %vm342 = vcmask 1044484
  %v343 = vsel %vm342, %v341, %v340
  %v344 = vrot.slane %v321, 3
  %vm345 = vcmask 1045509
  %v346 = vsel %vm345, %v344, %v343
  %v347 = vrot.slane %v322, 2
  %vm348 = vcmask 1046534
  %v349 = vsel %vm348, %v347, %v346
  %v350 = vrot.slane %v323, 1
  %vm351 = vcmask 1047559
  %v352 = vsel %vm351, %v350, %v349
  %354 = vadd.xlane.f32.xlu0 %v352
  %v355 = vpop.xlane.xlu0 %354
  %v356 = vmul.f32 %v355, 0.0078125
  %v358 = vlaneseq
  %v359 = vshrl.u32 %v358, 7
  %v360 = vsub.s32 0, %v359
  %v361 = vrot.slane %v356, %v360
  %v362 = vlaneseq
  %v363 = vshrl.u32 %v362, 7
  %v364 = vsub.s32 1, %v363
  %v365 = vrot.slane %v356, %v364
  %v366 = vlaneseq
  %v367 = vshrl.u32 %v366, 7
  %v368 = vsub.s32 2, %v367
  %v369 = vrot.slane %v356, %v368
  %v370 = vlaneseq
  %v371 = vshrl.u32 %v370, 7
  %v372 = vsub.s32 3, %v371
  %v373 = vrot.slane %v356, %v372
  %v374 = vlaneseq
  %v375 = vshrl.u32 %v374, 7
  %v376 = vsub.s32 4, %v375
  %v377 = vrot.slane %v356, %v376
  %v378 = vlaneseq
  %v379 = vshrl.u32 %v378, 7
  %v380 = vsub.s32 5, %v379
  %v381 = vrot.slane %v356, %v380
  %v382 = vlaneseq
  %v383 = vshrl.u32 %v382, 7
  %v384 = vsub.s32 6, %v383
  %v385 = vrot.slane %v356, %v384
  %v386 = vlaneseq
  %v387 = vshrl.u32 %v386, 7
  %v388 = vsub.s32 7, %v387
  %v389 = vrot.slane %v356, %v388
  %v399 = vcombine.high %v315, %v315
  %v401 = vunpack.c.l.s4 1983009808
  %v402 = vunpack.c.0.s8 %v401
  %v403 = vlaneseq
  %v404 = vshrl.u32 %v403, 7
  %v405 = vsub.s32 %v402, %v404
  %v406 = vrot.slane %v315, %v405
  %v408 = vunpack.c.l.s4 1983009808
  %v409 = vunpack.c.0.s8 %v408
  %v410 = vlaneseq
  %v411 = vshrl.u32 %v410, 7
  %v412 = vsub.s32 %v409, %v411
  %v413 = vrot.slane %v399, %v412
  %v414 = vcombine.high %v406, %v406
  %v415 = vcombine.high %v413, %v413
  %v420 = vmul.f32 %v361, %v406
  %v421 = vmul.f32 %v365, %v414
  %v422 = vmul.f32 %v369, %v413
  %v423 = vmul.f32 %v373, %v415
  %v424 = vmul.f32 %v377, %v406
  %v425 = vmul.f32 %v381, %v414
  %v426 = vmul.f32 %v385, %v413
  %v427 = vmul.f32 %v389, %v415
  %v428 = vld [vmem:[%s6 + $0x1] sm:$0x1]
  %v429 = vlaneseq
  %v430 = vshrl.u32 %v429, 7
  %v431 = vsub.s32 0, %v430
  %v432 = vrot.slane %v428, %v431
  %v433 = vmul.f32 %v261, %v432
  %v434 = vmul.f32 %v268, %v432
  %v435 = vmul.f32 %v275, %v432
  %v436 = vmul.f32 %v282, %v432
  %v437 = vmul.f32 %v289, %v432
  %v438 = vmul.f32 %v296, %v432
  %v439 = vmul.f32 %v303, %v432
  %v440 = vmul.f32 %v310, %v432
  %v449 = vrot.slane %v434, 7
  %v450 = vsel %vm333, %v449, %v433
  %v451 = vrot.slane %v435, 6
  %v452 = vsel %vm336, %v451, %v450
  %v453 = vrot.slane %v436, 5
  %v454 = vsel %vm339, %v453, %v452
  %v455 = vrot.slane %v437, 4
  %v456 = vsel %vm342, %v455, %v454
  %v457 = vrot.slane %v438, 3
  %v458 = vsel %vm345, %v457, %v456
  %v459 = vrot.slane %v439, 2
  %v460 = vsel %vm348, %v459, %v458
  %v461 = vrot.slane %v440, 1
  %v462 = vsel %vm351, %v461, %v460
  %464 = vadd.xlane.f32.xlu0 %v462
  %v465 = vpop.xlane.xlu0 %464
  %v466 = vmul.f32 %v465, 0.0078125
  %v468 = vlaneseq
  %v469 = vshrl.u32 %v468, 7
  %v470 = vsub.s32 0, %v469
  %v471 = vrot.slane %v466, %v470
  %v472 = vlaneseq
  %v473 = vshrl.u32 %v472, 7
  %v474 = vsub.s32 1, %v473
  %v475 = vrot.slane %v466, %v474
  %v476 = vlaneseq
  %v477 = vshrl.u32 %v476, 7
  %v478 = vsub.s32 2, %v477
  %v479 = vrot.slane %v466, %v478
  %v480 = vlaneseq
  %v481 = vshrl.u32 %v480, 7
  %v482 = vsub.s32 3, %v481
  %v483 = vrot.slane %v466, %v482
  %v484 = vlaneseq
  %v485 = vshrl.u32 %v484, 7
  %v486 = vsub.s32 4, %v485
  %v487 = vrot.slane %v466, %v486
  %v488 = vlaneseq
  %v489 = vshrl.u32 %v488, 7
  %v490 = vsub.s32 5, %v489
  %v491 = vrot.slane %v466, %v490
  %v492 = vlaneseq
  %v493 = vshrl.u32 %v492, 7
  %v494 = vsub.s32 6, %v493
  %v495 = vrot.slane %v466, %v494
  %v496 = vlaneseq
  %v497 = vshrl.u32 %v496, 7
  %v498 = vsub.s32 7, %v497
  %v499 = vrot.slane %v466, %v498
  %v509 = vcombine.high %v432, %v432
  %v511 = vunpack.c.l.s4 1983009808
  %v512 = vunpack.c.0.s8 %v511
  %v513 = vlaneseq
  %v514 = vshrl.u32 %v513, 7
  %v515 = vsub.s32 %v512, %v514
  %v516 = vrot.slane %v432, %v515
  %v518 = vunpack.c.l.s4 1983009808
  %v519 = vunpack.c.0.s8 %v518
  %v520 = vlaneseq
  %v521 = vshrl.u32 %v520, 7
  %v522 = vsub.s32 %v519, %v521
  %v523 = vrot.slane %v509, %v522
  %v524 = vcombine.high %v516, %v516
  %v525 = vcombine.high %v523, %v523
  %v530 = vmul.f32 %v471, %v516
  %v531 = vmul.f32 %v475, %v524
  %v532 = vmul.f32 %v479, %v523
  %v533 = vmul.f32 %v483, %v525
  %v534 = vmul.f32 %v487, %v516
  %v535 = vmul.f32 %v491, %v524
  %v536 = vmul.f32 %v495, %v523
  %v537 = vmul.f32 %v499, %v525
  %v538 = vadd.f32 %v420, %v530
  %v539 = vadd.f32 %v421, %v531
  %v540 = vadd.f32 %v422, %v532
  %v541 = vadd.f32 %v423, %v533
  %v542 = vadd.f32 %v424, %v534
  %v543 = vadd.f32 %v425, %v535
  %v544 = vadd.f32 %v426, %v536
  %v545 = vadd.f32 %v427, %v537
  %v554 = vcombine.low %v538, %v539
  %v555 = vcombine.low %v540, %v541
  %v557 = vunpack.c.l.s4 1983009808
  %v558 = vunpack.c.0.s8 %v557
  %v559 = vlaneseq
  %v560 = vshrl.u32 %v559, 7
  %v561 = vsub.s32 %v558, %v560
  %v562 = vrot.slane %v554, %v561
  %v564 = vunpack.c.l.s4 1983009808
  %v565 = vunpack.c.0.s8 %v564
  %v566 = vlaneseq
  %v567 = vshrl.u32 %v566, 7
  %v568 = vsub.s32 %v565, %v567
  %v569 = vrot.slane %v555, %v568
  %v570 = vcombine.low %v562, %v569
  %v571 = vcombine.low %v542, %v543
  %v572 = vcombine.low %v544, %v545
  %v574 = vunpack.c.l.s4 1983009808
  %v575 = vunpack.c.0.s8 %v574
  %v576 = vlaneseq
  %v577 = vshrl.u32 %v576, 7
  %v578 = vsub.s32 %v575, %v577
  %v579 = vrot.slane %v571, %v578
  %v581 = vunpack.c.l.s4 1983009808
  %v582 = vunpack.c.0.s8 %v581
  %v583 = vlaneseq
  %v584 = vshrl.u32 %v583, 7
  %v585 = vsub.s32 %v582, %v584
  %v586 = vrot.slane %v572, %v585
  %v587 = vcombine.low %v579, %v586
  %v590 = vsub.f32 %v204, %v570
  %v591 = vsub.f32 %v207, %v587
  %v592 = vmul.f32 %v590, %v590
  %v593 = vmul.f32 %v591, %v591
  %v596 = vcombine.high %v592, %v592
  %v598 = vunpack.c.l.s4 1983009808
  %v599 = vunpack.c.0.s8 %v598
  %v600 = vlaneseq
  %v601 = vshrl.u32 %v600, 7
  %v602 = vsub.s32 %v599, %v601
  %v603 = vrot.slane %v592, %v602
  %v605 = vunpack.c.l.s4 1983009808
  %v606 = vunpack.c.0.s8 %v605
  %v607 = vlaneseq
  %v608 = vshrl.u32 %v607, 7
  %v609 = vsub.s32 %v606, %v608
  %v610 = vrot.slane %v596, %v609
  %v611 = vcombine.high %v603, %v603
  %v612 = vcombine.high %v610, %v610
  %v613 = vcombine.high %v593, %v593
  %v615 = vunpack.c.l.s4 1983009808
  %v616 = vunpack.c.0.s8 %v615
  %v617 = vlaneseq
  %v618 = vshrl.u32 %v617, 7
  %v619 = vsub.s32 %v616, %v618
  %v620 = vrot.slane %v593, %v619
  %v622 = vunpack.c.l.s4 1983009808
  %v623 = vunpack.c.0.s8 %v622
  %v624 = vlaneseq
  %v625 = vshrl.u32 %v624, 7
  %v626 = vsub.s32 %v623, %v625
  %v627 = vrot.slane %v613, %v626
  %v628 = vcombine.high %v620, %v620
  %v629 = vcombine.high %v627, %v627
  %v638 = vsel %vm254, %v603, 0.0
  %v639 = vrot.slane %v638, 4
  %v640 = vadd.f32 %v638, %v639
  %v641 = vrot.slane %v640, 2
  %v642 = vadd.f32 %v640, %v641
  %v643 = vrot.slane %v642, 1
  %v644 = vadd.f32 %v642, %v643
  %v645 = vsel %vm254, %v611, 0.0
  %v646 = vrot.slane %v645, 4
  %v647 = vadd.f32 %v645, %v646
  %v648 = vrot.slane %v647, 2
  %v649 = vadd.f32 %v647, %v648
  %v650 = vrot.slane %v649, 1
  %v651 = vadd.f32 %v649, %v650
  %v652 = vsel %vm254, %v610, 0.0
  %v653 = vrot.slane %v652, 4
  %v654 = vadd.f32 %v652, %v653
  %v655 = vrot.slane %v654, 2
  %v656 = vadd.f32 %v654, %v655
  %v657 = vrot.slane %v656, 1
  %v658 = vadd.f32 %v656, %v657
  %v659 = vsel %vm254, %v612, 0.0
  %v660 = vrot.slane %v659, 4
  %v661 = vadd.f32 %v659, %v660
  %v662 = vrot.slane %v661, 2
  %v663 = vadd.f32 %v661, %v662
  %v664 = vrot.slane %v663, 1
  %v665 = vadd.f32 %v663, %v664
  %v666 = vsel %vm254, %v620, 0.0
  %v667 = vrot.slane %v666, 4
  %v668 = vadd.f32 %v666, %v667
  %v669 = vrot.slane %v668, 2
  %v670 = vadd.f32 %v668, %v669
  %v671 = vrot.slane %v670, 1
  %v672 = vadd.f32 %v670, %v671
  %v673 = vsel %vm254, %v628, 0.0
  %v674 = vrot.slane %v673, 4
  %v675 = vadd.f32 %v673, %v674
  %v676 = vrot.slane %v675, 2
  %v677 = vadd.f32 %v675, %v676
  %v678 = vrot.slane %v677, 1
  %v679 = vadd.f32 %v677, %v678
  %v680 = vsel %vm254, %v627, 0.0
  %v681 = vrot.slane %v680, 4
  %v682 = vadd.f32 %v680, %v681
  %v683 = vrot.slane %v682, 2
  %v684 = vadd.f32 %v682, %v683
  %v685 = vrot.slane %v684, 1
  %v686 = vadd.f32 %v684, %v685
  %v687 = vsel %vm254, %v629, 0.0
  %v688 = vrot.slane %v687, 4
  %v689 = vadd.f32 %v687, %v688
  %v690 = vrot.slane %v689, 2
  %v691 = vadd.f32 %v689, %v690
  %v692 = vrot.slane %v691, 1
  %v693 = vadd.f32 %v691, %v692
  %v694 = vmul.f32 %v644, %v315
  %v695 = vmul.f32 %v651, %v315
  %v696 = vmul.f32 %v658, %v315
  %v697 = vmul.f32 %v665, %v315
  %v698 = vmul.f32 %v672, %v315
  %v699 = vmul.f32 %v679, %v315
  %v700 = vmul.f32 %v686, %v315
  %v701 = vmul.f32 %v693, %v315
  %v710 = vrot.slane %v695, 7
  %v711 = vsel %vm333, %v710, %v694
  %v712 = vrot.slane %v696, 6
  %v713 = vsel %vm336, %v712, %v711
  %v714 = vrot.slane %v697, 5
  %v715 = vsel %vm339, %v714, %v713
  %v716 = vrot.slane %v698, 4
  %v717 = vsel %vm342, %v716, %v715
  %v718 = vrot.slane %v699, 3
  %v719 = vsel %vm345, %v718, %v717
  %v720 = vrot.slane %v700, 2
  %v721 = vsel %vm348, %v720, %v719
  %v722 = vrot.slane %v701, 1
  %v723 = vsel %vm351, %v722, %v721
  %725 = vadd.xlane.f32.xlu0 %v723
  %v726 = vpop.xlane.xlu0 %725
  %v727 = vmul.f32 %v726, 0.0078125
  %v728 = vadd.f32 %v727, 1e-05
  %v729 = vrsqrt.pop %v728
  %v731 = vlaneseq
  %v732 = vshrl.u32 %v731, 7
  %v733 = vsub.s32 0, %v732
  %v734 = vrot.slane %v729, %v733
  %v735 = vlaneseq
  %v736 = vshrl.u32 %v735, 7
  %v737 = vsub.s32 1, %v736
  %v738 = vrot.slane %v729, %v737
  %v739 = vlaneseq
  %v740 = vshrl.u32 %v739, 7
  %v741 = vsub.s32 2, %v740
  %v742 = vrot.slane %v729, %v741
  %v743 = vlaneseq
  %v744 = vshrl.u32 %v743, 7
  %v745 = vsub.s32 3, %v744
  %v746 = vrot.slane %v729, %v745
  %v747 = vlaneseq
  %v748 = vshrl.u32 %v747, 7
  %v749 = vsub.s32 4, %v748
  %v750 = vrot.slane %v729, %v749
  %v751 = vlaneseq
  %v752 = vshrl.u32 %v751, 7
  %v753 = vsub.s32 5, %v752
  %v754 = vrot.slane %v729, %v753
  %v755 = vlaneseq
  %v756 = vshrl.u32 %v755, 7
  %v757 = vsub.s32 6, %v756
  %v758 = vrot.slane %v729, %v757
  %v759 = vlaneseq
  %v760 = vshrl.u32 %v759, 7
  %v761 = vsub.s32 7, %v760
  %v762 = vrot.slane %v729, %v761
  %v771 = vmul.f32 %v734, %v406
  %v772 = vmul.f32 %v738, %v414
  %v773 = vmul.f32 %v742, %v413
  %v774 = vmul.f32 %v746, %v415
  %v775 = vmul.f32 %v750, %v406
  %v776 = vmul.f32 %v754, %v414
  %v777 = vmul.f32 %v758, %v413
  %v778 = vmul.f32 %v762, %v415
  %v779 = vmul.f32 %v644, %v432
  %v780 = vmul.f32 %v651, %v432
  %v781 = vmul.f32 %v658, %v432
  %v782 = vmul.f32 %v665, %v432
  %v783 = vmul.f32 %v672, %v432
  %v784 = vmul.f32 %v679, %v432
  %v785 = vmul.f32 %v686, %v432
  %v786 = vmul.f32 %v693, %v432
  %v795 = vrot.slane %v780, 7
  %v796 = vsel %vm333, %v795, %v779
  %v797 = vrot.slane %v781, 6
  %v798 = vsel %vm336, %v797, %v796
  %v799 = vrot.slane %v782, 5
  %v800 = vsel %vm339, %v799, %v798
  %v801 = vrot.slane %v783, 4
  %v802 = vsel %vm342, %v801, %v800
  %v803 = vrot.slane %v784, 3
  %v804 = vsel %vm345, %v803, %v802
  %v805 = vrot.slane %v785, 2
  %v806 = vsel %vm348, %v805, %v804
  %v807 = vrot.slane %v786, 1
  %v808 = vsel %vm351, %v807, %v806
  %810 = vadd.xlane.f32.xlu0 %v808
  %v811 = vpop.xlane.xlu0 %810
  %v812 = vmul.f32 %v811, 0.0078125
  %v813 = vadd.f32 %v812, 1e-05
  %v814 = vrsqrt.pop %v813
  %v816 = vlaneseq
  %v817 = vshrl.u32 %v816, 7
  %v818 = vsub.s32 0, %v817
  %v819 = vrot.slane %v814, %v818
  %v820 = vlaneseq
  %v821 = vshrl.u32 %v820, 7
  %v822 = vsub.s32 1, %v821
  %v823 = vrot.slane %v814, %v822
  %v824 = vlaneseq
  %v825 = vshrl.u32 %v824, 7
  %v826 = vsub.s32 2, %v825
  %v827 = vrot.slane %v814, %v826
  %v828 = vlaneseq
  %v829 = vshrl.u32 %v828, 7
  %v830 = vsub.s32 3, %v829
  %v831 = vrot.slane %v814, %v830
  %v832 = vlaneseq
  %v833 = vshrl.u32 %v832, 7
  %v834 = vsub.s32 4, %v833
  %v835 = vrot.slane %v814, %v834
  %v836 = vlaneseq
  %v837 = vshrl.u32 %v836, 7
  %v838 = vsub.s32 5, %v837
  %v839 = vrot.slane %v814, %v838
  %v840 = vlaneseq
  %v841 = vshrl.u32 %v840, 7
  %v842 = vsub.s32 6, %v841
  %v843 = vrot.slane %v814, %v842
  %v844 = vlaneseq
  %v845 = vshrl.u32 %v844, 7
  %v846 = vsub.s32 7, %v845
  %v847 = vrot.slane %v814, %v846
  %v856 = vmul.f32 %v819, %v516
  %v857 = vmul.f32 %v823, %v524
  %v858 = vmul.f32 %v827, %v523
  %v859 = vmul.f32 %v831, %v525
  %v860 = vmul.f32 %v835, %v516
  %v861 = vmul.f32 %v839, %v524
  %v862 = vmul.f32 %v843, %v523
  %v863 = vmul.f32 %v847, %v525
  %v864 = vadd.f32 %v771, %v856
  %v865 = vadd.f32 %v772, %v857
  %v866 = vadd.f32 %v773, %v858
  %v867 = vadd.f32 %v774, %v859
  %v868 = vadd.f32 %v775, %v860
  %v869 = vadd.f32 %v776, %v861
  %v870 = vadd.f32 %v777, %v862
  %v871 = vadd.f32 %v778, %v863
  %v880 = vcombine.low %v864, %v865
  %v881 = vcombine.low %v866, %v867
  %v883 = vunpack.c.l.s4 1983009808
  %v884 = vunpack.c.0.s8 %v883
  %v885 = vlaneseq
  %v886 = vshrl.u32 %v885, 7
  %v887 = vsub.s32 %v884, %v886
  %v888 = vrot.slane %v880, %v887
  %v890 = vunpack.c.l.s4 1983009808
  %v891 = vunpack.c.0.s8 %v890
  %v892 = vlaneseq
  %v893 = vshrl.u32 %v892, 7
  %v894 = vsub.s32 %v891, %v893
  %v895 = vrot.slane %v881, %v894
  %v896 = vcombine.low %v888, %v895
  %v897 = vcombine.low %v868, %v869
  %v898 = vcombine.low %v870, %v871
  %v900 = vunpack.c.l.s4 1983009808
  %v901 = vunpack.c.0.s8 %v900
  %v902 = vlaneseq
  %v903 = vshrl.u32 %v902, 7
  %v904 = vsub.s32 %v901, %v903
  %v905 = vrot.slane %v897, %v904
  %v907 = vunpack.c.l.s4 1983009808
  %v908 = vunpack.c.0.s8 %v907
  %v909 = vlaneseq
  %v910 = vshrl.u32 %v909, 7
  %v911 = vsub.s32 %v908, %v910
  %v912 = vrot.slane %v898, %v911
  %v913 = vcombine.low %v905, %v912
  %v916 = vmul.f32 %v590, %v896
  %v917 = vmul.f32 %v591, %v913
  %919 = vset.pattern.permute.xlu0 0
  %920 = vperm.xlu0 %919, %v27
  %v921 = vpop.permute.xlu0 %920
  %924 = vset.pattern.permute.xlu0 0
  %925 = vperm.xlu0 %924, %v28
  %v926 = vpop.permute.xlu0 %925
  %v928 = vmul.f32 %v916, %v921
  %v929 = vmul.f32 %v917, %v926
  %930 = vset.pattern.permute.xlu0 1
  %931 = vperm.xlu0 %930, %v27
  %v932 = vpop.permute.xlu0 %931
  %934 = vset.pattern.permute.xlu0 1
  %935 = vperm.xlu0 %934, %v28
  %v936 = vpop.permute.xlu0 %935
  %v938 = vadd.f32 %v928, %v932
  %v939 = vadd.f32 %v929, %v936
  %v940 = vmax.f32 %v938, 0.0
  %v941 = vmax.f32 %v939, 0.0
  %942 = vrot.lane.b32.xlu0 %v940, 21
  %v943 = vpop.permute.xlu0 %942
  %944 = vrot.lane.b32.xlu0 %v941, 21
  %v945 = vpop.permute.xlu0 %944
  %v946 = vld [vmem:[%s5] sm:$0x1]
  %v947 = vlaneseq
  %v948 = vshrl.u32 %v947, 7
  %v949 = vsub.s32 0, %v948
  %v950 = vrot.slane %v946, %v949
  %v951 = vmul.f32 %v943, %v950
  %v952 = vmul.f32 %v945, %v950
  %v953 = vpack.c.bf16 %v952, %v951
  %954 = vrot.lane.b32.xlu0 %v940, 20
  %v955 = vpop.permute.xlu0 %954
  %956 = vrot.lane.b32.xlu0 %v941, 20
  %v957 = vpop.permute.xlu0 %956
  %v958 = vld [vmem:[%s5 + $0x1] sm:$0x1]
  %v959 = vlaneseq
  %v960 = vshrl.u32 %v959, 7
  %v961 = vsub.s32 0, %v960
  %v962 = vrot.slane %v958, %v961
  %v963 = vmul.f32 %v955, %v962
  %v964 = vmul.f32 %v957, %v962
  %v965 = vpack.c.bf16 %v964, %v963
  %966 = vrot.lane.b32.xlu0 %v940, 19
  %v967 = vpop.permute.xlu0 %966
  %968 = vrot.lane.b32.xlu0 %v941, 19
  %v969 = vpop.permute.xlu0 %968
  %v970 = vld [vmem:[%s5 + $0x2] sm:$0x1]
  %v971 = vlaneseq
  %v972 = vshrl.u32 %v971, 7
  %v973 = vsub.s32 0, %v972
  %v974 = vrot.slane %v970, %v973
  %v975 = vmul.f32 %v967, %v974
  %v976 = vmul.f32 %v969, %v974
  %v977 = vpack.c.bf16 %v976, %v975
  %978 = vrot.lane.b32.xlu0 %v940, 17
  %v979 = vpop.permute.xlu0 %978
  %980 = vrot.lane.b32.xlu0 %v941, 17
  %v981 = vpop.permute.xlu0 %980
  %v982 = vld [vmem:[%s5 + $0x3] sm:$0x1]
  %v983 = vlaneseq
  %v984 = vshrl.u32 %v983, 7
  %v985 = vsub.s32 0, %v984
  %v986 = vrot.slane %v982, %v985
  %v987 = vmul.f32 %v979, %v986
  %v988 = vmul.f32 %v981, %v986
  %v989 = vpack.c.bf16 %v988, %v987
  %990 = vrot.lane.b32.xlu0 %v940, 16
  %v991 = vpop.permute.xlu0 %990
  %992 = vrot.lane.b32.xlu0 %v941, 16
  %v993 = vpop.permute.xlu0 %992
  %v994 = vld [vmem:[%s5 + $0x4] sm:$0x1]
  %v995 = vlaneseq
  %v996 = vshrl.u32 %v995, 7
  %v997 = vsub.s32 0, %v996
  %v998 = vrot.slane %v994, %v997
  %v999 = vmul.f32 %v991, %v998
  %v1000 = vmul.f32 %v993, %v998
  %v1001 = vpack.c.bf16 %v1000, %v999
  %1002 = vrot.lane.b32.xlu0 %v940, 15
  %v1003 = vpop.permute.xlu0 %1002
  %1004 = vrot.lane.b32.xlu0 %v941, 15
  %v1005 = vpop.permute.xlu0 %1004
  %v1006 = vld [vmem:[%s5 + $0x5] sm:$0x1]
  %v1007 = vlaneseq
  %v1008 = vshrl.u32 %v1007, 7
  %v1009 = vsub.s32 0, %v1008
  %v1010 = vrot.slane %v1006, %v1009
  %v1011 = vmul.f32 %v1003, %v1010
  %v1012 = vmul.f32 %v1005, %v1010
  %v1013 = vpack.c.bf16 %v1012, %v1011
  %1014 = vrot.lane.b32.xlu0 %v940, 13
  %v1015 = vpop.permute.xlu0 %1014
  %1016 = vrot.lane.b32.xlu0 %v941, 13
  %v1017 = vpop.permute.xlu0 %1016
  %v1018 = vld [vmem:[%s5 + $0x6] sm:$0x1]
  %v1019 = vlaneseq
  %v1020 = vshrl.u32 %v1019, 7
  %v1021 = vsub.s32 0, %v1020
  %v1022 = vrot.slane %v1018, %v1021
  %v1023 = vmul.f32 %v1015, %v1022
  %v1024 = vmul.f32 %v1017, %v1022
  %v1025 = vpack.c.bf16 %v1024, %v1023
  %1026 = vrot.lane.b32.xlu0 %v940, 12
  %v1027 = vpop.permute.xlu0 %1026
  %1028 = vrot.lane.b32.xlu0 %v941, 12
  %v1029 = vpop.permute.xlu0 %1028
  %v1030 = vld [vmem:[%s5 + $0x7] sm:$0x1]
  %v1031 = vlaneseq
  %v1032 = vshrl.u32 %v1031, 7
  %v1033 = vsub.s32 0, %v1032
  %v1034 = vrot.slane %v1030, %v1033
  %v1035 = vmul.f32 %v1027, %v1034
  %v1036 = vmul.f32 %v1029, %v1034
  %v1037 = vpack.c.bf16 %v1036, %v1035
  %v1038 = vld [vmem:[%s2] sm:$0xf]
  %v1039 = vld [vmem:[%s2 + $0x10] sm:$0xf]
  %1040 = vrot.lane.b32.xlu0 %v940, 11
  %v1041 = vpop.permute.xlu0 %1040
  %1042 = vrot.lane.b32.xlu0 %v941, 11
  %v1043 = vpop.permute.xlu0 %1042
  %v1044 = vld [vmem:[%s5 + $0x8] sm:$0x1]
  %v1045 = vlaneseq
  %v1046 = vshrl.u32 %v1045, 7
  %v1047 = vsub.s32 0, %v1046
  %v1048 = vrot.slane %v1044, %v1047
  %v1049 = vmul.f32 %v1041, %v1048
  %v1050 = vmul.f32 %v1043, %v1048
  %v1051 = vpack.c.bf16 %v1050, %v1049
  %1052 = vrot.lane.b32.xlu0 %v940, 5
  %v1053 = vpop.permute.xlu0 %1052
  %1054 = vrot.lane.b32.xlu0 %v941, 5
  %v1055 = vpop.permute.xlu0 %1054
  %v1056 = vld [vmem:[%s5 + $0x9] sm:$0x1]
  %v1057 = vlaneseq
  %v1058 = vshrl.u32 %v1057, 7
  %v1059 = vsub.s32 0, %v1058
  %v1060 = vrot.slane %v1056, %v1059
  %v1061 = vmul.f32 %v1053, %v1060
  %v1062 = vmul.f32 %v1055, %v1060
  %v1063 = vpack.c.bf16 %v1062, %v1061
  %1064 = vrot.lane.b32.xlu0 %v940, 4
  %v1065 = vpop.permute.xlu0 %1064
  %1066 = vrot.lane.b32.xlu0 %v941, 4
  %v1067 = vpop.permute.xlu0 %1066
  %v1068 = vld [vmem:[%s5 + $0xa] sm:$0x1]
  %v1069 = vlaneseq
  %v1070 = vshrl.u32 %v1069, 7
  %v1071 = vsub.s32 0, %v1070
  %v1072 = vrot.slane %v1068, %v1071
  %v1073 = vmul.f32 %v1065, %v1072
  %v1074 = vmul.f32 %v1067, %v1072
  %v1075 = vpack.c.bf16 %v1074, %v1073
  %1076 = vrot.lane.b32.xlu0 %v940, 3
  %v1077 = vpop.permute.xlu0 %1076
  %1078 = vrot.lane.b32.xlu0 %v941, 3
  %v1079 = vpop.permute.xlu0 %1078
  %v1080 = vld [vmem:[%s5 + $0xb] sm:$0x1]
  %v1081 = vlaneseq
  %v1082 = vshrl.u32 %v1081, 7
  %v1083 = vsub.s32 0, %v1082
  %v1084 = vrot.slane %v1080, %v1083
  %v1085 = vmul.f32 %v1077, %v1084
  %v1086 = vmul.f32 %v1079, %v1084
  %v1087 = vpack.c.bf16 %v1086, %v1085
  %1088 = vrot.lane.b32.xlu0 %v940, 1
  %v1089 = vpop.permute.xlu0 %1088
  %1090 = vrot.lane.b32.xlu0 %v941, 1
  %v1091 = vpop.permute.xlu0 %1090
  %v1092 = vld [vmem:[%s5 + $0xc] sm:$0x1]
  %v1093 = vlaneseq
  %v1094 = vshrl.u32 %v1093, 7
  %v1095 = vsub.s32 0, %v1094
  %v1096 = vrot.slane %v1092, %v1095
  %v1097 = vmul.f32 %v1089, %v1096
  %v1098 = vmul.f32 %v1091, %v1096
  %v1099 = vpack.c.bf16 %v1098, %v1097
  %v1100 = vld [vmem:[%s5 + $0xd] sm:$0x1]
  %v1101 = vlaneseq
  %v1102 = vshrl.u32 %v1101, 7
  %v1103 = vsub.s32 0, %v1102
  %v1104 = vrot.slane %v1100, %v1103
  %v1105 = vmul.f32 %v940, %v1104
  %v1106 = vmul.f32 %v941, %v1104
  %v1107 = vpack.c.bf16 %v1106, %v1105
  %1108 = vrot.lane.b32.xlu0 %v940, 127
  %v1109 = vpop.permute.xlu0 %1108
  %1110 = vrot.lane.b32.xlu0 %v941, 127
  %v1111 = vpop.permute.xlu0 %1110
  %v1112 = vld [vmem:[%s5 + $0xe] sm:$0x1]
  %v1113 = vlaneseq
  %v1114 = vshrl.u32 %v1113, 7
  %v1115 = vsub.s32 0, %v1114
  %v1116 = vrot.slane %v1112, %v1115
  %v1117 = vmul.f32 %v1109, %v1116
  %v1118 = vmul.f32 %v1111, %v1116
  %v1119 = vpack.c.bf16 %v1118, %v1117
  %1120 = vrot.lane.b32.xlu0 %v940, 125
  %v1121 = vpop.permute.xlu0 %1120
  %1122 = vrot.lane.b32.xlu0 %v941, 125
  %v1123 = vpop.permute.xlu0 %1122
  %v1124 = vld [vmem:[%s5 + $0xf] sm:$0x1]
  %v1125 = vlaneseq
  %v1126 = vshrl.u32 %v1125, 7
  %v1127 = vsub.s32 0, %v1126
  %v1128 = vrot.slane %v1124, %v1127
  %v1129 = vmul.f32 %v1121, %v1128
  %v1130 = vmul.f32 %v1123, %v1128
  %v1131 = vpack.c.bf16 %v1130, %v1129
  %v1132 = vld [vmem:[%s2 + $0x4] sm:$0xf]
  %v1133 = vld [vmem:[%s2 + $0x14] sm:$0xf]
  %v1136 = vunpack.c.l.b16 %v1132
  %v1137 = vunpack.c.l.b16 %v1133
  %v1138 = vpack.c.b16 %v1137, %v1136
  %1140 = vmatprep.subr.bf16.mxu0 0
  %1141 = vmatpush1.bf16.msra.mxu0 %v1131
  %1142 = vmatprep.subr.bf16.mxu0 0
  %1143 = vmatpush1.bf16.msra.mxu0 %v1119
  %1144 = vmatprep.subr.bf16.mxu0 0
  %1145 = vmatpush1.bf16.msra.mxu0 %v1107
  %1146 = vmatprep.subr.bf16.mxu0 0
  %1147 = vmatpush1.bf16.msra.mxu0 %v1099
  %1148 = vmatprep.subr.bf16.mxu0 0
  %1149 = vmatpush1.bf16.msra.mxu0 %v1087
  %1150 = vmatprep.subr.bf16.mxu0 0
  %1151 = vmatpush1.bf16.msra.mxu0 %v1075
  %1152 = vmatprep.subr.bf16.mxu0 0
  %1153 = vmatpush1.bf16.msra.mxu0 %v1063
  %1154 = vmatprep.subr.bf16.mxu0 0
  %1155 = vmatpush1.bf16.msra.mxu0 %v1051
  %1156 = vmatprep.subr.bf16.mxu0 0
  %1157 = vmatpush2.bf16.msra.mxu0 0
  %1158 = vmatprep.subr.bf16.mxu0 0
  %1159 = vmatpush2.bf16.msra.mxu0 0
  %1160 = vmatprep.subr.bf16.mxu0 0
  %1161 = vmatpush2.bf16.msra.mxu0 0
  %1162 = vmatprep.subr.bf16.mxu0 0
  %1163 = vmatpush2.bf16.msra.mxu0 0
  %1164 = vmatprep.subr.bf16.mxu0 0
  %1165 = vmatpush2.bf16.msra.mxu0 0
  %1166 = vmatprep.subr.bf16.mxu0 0
  %1167 = vmatpush2.bf16.msra.mxu0 0
  %1168 = vmatprep.subr.bf16.mxu0 0
  %1169 = vmatpush2.bf16.msra.mxu0 0
  %1170 = vmatprep.subr.bf16.mxu0 0
  %1171 = vmatpush2.bf16.msra.mxu0 0
  %1172 = vmatprep.mubr.bf16.mxu0 0
  %1173 = vmatmul.mubr.bf16.gmra.mxu0 %v1138
  %v1174 = vpop.f32.mrf.mxu0
  %v1175 = vadd.f32 0.0, %v1174
  %v1176 = vpop.f32.mrf.mxu0
  %v1177 = vpop.f32.mrf.mxu0
  %v1178 = vadd.f32 0.0, %v1177
  %v1179 = vpop.f32.mrf.mxu0
  %1180 = vdwg.mxu0
  %v1183 = vunpack.c.l.b16 %v1038
  %v1184 = vunpack.c.l.b16 %v1039
  %v1185 = vpack.c.b16 %v1184, %v1183
  %1187 = vmatprep.subr.bf16.mxu0 0
  %1188 = vmatpush1.bf16.msra.mxu0 %v1037
  %1189 = vmatprep.subr.bf16.mxu0 0
  %1190 = vmatpush1.bf16.msra.mxu0 %v1025
  %1191 = vmatprep.subr.bf16.mxu0 0
  %1192 = vmatpush1.bf16.msra.mxu0 %v1013
  %1193 = vmatprep.subr.bf16.mxu0 0
  %1194 = vmatpush1.bf16.msra.mxu0 %v1001
  %1195 = vmatprep.subr.bf16.mxu0 0
  %1196 = vmatpush1.bf16.msra.mxu0 %v989
  %1197 = vmatprep.subr.bf16.mxu0 0
  %1198 = vmatpush1.bf16.msra.mxu0 %v977
  %1199 = vmatprep.subr.bf16.mxu0 0
  %1200 = vmatpush1.bf16.msra.mxu0 %v965
  %1201 = vmatprep.subr.bf16.mxu0 0
  %1202 = vmatpush1.bf16.msra.mxu0 %v953
  %1203 = vmatprep.subr.bf16.mxu0 0
  %1204 = vmatpush2.bf16.msra.mxu0 0
  %1205 = vmatprep.subr.bf16.mxu0 0
  %1206 = vmatpush2.bf16.msra.mxu0 0
  %1207 = vmatprep.subr.bf16.mxu0 0
  %1208 = vmatpush2.bf16.msra.mxu0 0
  %1209 = vmatprep.subr.bf16.mxu0 0
  %1210 = vmatpush2.bf16.msra.mxu0 0
  %1211 = vmatprep.subr.bf16.mxu0 0
  %1212 = vmatpush2.bf16.msra.mxu0 0
  %1213 = vmatprep.subr.bf16.mxu0 0
  %1214 = vmatpush2.bf16.msra.mxu0 0
  %1215 = vmatprep.subr.bf16.mxu0 0
  %1216 = vmatpush2.bf16.msra.mxu0 0
  %1217 = vmatprep.subr.bf16.mxu0 0
  %1218 = vmatpush2.bf16.msra.mxu0 0
  %1219 = vmatprep.mubr.bf16.mxu0 0
  %1220 = vmatmul.mubr.bf16.gmra.mxu0 %v1185
  %v1221 = vpop.f32.mrf.mxu0
  %v1222 = vadd.f32 %v1175, %v1221
  %v1223 = vpop.f32.mrf.mxu0
  %v1224 = vpop.f32.mrf.mxu0
  %v1225 = vadd.f32 %v1178, %v1224
  %v1226 = vpop.f32.mrf.mxu0
  %1227 = vdwg.mxu0
  %1228 = vrot.lane.b32.xlu0 %v940, 124
  %v1229 = vpop.permute.xlu0 %1228
  %1230 = vrot.lane.b32.xlu0 %v941, 124
  %v1231 = vpop.permute.xlu0 %1230
  %v1232 = vld [vmem:[%s5 + $0x10] sm:$0x1]
  %v1233 = vlaneseq
  %v1234 = vshrl.u32 %v1233, 7
  %v1235 = vsub.s32 0, %v1234
  %v1236 = vrot.slane %v1232, %v1235
  %v1237 = vmul.f32 %v1229, %v1236
  %v1238 = vmul.f32 %v1231, %v1236
  %v1239 = vpack.c.bf16 %v1238, %v1237
  %1240 = vrot.lane.b32.xlu0 %v940, 123
  %v1241 = vpop.permute.xlu0 %1240
  %1242 = vrot.lane.b32.xlu0 %v941, 123
  %v1243 = vpop.permute.xlu0 %1242
  %v1244 = vld [vmem:[%s5 + $0x11] sm:$0x1]
  %v1245 = vlaneseq
  %v1246 = vshrl.u32 %v1245, 7
  %v1247 = vsub.s32 0, %v1246
  %v1248 = vrot.slane %v1244, %v1247
  %v1249 = vmul.f32 %v1241, %v1248
  %v1250 = vmul.f32 %v1243, %v1248
  %v1251 = vpack.c.bf16 %v1250, %v1249
  %1252 = vrot.lane.b32.xlu0 %v940, 117
  %v1253 = vpop.permute.xlu0 %1252
  %1254 = vrot.lane.b32.xlu0 %v941, 117
  %v1255 = vpop.permute.xlu0 %1254
  %v1256 = vld [vmem:[%s5 + $0x12] sm:$0x1]
  %v1257 = vlaneseq
  %v1258 = vshrl.u32 %v1257, 7
  %v1259 = vsub.s32 0, %v1258
  %v1260 = vrot.slane %v1256, %v1259
  %v1261 = vmul.f32 %v1253, %v1260
  %v1262 = vmul.f32 %v1255, %v1260
  %v1263 = vpack.c.bf16 %v1262, %v1261
  %1264 = vrot.lane.b32.xlu0 %v940, 116
  %v1265 = vpop.permute.xlu0 %1264
  %1266 = vrot.lane.b32.xlu0 %v941, 116
  %v1267 = vpop.permute.xlu0 %1266
  %v1268 = vld [vmem:[%s5 + $0x13] sm:$0x1]
  %v1269 = vlaneseq
  %v1270 = vshrl.u32 %v1269, 7
  %v1271 = vsub.s32 0, %v1270
  %v1272 = vrot.slane %v1268, %v1271
  %v1273 = vmul.f32 %v1265, %v1272
  %v1274 = vmul.f32 %v1267, %v1272
  %v1275 = vpack.c.bf16 %v1274, %v1273
  %1276 = vrot.lane.b32.xlu0 %v940, 115
  %v1277 = vpop.permute.xlu0 %1276
  %1278 = vrot.lane.b32.xlu0 %v941, 115
  %v1279 = vpop.permute.xlu0 %1278
  %v1280 = vld [vmem:[%s5 + $0x14] sm:$0x1]
  %v1281 = vlaneseq
  %v1282 = vshrl.u32 %v1281, 7
  %v1283 = vsub.s32 0, %v1282
  %v1284 = vrot.slane %v1280, %v1283
  %v1285 = vmul.f32 %v1277, %v1284
  %v1286 = vmul.f32 %v1279, %v1284
  %v1287 = vpack.c.bf16 %v1286, %v1285
  %1288 = vrot.lane.b32.xlu0 %v940, 113
  %v1289 = vpop.permute.xlu0 %1288
  %1290 = vrot.lane.b32.xlu0 %v941, 113
  %v1291 = vpop.permute.xlu0 %1290
  %v1292 = vld [vmem:[%s5 + $0x15] sm:$0x1]
  %v1293 = vlaneseq
  %v1294 = vshrl.u32 %v1293, 7
  %v1295 = vsub.s32 0, %v1294
  %v1296 = vrot.slane %v1292, %v1295
  %v1297 = vmul.f32 %v1289, %v1296
  %v1298 = vmul.f32 %v1291, %v1296
  %v1299 = vpack.c.bf16 %v1298, %v1297
  %1300 = vrot.lane.b32.xlu0 %v940, 112
  %v1301 = vpop.permute.xlu0 %1300
  %1302 = vrot.lane.b32.xlu0 %v941, 112
  %v1303 = vpop.permute.xlu0 %1302
  %v1304 = vld [vmem:[%s5 + $0x16] sm:$0x1]
  %v1305 = vlaneseq
  %v1306 = vshrl.u32 %v1305, 7
  %v1307 = vsub.s32 0, %v1306
  %v1308 = vrot.slane %v1304, %v1307
  %v1309 = vmul.f32 %v1301, %v1308
  %v1310 = vmul.f32 %v1303, %v1308
  %v1311 = vpack.c.bf16 %v1310, %v1309
  %1312 = vrot.lane.b32.xlu0 %v940, 111
  %v1313 = vpop.permute.xlu0 %1312
  %1314 = vrot.lane.b32.xlu0 %v941, 111
  %v1315 = vpop.permute.xlu0 %1314
  %v1316 = vld [vmem:[%s5 + $0x17] sm:$0x1]
  %v1317 = vlaneseq
  %v1318 = vshrl.u32 %v1317, 7
  %v1319 = vsub.s32 0, %v1318
  %v1320 = vrot.slane %v1316, %v1319
  %v1321 = vmul.f32 %v1313, %v1320
  %v1322 = vmul.f32 %v1315, %v1320
  %v1323 = vpack.c.bf16 %v1322, %v1321
  %v1324 = vld [vmem:[%s2 + $0x8] sm:$0xf]
  %v1325 = vld [vmem:[%s2 + $0x18] sm:$0xf]
  %v1328 = vunpack.c.l.b16 %v1324
  %v1329 = vunpack.c.l.b16 %v1325
  %v1330 = vpack.c.b16 %v1329, %v1328
  %1332 = vmatprep.subr.bf16.mxu0 0
  %1333 = vmatpush1.bf16.msra.mxu0 %v1323
  %1334 = vmatprep.subr.bf16.mxu0 0
  %1335 = vmatpush1.bf16.msra.mxu0 %v1311
  %1336 = vmatprep.subr.bf16.mxu0 0
  %1337 = vmatpush1.bf16.msra.mxu0 %v1299
  %1338 = vmatprep.subr.bf16.mxu0 0
  %1339 = vmatpush1.bf16.msra.mxu0 %v1287
  %1340 = vmatprep.subr.bf16.mxu0 0
  %1341 = vmatpush1.bf16.msra.mxu0 %v1275
  %1342 = vmatprep.subr.bf16.mxu0 0
  %1343 = vmatpush1.bf16.msra.mxu0 %v1263
  %1344 = vmatprep.subr.bf16.mxu0 0
  %1345 = vmatpush1.bf16.msra.mxu0 %v1251
  %1346 = vmatprep.subr.bf16.mxu0 0
  %1347 = vmatpush1.bf16.msra.mxu0 %v1239
  %1348 = vmatprep.subr.bf16.mxu0 0
  %1349 = vmatpush2.bf16.msra.mxu0 0
  %1350 = vmatprep.subr.bf16.mxu0 0
  %1351 = vmatpush2.bf16.msra.mxu0 0
  %1352 = vmatprep.subr.bf16.mxu0 0
  %1353 = vmatpush2.bf16.msra.mxu0 0
  %1354 = vmatprep.subr.bf16.mxu0 0
  %1355 = vmatpush2.bf16.msra.mxu0 0
  %1356 = vmatprep.subr.bf16.mxu0 0
  %1357 = vmatpush2.bf16.msra.mxu0 0
  %1358 = vmatprep.subr.bf16.mxu0 0
  %1359 = vmatpush2.bf16.msra.mxu0 0
  %1360 = vmatprep.subr.bf16.mxu0 0
  %1361 = vmatpush2.bf16.msra.mxu0 0
  %1362 = vmatprep.subr.bf16.mxu0 0
  %1363 = vmatpush2.bf16.msra.mxu0 0
  %1364 = vmatprep.mubr.bf16.mxu0 0
  %1365 = vmatmul.mubr.bf16.gmra.mxu0 %v1330
  %v1366 = vpop.f32.mrf.mxu0
  %v1367 = vadd.f32 0.0, %v1366
  %v1368 = vpop.f32.mrf.mxu0
  %v1369 = vpop.f32.mrf.mxu0
  %v1370 = vadd.f32 0.0, %v1369
  %v1371 = vpop.f32.mrf.mxu0
  %1372 = vdwg.mxu0
  %v1373 = vadd.f32 %v1222, %v1367
  %v1374 = vadd.f32 %v1225, %v1370
  %1375 = vrot.lane.b32.xlu0 %v940, 109
  %v1376 = vpop.permute.xlu0 %1375
  %1377 = vrot.lane.b32.xlu0 %v941, 109
  %v1378 = vpop.permute.xlu0 %1377
  %v1379 = vld [vmem:[%s5 + $0x18] sm:$0x1]
  %v1380 = vlaneseq
  %v1381 = vshrl.u32 %v1380, 7
  %v1382 = vsub.s32 0, %v1381
  %v1383 = vrot.slane %v1379, %v1382
  %v1384 = vmul.f32 %v1376, %v1383
  %v1385 = vmul.f32 %v1378, %v1383
  %v1386 = vpack.c.bf16 %v1385, %v1384
  %1387 = vrot.lane.b32.xlu0 %v940, 108
  %v1388 = vpop.permute.xlu0 %1387
  %1389 = vrot.lane.b32.xlu0 %v941, 108
  %v1390 = vpop.permute.xlu0 %1389
  %v1391 = vld [vmem:[%s5 + $0x19] sm:$0x1]
  %v1392 = vlaneseq
  %v1393 = vshrl.u32 %v1392, 7
  %v1394 = vsub.s32 0, %v1393
  %v1395 = vrot.slane %v1391, %v1394
  %v1396 = vmul.f32 %v1388, %v1395
  %v1397 = vmul.f32 %v1390, %v1395
  %v1398 = vpack.c.bf16 %v1397, %v1396
  %1399 = vrot.lane.b32.xlu0 %v940, 107
  %v1400 = vpop.permute.xlu0 %1399
  %1401 = vrot.lane.b32.xlu0 %v941, 107
  %v1402 = vpop.permute.xlu0 %1401
  %v1403 = vld [vmem:[%s5 + $0x1a] sm:$0x1]
  %v1404 = vlaneseq
  %v1405 = vshrl.u32 %v1404, 7
  %v1406 = vsub.s32 0, %v1405
  %v1407 = vrot.slane %v1403, %v1406
  %v1408 = vmul.f32 %v1400, %v1407
  %v1409 = vmul.f32 %v1402, %v1407
  %v1410 = vpack.c.bf16 %v1409, %v1408
  %v1411 = vld [vmem:[%s2 + $0xc] sm:$0xf]
  %v1412 = vld [vmem:[%s2 + $0x1c] sm:$0xf]
  %v1415 = vunpack.c.l.b16 %v1411
  %v1416 = vunpack.c.l.b16 %v1412
  %v1417 = vpack.c.b16 %v1416, %v1415
  %vm1418 = vcmask 392192
  %v1420 = vsel %vm1418, %v1417, 0
  %1422 = vmatprep.subr.bf16.mxu0 0
  %1423 = vmatpush1.bf16.msra.mxu0 0
  %1424 = vmatprep.subr.bf16.mxu0 0
  %1425 = vmatpush1.bf16.msra.mxu0 0
  %1426 = vmatprep.subr.bf16.mxu0 0
  %1427 = vmatpush1.bf16.msra.mxu0 0
  %1428 = vmatprep.subr.bf16.mxu0 0
  %1429 = vmatpush1.bf16.msra.mxu0 0
  %1430 = vmatprep.subr.bf16.mxu0 0
  %1431 = vmatpush1.bf16.msra.mxu0 0
  %1432 = vmatprep.subr.bf16.mxu0 0
  %1433 = vmatpush1.bf16.msra.mxu0 %v1410
  %1434 = vmatprep.subr.bf16.mxu0 0
  %1435 = vmatpush1.bf16.msra.mxu0 %v1398
  %1436 = vmatprep.subr.bf16.mxu0 0
  %1437 = vmatpush1.bf16.msra.mxu0 %v1386
  %1438 = vmatprep.subr.bf16.mxu0 0
  %1439 = vmatpush2.bf16.msra.mxu0 0
  %1440 = vmatprep.subr.bf16.mxu0 0
  %1441 = vmatpush2.bf16.msra.mxu0 0
  %1442 = vmatprep.subr.bf16.mxu0 0
  %1443 = vmatpush2.bf16.msra.mxu0 0
  %1444 = vmatprep.subr.bf16.mxu0 0
  %1445 = vmatpush2.bf16.msra.mxu0 0
  %1446 = vmatprep.subr.bf16.mxu0 0
  %1447 = vmatpush2.bf16.msra.mxu0 0
  %1448 = vmatprep.subr.bf16.mxu0 0
  %1449 = vmatpush2.bf16.msra.mxu0 0
  %1450 = vmatprep.subr.bf16.mxu0 0
  %1451 = vmatpush2.bf16.msra.mxu0 0
  %1452 = vmatprep.subr.bf16.mxu0 0
  %1453 = vmatpush2.bf16.msra.mxu0 0
  %1454 = vmatprep.mubr.bf16.mxu0 0
  %1455 = vmatmul.mubr.bf16.gmra.mxu0 %v1420
  %v1456 = vpop.f32.mrf.mxu0
  %v1457 = vadd.f32 0.0, %v1456
  %v1458 = vpop.f32.mrf.mxu0
  %v1459 = vpop.f32.mrf.mxu0
  %v1460 = vadd.f32 0.0, %v1459
  %v1461 = vpop.f32.mrf.mxu0
  %1462 = vdwg.mxu0
  %v1463 = vadd.f32 %v1373, %v1457
  %v1464 = vadd.f32 %v1374, %v1460
  %1465 = vset.pattern.permute.xlu0 2
  %1466 = vperm.xlu0 %1465, %v27
  %v1467 = vpop.permute.xlu0 %1466
  %1469 = vset.pattern.permute.xlu0 2
  %1470 = vperm.xlu0 %1469, %v28
  %v1471 = vpop.permute.xlu0 %1470
  %v1473 = vadd.f32 %v1463, %v1467
  %v1474 = vadd.f32 %v1464, %v1471
  %v1477 = vcombine.high %v1473, %v1473
  %v1479 = vunpack.c.l.s4 1983009808
  %v1480 = vunpack.c.0.s8 %v1479
  %v1481 = vlaneseq
  %v1482 = vshrl.u32 %v1481, 7
  %v1483 = vsub.s32 %v1480, %v1482
  %v1484 = vrot.slane %v1473, %v1483
  %v1486 = vunpack.c.l.s4 1983009808
  %v1487 = vunpack.c.0.s8 %v1486
  %v1488 = vlaneseq
  %v1489 = vshrl.u32 %v1488, 7
  %v1490 = vsub.s32 %v1487, %v1489
  %v1491 = vrot.slane %v1477, %v1490
  %v1492 = vcombine.high %v1484, %v1484
  %v1493 = vcombine.high %v1491, %v1491
  %v1494 = vcombine.high %v1474, %v1474
  %v1496 = vunpack.c.l.s4 1983009808
  %v1497 = vunpack.c.0.s8 %v1496
  %v1498 = vlaneseq
  %v1499 = vshrl.u32 %v1498, 7
  %v1500 = vsub.s32 %v1497, %v1499
  %v1501 = vrot.slane %v1474, %v1500
  %v1503 = vunpack.c.l.s4 1983009808
  %v1504 = vunpack.c.0.s8 %v1503
  %v1505 = vlaneseq
  %v1506 = vshrl.u32 %v1505, 7
  %v1507 = vsub.s32 %v1504, %v1506
  %v1508 = vrot.slane %v1494, %v1507
  %v1509 = vcombine.high %v1501, %v1501
  %v1510 = vcombine.high %v1508, %v1508
  %v1519 = vsel %vm254, %v1484, 0.0
  %v1520 = vrot.slane %v1519, 4
  %v1521 = vadd.f32 %v1519, %v1520
  %v1522 = vrot.slane %v1521, 2
  %v1523 = vadd.f32 %v1521, %v1522
  %v1524 = vrot.slane %v1523, 1
  %v1525 = vadd.f32 %v1523, %v1524
  %v1526 = vsel %vm254, %v1492, 0.0
  %v1527 = vrot.slane %v1526, 4
  %v1528 = vadd.f32 %v1526, %v1527
  %v1529 = vrot.slane %v1528, 2
  %v1530 = vadd.f32 %v1528, %v1529
  %v1531 = vrot.slane %v1530, 1
  %v1532 = vadd.f32 %v1530, %v1531
  %v1533 = vsel %vm254, %v1491, 0.0
  %v1534 = vrot.slane %v1533, 4
  %v1535 = vadd.f32 %v1533, %v1534
  %v1536 = vrot.slane %v1535, 2
  %v1537 = vadd.f32 %v1535, %v1536
  %v1538 = vrot.slane %v1537, 1
  %v1539 = vadd.f32 %v1537, %v1538
  %v1540 = vsel %vm254, %v1493, 0.0
  %v1541 = vrot.slane %v1540, 4
  %v1542 = vadd.f32 %v1540, %v1541
  %v1543 = vrot.slane %v1542, 2
  %v1544 = vadd.f32 %v1542, %v1543
  %v1545 = vrot.slane %v1544, 1
  %v1546 = vadd.f32 %v1544, %v1545
  %v1547 = vsel %vm254, %v1501, 0.0
  %v1548 = vrot.slane %v1547, 4
  %v1549 = vadd.f32 %v1547, %v1548
  %v1550 = vrot.slane %v1549, 2
  %v1551 = vadd.f32 %v1549, %v1550
  %v1552 = vrot.slane %v1551, 1
  %v1553 = vadd.f32 %v1551, %v1552
  %v1554 = vsel %vm254, %v1509, 0.0
  %v1555 = vrot.slane %v1554, 4
  %v1556 = vadd.f32 %v1554, %v1555
  %v1557 = vrot.slane %v1556, 2
  %v1558 = vadd.f32 %v1556, %v1557
  %v1559 = vrot.slane %v1558, 1
  %v1560 = vadd.f32 %v1558, %v1559
  %v1561 = vsel %vm254, %v1508, 0.0
  %v1562 = vrot.slane %v1561, 4
  %v1563 = vadd.f32 %v1561, %v1562
  %v1564 = vrot.slane %v1563, 2
  %v1565 = vadd.f32 %v1563, %v1564
  %v1566 = vrot.slane %v1565, 1
  %v1567 = vadd.f32 %v1565, %v1566
  %v1568 = vsel %vm254, %v1510, 0.0
  %v1569 = vrot.slane %v1568, 4
  %v1570 = vadd.f32 %v1568, %v1569
  %v1571 = vrot.slane %v1570, 2
  %v1572 = vadd.f32 %v1570, %v1571
  %v1573 = vrot.slane %v1572, 1
  %v1574 = vadd.f32 %v1572, %v1573
  %v1575 = vmul.f32 %v1525, %v315
  %v1576 = vmul.f32 %v1532, %v315
  %v1577 = vmul.f32 %v1539, %v315
  %v1578 = vmul.f32 %v1546, %v315
  %v1579 = vmul.f32 %v1553, %v315
  %v1580 = vmul.f32 %v1560, %v315
  %v1581 = vmul.f32 %v1567, %v315
  %v1582 = vmul.f32 %v1574, %v315
  %v1591 = vrot.slane %v1576, 7
  %v1592 = vsel %vm333, %v1591, %v1575
  %v1593 = vrot.slane %v1577, 6
  %v1594 = vsel %vm336, %v1593, %v1592
  %v1595 = vrot.slane %v1578, 5
  %v1596 = vsel %vm339, %v1595, %v1594
  %v1597 = vrot.slane %v1579, 4
  %v1598 = vsel %vm342, %v1597, %v1596
  %v1599 = vrot.slane %v1580, 3
  %v1600 = vsel %vm345, %v1599, %v1598
  %v1601 = vrot.slane %v1581, 2
  %v1602 = vsel %vm348, %v1601, %v1600
  %v1603 = vrot.slane %v1582, 1
  %v1604 = vsel %vm351, %v1603, %v1602
  %1606 = vadd.xlane.f32.xlu0 %v1604
  %v1607 = vpop.xlane.xlu0 %1606
  %v1608 = vmul.f32 %v1607, 0.0078125
  %v1610 = vlaneseq
  %v1611 = vshrl.u32 %v1610, 7
  %v1612 = vsub.s32 0, %v1611
  %v1613 = vrot.slane %v1608, %v1612
  %v1614 = vlaneseq
  %v1615 = vshrl.u32 %v1614, 7
  %v1616 = vsub.s32 1, %v1615
  %v1617 = vrot.slane %v1608, %v1616
  %v1618 = vlaneseq
  %v1619 = vshrl.u32 %v1618, 7
  %v1620 = vsub.s32 2, %v1619
  %v1621 = vrot.slane %v1608, %v1620
  %v1622 = vlaneseq
  %v1623 = vshrl.u32 %v1622, 7
  %v1624 = vsub.s32 3, %v1623
  %v1625 = vrot.slane %v1608, %v1624
  %v1626 = vlaneseq
  %v1627 = vshrl.u32 %v1626, 7
  %v1628 = vsub.s32 4, %v1627
  %v1629 = vrot.slane %v1608, %v1628
  %v1630 = vlaneseq
  %v1631 = vshrl.u32 %v1630, 7
  %v1632 = vsub.s32 5, %v1631
  %v1633 = vrot.slane %v1608, %v1632
  %v1634 = vlaneseq
  %v1635 = vshrl.u32 %v1634, 7
  %v1636 = vsub.s32 6, %v1635
  %v1637 = vrot.slane %v1608, %v1636
  %v1638 = vlaneseq
  %v1639 = vshrl.u32 %v1638, 7
  %v1640 = vsub.s32 7, %v1639
  %v1641 = vrot.slane %v1608, %v1640
  %v1650 = vmul.f32 %v1613, %v406
  %v1651 = vmul.f32 %v1617, %v414
  %v1652 = vmul.f32 %v1621, %v413
  %v1653 = vmul.f32 %v1625, %v415
  %v1654 = vmul.f32 %v1629, %v406
  %v1655 = vmul.f32 %v1633, %v414
  %v1656 = vmul.f32 %v1637, %v413
  %v1657 = vmul.f32 %v1641, %v415
  %v1658 = vmul.f32 %v1525, %v432
  %v1659 = vmul.f32 %v1532, %v432
  %v1660 = vmul.f32 %v1539, %v432
  %v1661 = vmul.f32 %v1546, %v432
  %v1662 = vmul.f32 %v1553, %v432
  %v1663 = vmul.f32 %v1560, %v432
  %v1664 = vmul.f32 %v1567, %v432
  %v1665 = vmul.f32 %v1574, %v432
  %v1674 = vrot.slane %v1659, 7
  %v1675 = vsel %vm333, %v1674, %v1658
  %v1676 = vrot.slane %v1660, 6
  %v1677 = vsel %vm336, %v1676, %v1675
  %v1678 = vrot.slane %v1661, 5
  %v1679 = vsel %vm339, %v1678, %v1677
  %v1680 = vrot.slane %v1662, 4
  %v1681 = vsel %vm342, %v1680, %v1679
  %v1682 = vrot.slane %v1663, 3
  %v1683 = vsel %vm345, %v1682, %v1681
  %v1684 = vrot.slane %v1664, 2
  %v1685 = vsel %vm348, %v1684, %v1683
  %v1686 = vrot.slane %v1665, 1
  %v1687 = vsel %vm351, %v1686, %v1685
  %1689 = vadd.xlane.f32.xlu0 %v1687
  %v1690 = vpop.xlane.xlu0 %1689
  %v1691 = vmul.f32 %v1690, 0.0078125
  %v1693 = vlaneseq
  %v1694 = vshrl.u32 %v1693, 7
  %v1695 = vsub.s32 0, %v1694
  %v1696 = vrot.slane %v1691, %v1695
  %v1697 = vlaneseq
  %v1698 = vshrl.u32 %v1697, 7
  %v1699 = vsub.s32 1, %v1698
  %v1700 = vrot.slane %v1691, %v1699
  %v1701 = vlaneseq
  %v1702 = vshrl.u32 %v1701, 7
  %v1703 = vsub.s32 2, %v1702
  %v1704 = vrot.slane %v1691, %v1703
  %v1705 = vlaneseq
  %v1706 = vshrl.u32 %v1705, 7
  %v1707 = vsub.s32 3, %v1706
  %v1708 = vrot.slane %v1691, %v1707
  %v1709 = vlaneseq
  %v1710 = vshrl.u32 %v1709, 7
  %v1711 = vsub.s32 4, %v1710
  %v1712 = vrot.slane %v1691, %v1711
  %v1713 = vlaneseq
  %v1714 = vshrl.u32 %v1713, 7
  %v1715 = vsub.s32 5, %v1714
  %v1716 = vrot.slane %v1691, %v1715
  %v1717 = vlaneseq
  %v1718 = vshrl.u32 %v1717, 7
  %v1719 = vsub.s32 6, %v1718
  %v1720 = vrot.slane %v1691, %v1719
  %v1721 = vlaneseq
  %v1722 = vshrl.u32 %v1721, 7
  %v1723 = vsub.s32 7, %v1722
  %v1724 = vrot.slane %v1691, %v1723
  %v1733 = vmul.f32 %v1696, %v516
  %v1734 = vmul.f32 %v1700, %v524
  %v1735 = vmul.f32 %v1704, %v523
  %v1736 = vmul.f32 %v1708, %v525
  %v1737 = vmul.f32 %v1712, %v516
  %v1738 = vmul.f32 %v1716, %v524
  %v1739 = vmul.f32 %v1720, %v523
  %v1740 = vmul.f32 %v1724, %v525
  %v1741 = vadd.f32 %v1650, %v1733
  %v1742 = vadd.f32 %v1651, %v1734
  %v1743 = vadd.f32 %v1652, %v1735
  %v1744 = vadd.f32 %v1653, %v1736
  %v1745 = vadd.f32 %v1654, %v1737
  %v1746 = vadd.f32 %v1655, %v1738
  %v1747 = vadd.f32 %v1656, %v1739
  %v1748 = vadd.f32 %v1657, %v1740
  %v1757 = vcombine.low %v1741, %v1742
  %v1758 = vcombine.low %v1743, %v1744
  %v1760 = vunpack.c.l.s4 1983009808
  %v1761 = vunpack.c.0.s8 %v1760
  %v1762 = vlaneseq
  %v1763 = vshrl.u32 %v1762, 7
  %v1764 = vsub.s32 %v1761, %v1763
  %v1765 = vrot.slane %v1757, %v1764
  %v1767 = vunpack.c.l.s4 1983009808
  %v1768 = vunpack.c.0.s8 %v1767
  %v1769 = vlaneseq
  %v1770 = vshrl.u32 %v1769, 7
  %v1771 = vsub.s32 %v1768, %v1770
  %v1772 = vrot.slane %v1758, %v1771
  %v1773 = vcombine.low %v1765, %v1772
  %v1774 = vcombine.low %v1745, %v1746
  %v1775 = vcombine.low %v1747, %v1748
  %v1777 = vunpack.c.l.s4 1983009808
  %v1778 = vunpack.c.0.s8 %v1777
  %v1779 = vlaneseq
  %v1780 = vshrl.u32 %v1779, 7
  %v1781 = vsub.s32 %v1778, %v1780
  %v1782 = vrot.slane %v1774, %v1781
  %v1784 = vunpack.c.l.s4 1983009808
  %v1785 = vunpack.c.0.s8 %v1784
  %v1786 = vlaneseq
  %v1787 = vshrl.u32 %v1786, 7
  %v1788 = vsub.s32 %v1785, %v1787
  %v1789 = vrot.slane %v1775, %v1788
  %v1790 = vcombine.low %v1782, %v1789
  %v1793 = vsub.f32 %v1473, %v1773
  %v1794 = vsub.f32 %v1474, %v1790
  %v1795 = vmul.f32 %v1793, %v1793
  %v1796 = vmul.f32 %v1794, %v1794
  %v1799 = vcombine.high %v1795, %v1795
  %v1801 = vunpack.c.l.s4 1983009808
  %v1802 = vunpack.c.0.s8 %v1801
  %v1803 = vlaneseq
  %v1804 = vshrl.u32 %v1803, 7
  %v1805 = vsub.s32 %v1802, %v1804
  %v1806 = vrot.slane %v1795, %v1805
  %v1808 = vunpack.c.l.s4 1983009808
  %v1809 = vunpack.c.0.s8 %v1808
  %v1810 = vlaneseq
  %v1811 = vshrl.u32 %v1810, 7
  %v1812 = vsub.s32 %v1809, %v1811
  %v1813 = vrot.slane %v1799, %v1812
  %v1814 = vcombine.high %v1806, %v1806
  %v1815 = vcombine.high %v1813, %v1813
  %v1816 = vcombine.high %v1796, %v1796
  %v1818 = vunpack.c.l.s4 1983009808
  %v1819 = vunpack.c.0.s8 %v1818
  %v1820 = vlaneseq
  %v1821 = vshrl.u32 %v1820, 7
  %v1822 = vsub.s32 %v1819, %v1821
  %v1823 = vrot.slane %v1796, %v1822
  %v1825 = vunpack.c.l.s4 1983009808
  %v1826 = vunpack.c.0.s8 %v1825
  %v1827 = vlaneseq
  %v1828 = vshrl.u32 %v1827, 7
  %v1829 = vsub.s32 %v1826, %v1828
  %v1830 = vrot.slane %v1816, %v1829
  %v1831 = vcombine.high %v1823, %v1823
  %v1832 = vcombine.high %v1830, %v1830
  %v1841 = vsel %vm254, %v1806, 0.0
  %v1842 = vrot.slane %v1841, 4
  %v1843 = vadd.f32 %v1841, %v1842
  %v1844 = vrot.slane %v1843, 2
  %v1845 = vadd.f32 %v1843, %v1844
  %v1846 = vrot.slane %v1845, 1
  %v1847 = vadd.f32 %v1845, %v1846
  %v1848 = vsel %vm254, %v1814, 0.0
  %v1849 = vrot.slane %v1848, 4
  %v1850 = vadd.f32 %v1848, %v1849
  %v1851 = vrot.slane %v1850, 2
  %v1852 = vadd.f32 %v1850, %v1851
  %v1853 = vrot.slane %v1852, 1
  %v1854 = vadd.f32 %v1852, %v1853
  %v1855 = vsel %vm254, %v1813, 0.0
  %v1856 = vrot.slane %v1855, 4
  %v1857 = vadd.f32 %v1855, %v1856
  %v1858 = vrot.slane %v1857, 2
  %v1859 = vadd.f32 %v1857, %v1858
  %v1860 = vrot.slane %v1859, 1
  %v1861 = vadd.f32 %v1859, %v1860
  %v1862 = vsel %vm254, %v1815, 0.0
  %v1863 = vrot.slane %v1862, 4
  %v1864 = vadd.f32 %v1862, %v1863
  %v1865 = vrot.slane %v1864, 2
  %v1866 = vadd.f32 %v1864, %v1865
  %v1867 = vrot.slane %v1866, 1
  %v1868 = vadd.f32 %v1866, %v1867
  %v1869 = vsel %vm254, %v1823, 0.0
  %v1870 = vrot.slane %v1869, 4
  %v1871 = vadd.f32 %v1869, %v1870
  %v1872 = vrot.slane %v1871, 2
  %v1873 = vadd.f32 %v1871, %v1872
  %v1874 = vrot.slane %v1873, 1
  %v1875 = vadd.f32 %v1873, %v1874
  %v1876 = vsel %vm254, %v1831, 0.0
  %v1877 = vrot.slane %v1876, 4
  %v1878 = vadd.f32 %v1876, %v1877
  %v1879 = vrot.slane %v1878, 2
  %v1880 = vadd.f32 %v1878, %v1879
  %v1881 = vrot.slane %v1880, 1
  %v1882 = vadd.f32 %v1880, %v1881
  %v1883 = vsel %vm254, %v1830, 0.0
  %v1884 = vrot.slane %v1883, 4
  %v1885 = vadd.f32 %v1883, %v1884
  %v1886 = vrot.slane %v1885, 2
  %v1887 = vadd.f32 %v1885, %v1886
  %v1888 = vrot.slane %v1887, 1
  %v1889 = vadd.f32 %v1887, %v1888
  %v1890 = vsel %vm254, %v1832, 0.0
  %v1891 = vrot.slane %v1890, 4
  %v1892 = vadd.f32 %v1890, %v1891
  %v1893 = vrot.slane %v1892, 2
  %v1894 = vadd.f32 %v1892, %v1893
  %v1895 = vrot.slane %v1894, 1
  %v1896 = vadd.f32 %v1894, %v1895
  %v1897 = vmul.f32 %v1847, %v315
  %v1898 = vmul.f32 %v1854, %v315
  %v1899 = vmul.f32 %v1861, %v315
  %v1900 = vmul.f32 %v1868, %v315
  %v1901 = vmul.f32 %v1875, %v315
  %v1902 = vmul.f32 %v1882, %v315
  %v1903 = vmul.f32 %v1889, %v315
  %v1904 = vmul.f32 %v1896, %v315
  %v1913 = vrot.slane %v1898, 7
  %v1914 = vsel %vm333, %v1913, %v1897
  %v1915 = vrot.slane %v1899, 6
  %v1916 = vsel %vm336, %v1915, %v1914
  %v1917 = vrot.slane %v1900, 5
  %v1918 = vsel %vm339, %v1917, %v1916
  %v1919 = vrot.slane %v1901, 4
  %v1920 = vsel %vm342, %v1919, %v1918
  %v1921 = vrot.slane %v1902, 3
  %v1922 = vsel %vm345, %v1921, %v1920
  %v1923 = vrot.slane %v1903, 2
  %v1924 = vsel %vm348, %v1923, %v1922
  %v1925 = vrot.slane %v1904, 1
  %v1926 = vsel %vm351, %v1925, %v1924
  %1928 = vadd.xlane.f32.xlu0 %v1926
  %v1929 = vpop.xlane.xlu0 %1928
  %v1930 = vmul.f32 %v1929, 0.0078125
  %v1931 = vadd.f32 %v1930, 1e-05
  %v1932 = vrsqrt.pop %v1931
  %v1934 = vlaneseq
  %v1935 = vshrl.u32 %v1934, 7
  %v1936 = vsub.s32 0, %v1935
  %v1937 = vrot.slane %v1932, %v1936
  %v1938 = vlaneseq
  %v1939 = vshrl.u32 %v1938, 7
  %v1940 = vsub.s32 1, %v1939
  %v1941 = vrot.slane %v1932, %v1940
  %v1942 = vlaneseq
  %v1943 = vshrl.u32 %v1942, 7
  %v1944 = vsub.s32 2, %v1943
  %v1945 = vrot.slane %v1932, %v1944
  %v1946 = vlaneseq
  %v1947 = vshrl.u32 %v1946, 7
  %v1948 = vsub.s32 3, %v1947
  %v1949 = vrot.slane %v1932, %v1948
  %v1950 = vlaneseq
  %v1951 = vshrl.u32 %v1950, 7
  %v1952 = vsub.s32 4, %v1951
  %v1953 = vrot.slane %v1932, %v1952
  %v1954 = vlaneseq
  %v1955 = vshrl.u32 %v1954, 7
  %v1956 = vsub.s32 5, %v1955
  %v1957 = vrot.slane %v1932, %v1956
  %v1958 = vlaneseq
  %v1959 = vshrl.u32 %v1958, 7
  %v1960 = vsub.s32 6, %v1959
  %v1961 = vrot.slane %v1932, %v1960
  %v1962 = vlaneseq
  %v1963 = vshrl.u32 %v1962, 7
  %v1964 = vsub.s32 7, %v1963
  %v1965 = vrot.slane %v1932, %v1964
  %v1974 = vmul.f32 %v1937, %v406
  %v1975 = vmul.f32 %v1941, %v414
  %v1976 = vmul.f32 %v1945, %v413
  %v1977 = vmul.f32 %v1949, %v415
  %v1978 = vmul.f32 %v1953, %v406
  %v1979 = vmul.f32 %v1957, %v414
  %v1980 = vmul.f32 %v1961, %v413
  %v1981 = vmul.f32 %v1965, %v415
  %v1982 = vmul.f32 %v1847, %v432
  %v1983 = vmul.f32 %v1854, %v432
  %v1984 = vmul.f32 %v1861, %v432
  %v1985 = vmul.f32 %v1868, %v432
  %v1986 = vmul.f32 %v1875, %v432
  %v1987 = vmul.f32 %v1882, %v432
  %v1988 = vmul.f32 %v1889, %v432
  %v1989 = vmul.f32 %v1896, %v432
  %v1998 = vrot.slane %v1983, 7
  %v1999 = vsel %vm333, %v1998, %v1982
  %v2000 = vrot.slane %v1984, 6
  %v2001 = vsel %vm336, %v2000, %v1999
  %v2002 = vrot.slane %v1985, 5
  %v2003 = vsel %vm339, %v2002, %v2001
  %v2004 = vrot.slane %v1986, 4
  %v2005 = vsel %vm342, %v2004, %v2003
  %v2006 = vrot.slane %v1987, 3
  %v2007 = vsel %vm345, %v2006, %v2005
  %v2008 = vrot.slane %v1988, 2
  %v2009 = vsel %vm348, %v2008, %v2007
  %v2010 = vrot.slane %v1989, 1
  %v2011 = vsel %vm351, %v2010, %v2009
  %2013 = vadd.xlane.f32.xlu0 %v2011
  %v2014 = vpop.xlane.xlu0 %2013
  %v2015 = vmul.f32 %v2014, 0.0078125
  %v2016 = vadd.f32 %v2015, 1e-05
  %v2017 = vrsqrt.pop %v2016
  %v2019 = vlaneseq
  %v2020 = vshrl.u32 %v2019, 7
  %v2021 = vsub.s32 0, %v2020
  %v2022 = vrot.slane %v2017, %v2021
  %v2023 = vlaneseq
  %v2024 = vshrl.u32 %v2023, 7
  %v2025 = vsub.s32 1, %v2024
  %v2026 = vrot.slane %v2017, %v2025
  %v2027 = vlaneseq
  %v2028 = vshrl.u32 %v2027, 7
  %v2029 = vsub.s32 2, %v2028
  %v2030 = vrot.slane %v2017, %v2029
  %v2031 = vlaneseq
  %v2032 = vshrl.u32 %v2031, 7
  %v2033 = vsub.s32 3, %v2032
  %v2034 = vrot.slane %v2017, %v2033
  %v2035 = vlaneseq
  %v2036 = vshrl.u32 %v2035, 7
  %v2037 = vsub.s32 4, %v2036
  %v2038 = vrot.slane %v2017, %v2037
  %v2039 = vlaneseq
  %v2040 = vshrl.u32 %v2039, 7
  %v2041 = vsub.s32 5, %v2040
  %v2042 = vrot.slane %v2017, %v2041
  %v2043 = vlaneseq
  %v2044 = vshrl.u32 %v2043, 7
  %v2045 = vsub.s32 6, %v2044
  %v2046 = vrot.slane %v2017, %v2045
  %v2047 = vlaneseq
  %v2048 = vshrl.u32 %v2047, 7
  %v2049 = vsub.s32 7, %v2048
  %v2050 = vrot.slane %v2017, %v2049
  %v2059 = vmul.f32 %v2022, %v516
  %v2060 = vmul.f32 %v2026, %v524
  %v2061 = vmul.f32 %v2030, %v523
  %v2062 = vmul.f32 %v2034, %v525
  %v2063 = vmul.f32 %v2038, %v516
  %v2064 = vmul.f32 %v2042, %v524
  %v2065 = vmul.f32 %v2046, %v523
  %v2066 = vmul.f32 %v2050, %v525
  %v2067 = vadd.f32 %v1974, %v2059
  %v2068 = vadd.f32 %v1975, %v2060
  %v2069 = vadd.f32 %v1976, %v2061
  %v2070 = vadd.f32 %v1977, %v2062
  %v2071 = vadd.f32 %v1978, %v2063
  %v2072 = vadd.f32 %v1979, %v2064
  %v2073 = vadd.f32 %v1980, %v2065
  %v2074 = vadd.f32 %v1981, %v2066
  %v2083 = vcombine.low %v2067, %v2068
  %v2084 = vcombine.low %v2069, %v2070
  %v2086 = vunpack.c.l.s4 1983009808
  %v2087 = vunpack.c.0.s8 %v2086
  %v2088 = vlaneseq
  %v2089 = vshrl.u32 %v2088, 7
  %v2090 = vsub.s32 %v2087, %v2089
  %v2091 = vrot.slane %v2083, %v2090
  %v2093 = vunpack.c.l.s4 1983009808
  %v2094 = vunpack.c.0.s8 %v2093
  %v2095 = vlaneseq
  %v2096 = vshrl.u32 %v2095, 7
  %v2097 = vsub.s32 %v2094, %v2096
  %v2098 = vrot.slane %v2084, %v2097
  %v2099 = vcombine.low %v2091, %v2098
  %v2100 = vcombine.low %v2071, %v2072
  %v2101 = vcombine.low %v2073, %v2074
  %v2103 = vunpack.c.l.s4 1983009808
  %v2104 = vunpack.c.0.s8 %v2103
  %v2105 = vlaneseq
  %v2106 = vshrl.u32 %v2105, 7
  %v2107 = vsub.s32 %v2104, %v2106
  %v2108 = vrot.slane %v2100, %v2107
  %v2110 = vunpack.c.l.s4 1983009808
  %v2111 = vunpack.c.0.s8 %v2110
  %v2112 = vlaneseq
  %v2113 = vshrl.u32 %v2112, 7
  %v2114 = vsub.s32 %v2111, %v2113
  %v2115 = vrot.slane %v2101, %v2114
  %v2116 = vcombine.low %v2108, %v2115
  %v2119 = vmul.f32 %v1793, %v2099
  %v2120 = vmul.f32 %v1794, %v2116
  %2121 = vset.pattern.permute.xlu0 3
  %2122 = vperm.xlu0 %2121, %v27
  %v2123 = vpop.permute.xlu0 %2122
  %2125 = vset.pattern.permute.xlu0 3
  %2126 = vperm.xlu0 %2125, %v28
  %v2127 = vpop.permute.xlu0 %2126
  %v2129 = vmul.f32 %v2119, %v2123
  %v2130 = vmul.f32 %v2120, %v2127
  %2131 = vset.pattern.permute.xlu0 4
  %2132 = vperm.xlu0 %2131, %v27
  %v2133 = vpop.permute.xlu0 %2132
  %2135 = vset.pattern.permute.xlu0 4
  %2136 = vperm.xlu0 %2135, %v28
  %v2137 = vpop.permute.xlu0 %2136
  %v2139 = vadd.f32 %v2129, %v2133
  %v2140 = vadd.f32 %v2130, %v2137
  %v2141 = vmax.f32 %v2139, 0.0
  %v2142 = vmax.f32 %v2140, 0.0
  %2143 = vrot.lane.b32.xlu0 %v2141, 21
  %v2144 = vpop.permute.xlu0 %2143
  %2145 = vrot.lane.b32.xlu0 %v2142, 21
  %v2146 = vpop.permute.xlu0 %2145
  %v2147 = vmul.f32 %v2144, %v950
  %v2148 = vmul.f32 %v2146, %v950
  %v2149 = vpack.c.bf16 %v2148, %v2147
  %2150 = vrot.lane.b32.xlu0 %v2141, 20
  %v2151 = vpop.permute.xlu0 %2150
  %2152 = vrot.lane.b32.xlu0 %v2142, 20
  %v2153 = vpop.permute.xlu0 %2152
  %v2154 = vmul.f32 %v2151, %v962
  %v2155 = vmul.f32 %v2153, %v962
  %v2156 = vpack.c.bf16 %v2155, %v2154
  %2157 = vrot.lane.b32.xlu0 %v2141, 19
  %v2158 = vpop.permute.xlu0 %2157
  %2159 = vrot.lane.b32.xlu0 %v2142, 19
  %v2160 = vpop.permute.xlu0 %2159
  %v2161 = vmul.f32 %v2158, %v974
  %v2162 = vmul.f32 %v2160, %v974
  %v2163 = vpack.c.bf16 %v2162, %v2161
  %2164 = vrot.lane.b32.xlu0 %v2141, 17
  %v2165 = vpop.permute.xlu0 %2164
  %2166 = vrot.lane.b32.xlu0 %v2142, 17
  %v2167 = vpop.permute.xlu0 %2166
  %v2168 = vmul.f32 %v2165, %v986
  %v2169 = vmul.f32 %v2167, %v986
  %v2170 = vpack.c.bf16 %v2169, %v2168
  %2171 = vrot.lane.b32.xlu0 %v2141, 16
  %v2172 = vpop.permute.xlu0 %2171
  %2173 = vrot.lane.b32.xlu0 %v2142, 16
  %v2174 = vpop.permute.xlu0 %2173
  %v2175 = vmul.f32 %v2172, %v998
  %v2176 = vmul.f32 %v2174, %v998
  %v2177 = vpack.c.bf16 %v2176, %v2175
  %2178 = vrot.lane.b32.xlu0 %v2141, 15
  %v2179 = vpop.permute.xlu0 %2178
  %2180 = vrot.lane.b32.xlu0 %v2142, 15
  %v2181 = vpop.permute.xlu0 %2180
  %v2182 = vmul.f32 %v2179, %v1010
  %v2183 = vmul.f32 %v2181, %v1010
  %v2184 = vpack.c.bf16 %v2183, %v2182
  %2185 = vrot.lane.b32.xlu0 %v2141, 13
  %v2186 = vpop.permute.xlu0 %2185
  %2187 = vrot.lane.b32.xlu0 %v2142, 13
  %v2188 = vpop.permute.xlu0 %2187
  %v2189 = vmul.f32 %v2186, %v1022
  %v2190 = vmul.f32 %v2188, %v1022
  %v2191 = vpack.c.bf16 %v2190, %v2189
  %2192 = vrot.lane.b32.xlu0 %v2141, 12
  %v2193 = vpop.permute.xlu0 %2192
  %2194 = vrot.lane.b32.xlu0 %v2142, 12
  %v2195 = vpop.permute.xlu0 %2194
  %v2196 = vmul.f32 %v2193, %v1034
  %v2197 = vmul.f32 %v2195, %v1034
  %v2198 = vpack.c.bf16 %v2197, %v2196
  %v2199 = vld [vmem:[%s3] sm:$0xf]
  %v2200 = vld [vmem:[%s3 + $0x10] sm:$0xf]
  %2201 = vrot.lane.b32.xlu0 %v2141, 11
  %v2202 = vpop.permute.xlu0 %2201
  %2203 = vrot.lane.b32.xlu0 %v2142, 11
  %v2204 = vpop.permute.xlu0 %2203
  %v2205 = vmul.f32 %v2202, %v1048
  %v2206 = vmul.f32 %v2204, %v1048
  %v2207 = vpack.c.bf16 %v2206, %v2205
  %2208 = vrot.lane.b32.xlu0 %v2141, 5
  %v2209 = vpop.permute.xlu0 %2208
  %2210 = vrot.lane.b32.xlu0 %v2142, 5
  %v2211 = vpop.permute.xlu0 %2210
  %v2212 = vmul.f32 %v2209, %v1060
  %v2213 = vmul.f32 %v2211, %v1060
  %v2214 = vpack.c.bf16 %v2213, %v2212
  %2215 = vrot.lane.b32.xlu0 %v2141, 4
  %v2216 = vpop.permute.xlu0 %2215
  %2217 = vrot.lane.b32.xlu0 %v2142, 4
  %v2218 = vpop.permute.xlu0 %2217
  %v2219 = vmul.f32 %v2216, %v1072
  %v2220 = vmul.f32 %v2218, %v1072
  %v2221 = vpack.c.bf16 %v2220, %v2219
  %2222 = vrot.lane.b32.xlu0 %v2141, 3
  %v2223 = vpop.permute.xlu0 %2222
  %2224 = vrot.lane.b32.xlu0 %v2142, 3
  %v2225 = vpop.permute.xlu0 %2224
  %v2226 = vmul.f32 %v2223, %v1084
  %v2227 = vmul.f32 %v2225, %v1084
  %v2228 = vpack.c.bf16 %v2227, %v2226
  %2229 = vrot.lane.b32.xlu0 %v2141, 1
  %v2230 = vpop.permute.xlu0 %2229
  %2231 = vrot.lane.b32.xlu0 %v2142, 1
  %v2232 = vpop.permute.xlu0 %2231
  %v2233 = vmul.f32 %v2230, %v1096
  %v2234 = vmul.f32 %v2232, %v1096
  %v2235 = vpack.c.bf16 %v2234, %v2233
  %v2236 = vmul.f32 %v2141, %v1104
  %v2237 = vmul.f32 %v2142, %v1104
  %v2238 = vpack.c.bf16 %v2237, %v2236
  %2239 = vrot.lane.b32.xlu0 %v2141, 127
  %v2240 = vpop.permute.xlu0 %2239
  %2241 = vrot.lane.b32.xlu0 %v2142, 127
  %v2242 = vpop.permute.xlu0 %2241
  %v2243 = vmul.f32 %v2240, %v1116
  %v2244 = vmul.f32 %v2242, %v1116
  %v2245 = vpack.c.bf16 %v2244, %v2243
  %2246 = vrot.lane.b32.xlu0 %v2141, 125
  %v2247 = vpop.permute.xlu0 %2246
  %2248 = vrot.lane.b32.xlu0 %v2142, 125
  %v2249 = vpop.permute.xlu0 %2248
  %v2250 = vmul.f32 %v2247, %v1128
  %v2251 = vmul.f32 %v2249, %v1128
  %v2252 = vpack.c.bf16 %v2251, %v2250
  %v2253 = vld [vmem:[%s3 + $0x4] sm:$0xf]
  %v2254 = vld [vmem:[%s3 + $0x14] sm:$0xf]
  %v2257 = vunpack.c.l.b16 %v2253
  %v2258 = vunpack.c.l.b16 %v2254
  %v2259 = vpack.c.b16 %v2258, %v2257
  %2261 = vmatprep.subr.bf16.mxu0 0
  %2262 = vmatpush1.bf16.msra.mxu0 %v2252
  %2263 = vmatprep.subr.bf16.mxu0 0
  %2264 = vmatpush1.bf16.msra.mxu0 %v2245
  %2265 = vmatprep.subr.bf16.mxu0 0
  %2266 = vmatpush1.bf16.msra.mxu0 %v2238
  %2267 = vmatprep.subr.bf16.mxu0 0
  %2268 = vmatpush1.bf16.msra.mxu0 %v2235
  %2269 = vmatprep.subr.bf16.mxu0 0
  %2270 = vmatpush1.bf16.msra.mxu0 %v2228
  %2271 = vmatprep.subr.bf16.mxu0 0
  %2272 = vmatpush1.bf16.msra.mxu0 %v2221
  %2273 = vmatprep.subr.bf16.mxu0 0
  %2274 = vmatpush1.bf16.msra.mxu0 %v2214
  %2275 = vmatprep.subr.bf16.mxu0 0
  %2276 = vmatpush1.bf16.msra.mxu0 %v2207
  %2277 = vmatprep.subr.bf16.mxu0 0
  %2278 = vmatpush2.bf16.msra.mxu0 0
  %2279 = vmatprep.subr.bf16.mxu0 0
  %2280 = vmatpush2.bf16.msra.mxu0 0
  %2281 = vmatprep.subr.bf16.mxu0 0
  %2282 = vmatpush2.bf16.msra.mxu0 0
  %2283 = vmatprep.subr.bf16.mxu0 0
  %2284 = vmatpush2.bf16.msra.mxu0 0
  %2285 = vmatprep.subr.bf16.mxu0 0
  %2286 = vmatpush2.bf16.msra.mxu0 0
  %2287 = vmatprep.subr.bf16.mxu0 0
  %2288 = vmatpush2.bf16.msra.mxu0 0
  %2289 = vmatprep.subr.bf16.mxu0 0
  %2290 = vmatpush2.bf16.msra.mxu0 0
  %2291 = vmatprep.subr.bf16.mxu0 0
  %2292 = vmatpush2.bf16.msra.mxu0 0
  %2293 = vmatprep.mubr.bf16.mxu0 0
  %2294 = vmatmul.mubr.bf16.gmra.mxu0 %v2259
  %v2295 = vpop.f32.mrf.mxu0
  %v2296 = vadd.f32 0.0, %v2295
  %v2297 = vpop.f32.mrf.mxu0
  %v2298 = vpop.f32.mrf.mxu0
  %v2299 = vadd.f32 0.0, %v2298
  %v2300 = vpop.f32.mrf.mxu0
  %2301 = vdwg.mxu0
  %v2304 = vunpack.c.l.b16 %v2199
  %v2305 = vunpack.c.l.b16 %v2200
  %v2306 = vpack.c.b16 %v2305, %v2304
  %2308 = vmatprep.subr.bf16.mxu0 0
  %2309 = vmatpush1.bf16.msra.mxu0 %v2198
  %2310 = vmatprep.subr.bf16.mxu0 0
  %2311 = vmatpush1.bf16.msra.mxu0 %v2191
  %2312 = vmatprep.subr.bf16.mxu0 0
  %2313 = vmatpush1.bf16.msra.mxu0 %v2184
  %2314 = vmatprep.subr.bf16.mxu0 0
  %2315 = vmatpush1.bf16.msra.mxu0 %v2177
  %2316 = vmatprep.subr.bf16.mxu0 0
  %2317 = vmatpush1.bf16.msra.mxu0 %v2170
  %2318 = vmatprep.subr.bf16.mxu0 0
  %2319 = vmatpush1.bf16.msra.mxu0 %v2163
  %2320 = vmatprep.subr.bf16.mxu0 0
  %2321 = vmatpush1.bf16.msra.mxu0 %v2156
  %2322 = vmatprep.subr.bf16.mxu0 0
  %2323 = vmatpush1.bf16.msra.mxu0 %v2149
  %2324 = vmatprep.subr.bf16.mxu0 0
  %2325 = vmatpush2.bf16.msra.mxu0 0
  %2326 = vmatprep.subr.bf16.mxu0 0
  %2327 = vmatpush2.bf16.msra.mxu0 0
  %2328 = vmatprep.subr.bf16.mxu0 0
  %2329 = vmatpush2.bf16.msra.mxu0 0
  %2330 = vmatprep.subr.bf16.mxu0 0
  %2331 = vmatpush2.bf16.msra.mxu0 0
  %2332 = vmatprep.subr.bf16.mxu0 0
  %2333 = vmatpush2.bf16.msra.mxu0 0
  %2334 = vmatprep.subr.bf16.mxu0 0
  %2335 = vmatpush2.bf16.msra.mxu0 0
  %2336 = vmatprep.subr.bf16.mxu0 0
  %2337 = vmatpush2.bf16.msra.mxu0 0
  %2338 = vmatprep.subr.bf16.mxu0 0
  %2339 = vmatpush2.bf16.msra.mxu0 0
  %2340 = vmatprep.mubr.bf16.mxu0 0
  %2341 = vmatmul.mubr.bf16.gmra.mxu0 %v2306
  %v2342 = vpop.f32.mrf.mxu0
  %v2343 = vadd.f32 %v2296, %v2342
  %v2344 = vpop.f32.mrf.mxu0
  %v2345 = vpop.f32.mrf.mxu0
  %v2346 = vadd.f32 %v2299, %v2345
  %v2347 = vpop.f32.mrf.mxu0
  %2348 = vdwg.mxu0
  %2349 = vrot.lane.b32.xlu0 %v2141, 124
  %v2350 = vpop.permute.xlu0 %2349
  %2351 = vrot.lane.b32.xlu0 %v2142, 124
  %v2352 = vpop.permute.xlu0 %2351
  %v2353 = vmul.f32 %v2350, %v1236
  %v2354 = vmul.f32 %v2352, %v1236
  %v2355 = vpack.c.bf16 %v2354, %v2353
  %2356 = vrot.lane.b32.xlu0 %v2141, 123
  %v2357 = vpop.permute.xlu0 %2356
  %2358 = vrot.lane.b32.xlu0 %v2142, 123
  %v2359 = vpop.permute.xlu0 %2358
  %v2360 = vmul.f32 %v2357, %v1248
  %v2361 = vmul.f32 %v2359, %v1248
  %v2362 = vpack.c.bf16 %v2361, %v2360
  %2363 = vrot.lane.b32.xlu0 %v2141, 117
  %v2364 = vpop.permute.xlu0 %2363
  %2365 = vrot.lane.b32.xlu0 %v2142, 117
  %v2366 = vpop.permute.xlu0 %2365
  %v2367 = vmul.f32 %v2364, %v1260
  %v2368 = vmul.f32 %v2366, %v1260
  %v2369 = vpack.c.bf16 %v2368, %v2367
  %2370 = vrot.lane.b32.xlu0 %v2141, 116
  %v2371 = vpop.permute.xlu0 %2370
  %2372 = vrot.lane.b32.xlu0 %v2142, 116
  %v2373 = vpop.permute.xlu0 %2372
  %v2374 = vmul.f32 %v2371, %v1272
  %v2375 = vmul.f32 %v2373, %v1272
  %v2376 = vpack.c.bf16 %v2375, %v2374
  %2377 = vrot.lane.b32.xlu0 %v2141, 115
  %v2378 = vpop.permute.xlu0 %2377
  %2379 = vrot.lane.b32.xlu0 %v2142, 115
  %v2380 = vpop.permute.xlu0 %2379
  %v2381 = vmul.f32 %v2378, %v1284
  %v2382 = vmul.f32 %v2380, %v1284
  %v2383 = vpack.c.bf16 %v2382, %v2381
  %2384 = vrot.lane.b32.xlu0 %v2141, 113
  %v2385 = vpop.permute.xlu0 %2384
  %2386 = vrot.lane.b32.xlu0 %v2142, 113
  %v2387 = vpop.permute.xlu0 %2386
  %v2388 = vmul.f32 %v2385, %v1296
  %v2389 = vmul.f32 %v2387, %v1296
  %v2390 = vpack.c.bf16 %v2389, %v2388
  %2391 = vrot.lane.b32.xlu0 %v2141, 112
  %v2392 = vpop.permute.xlu0 %2391
  %2393 = vrot.lane.b32.xlu0 %v2142, 112
  %v2394 = vpop.permute.xlu0 %2393
  %v2395 = vmul.f32 %v2392, %v1308
  %v2396 = vmul.f32 %v2394, %v1308
  %v2397 = vpack.c.bf16 %v2396, %v2395
  %2398 = vrot.lane.b32.xlu0 %v2141, 111
  %v2399 = vpop.permute.xlu0 %2398
  %2400 = vrot.lane.b32.xlu0 %v2142, 111
  %v2401 = vpop.permute.xlu0 %2400
  %v2402 = vmul.f32 %v2399, %v1320
  %v2403 = vmul.f32 %v2401, %v1320
  %v2404 = vpack.c.bf16 %v2403, %v2402
  %v2405 = vld [vmem:[%s3 + $0x8] sm:$0xf]
  %v2406 = vld [vmem:[%s3 + $0x18] sm:$0xf]
  %v2409 = vunpack.c.l.b16 %v2405
  %v2410 = vunpack.c.l.b16 %v2406
  %v2411 = vpack.c.b16 %v2410, %v2409
  %2413 = vmatprep.subr.bf16.mxu0 0
  %2414 = vmatpush1.bf16.msra.mxu0 %v2404
  %2415 = vmatprep.subr.bf16.mxu0 0
  %2416 = vmatpush1.bf16.msra.mxu0 %v2397
  %2417 = vmatprep.subr.bf16.mxu0 0
  %2418 = vmatpush1.bf16.msra.mxu0 %v2390
  %2419 = vmatprep.subr.bf16.mxu0 0
  %2420 = vmatpush1.bf16.msra.mxu0 %v2383
  %2421 = vmatprep.subr.bf16.mxu0 0
  %2422 = vmatpush1.bf16.msra.mxu0 %v2376
  %2423 = vmatprep.subr.bf16.mxu0 0
  %2424 = vmatpush1.bf16.msra.mxu0 %v2369
  %2425 = vmatprep.subr.bf16.mxu0 0
  %2426 = vmatpush1.bf16.msra.mxu0 %v2362
  %2427 = vmatprep.subr.bf16.mxu0 0
  %2428 = vmatpush1.bf16.msra.mxu0 %v2355
  %2429 = vmatprep.subr.bf16.mxu0 0
  %2430 = vmatpush2.bf16.msra.mxu0 0
  %2431 = vmatprep.subr.bf16.mxu0 0
  %2432 = vmatpush2.bf16.msra.mxu0 0
  %2433 = vmatprep.subr.bf16.mxu0 0
  %2434 = vmatpush2.bf16.msra.mxu0 0
  %2435 = vmatprep.subr.bf16.mxu0 0
  %2436 = vmatpush2.bf16.msra.mxu0 0
  %2437 = vmatprep.subr.bf16.mxu0 0
  %2438 = vmatpush2.bf16.msra.mxu0 0
  %2439 = vmatprep.subr.bf16.mxu0 0
  %2440 = vmatpush2.bf16.msra.mxu0 0
  %2441 = vmatprep.subr.bf16.mxu0 0
  %2442 = vmatpush2.bf16.msra.mxu0 0
  %2443 = vmatprep.subr.bf16.mxu0 0
  %2444 = vmatpush2.bf16.msra.mxu0 0
  %2445 = vmatprep.mubr.bf16.mxu0 0
  %2446 = vmatmul.mubr.bf16.gmra.mxu0 %v2411
  %v2447 = vpop.f32.mrf.mxu0
  %v2448 = vadd.f32 0.0, %v2447
  %v2449 = vpop.f32.mrf.mxu0
  %v2450 = vpop.f32.mrf.mxu0
  %v2451 = vadd.f32 0.0, %v2450
  %v2452 = vpop.f32.mrf.mxu0
  %2453 = vdwg.mxu0
  %v2454 = vadd.f32 %v2343, %v2448
  %v2455 = vadd.f32 %v2346, %v2451
  %2456 = vrot.lane.b32.xlu0 %v2141, 109
  %v2457 = vpop.permute.xlu0 %2456
  %2458 = vrot.lane.b32.xlu0 %v2142, 109
  %v2459 = vpop.permute.xlu0 %2458
  %v2460 = vmul.f32 %v2457, %v1383
  %v2461 = vmul.f32 %v2459, %v1383
  %v2462 = vpack.c.bf16 %v2461, %v2460
  %2463 = vrot.lane.b32.xlu0 %v2141, 108
  %v2464 = vpop.permute.xlu0 %2463
  %2465 = vrot.lane.b32.xlu0 %v2142, 108
  %v2466 = vpop.permute.xlu0 %2465
  %v2467 = vmul.f32 %v2464, %v1395
  %v2468 = vmul.f32 %v2466, %v1395
  %v2469 = vpack.c.bf16 %v2468, %v2467
  %2470 = vrot.lane.b32.xlu0 %v2141, 107
  %v2471 = vpop.permute.xlu0 %2470
  %2472 = vrot.lane.b32.xlu0 %v2142, 107
  %v2473 = vpop.permute.xlu0 %2472
  %v2474 = vmul.f32 %v2471, %v1407
  %v2475 = vmul.f32 %v2473, %v1407
  %v2476 = vpack.c.bf16 %v2475, %v2474
  %v2477 = vld [vmem:[%s3 + $0xc] sm:$0xf]
  %v2478 = vld [vmem:[%s3 + $0x1c] sm:$0xf]
  %v2481 = vunpack.c.l.b16 %v2477
  %v2482 = vunpack.c.l.b16 %v2478
  %v2483 = vpack.c.b16 %v2482, %v2481
  %v2485 = vsel %vm1418, %v2483, 0
  %2487 = vmatprep.subr.bf16.mxu0 0
  %2488 = vmatpush1.bf16.msra.mxu0 0
  %2489 = vmatprep.subr.bf16.mxu0 0
  %2490 = vmatpush1.bf16.msra.mxu0 0
  %2491 = vmatprep.subr.bf16.mxu0 0
  %2492 = vmatpush1.bf16.msra.mxu0 0
  %2493 = vmatprep.subr.bf16.mxu0 0
  %2494 = vmatpush1.bf16.msra.mxu0 0
  %2495 = vmatprep.subr.bf16.mxu0 0
  %2496 = vmatpush1.bf16.msra.mxu0 0
  %2497 = vmatprep.subr.bf16.mxu0 0
  %2498 = vmatpush1.bf16.msra.mxu0 %v2476
  %2499 = vmatprep.subr.bf16.mxu0 0
  %2500 = vmatpush1.bf16.msra.mxu0 %v2469
  %2501 = vmatprep.subr.bf16.mxu0 0
  %2502 = vmatpush1.bf16.msra.mxu0 %v2462
  %2503 = vmatprep.subr.bf16.mxu0 0
  %2504 = vmatpush2.bf16.msra.mxu0 0
  %2505 = vmatprep.subr.bf16.mxu0 0
  %2506 = vmatpush2.bf16.msra.mxu0 0
  %2507 = vmatprep.subr.bf16.mxu0 0
  %2508 = vmatpush2.bf16.msra.mxu0 0
  %2509 = vmatprep.subr.bf16.mxu0 0
  %2510 = vmatpush2.bf16.msra.mxu0 0
  %2511 = vmatprep.subr.bf16.mxu0 0
  %2512 = vmatpush2.bf16.msra.mxu0 0
  %2513 = vmatprep.subr.bf16.mxu0 0
  %2514 = vmatpush2.bf16.msra.mxu0 0
  %2515 = vmatprep.subr.bf16.mxu0 0
  %2516 = vmatpush2.bf16.msra.mxu0 0
  %2517 = vmatprep.subr.bf16.mxu0 0
  %2518 = vmatpush2.bf16.msra.mxu0 0
  %2519 = vmatprep.mubr.bf16.mxu0 0
  %2520 = vmatmul.mubr.bf16.gmra.mxu0 %v2485
  %v2521 = vpop.f32.mrf.mxu0
  %v2522 = vadd.f32 0.0, %v2521
  %v2523 = vpop.f32.mrf.mxu0
  %v2524 = vpop.f32.mrf.mxu0
  %v2525 = vadd.f32 0.0, %v2524
  %v2526 = vpop.f32.mrf.mxu0
  %2527 = vdwg.mxu0
  %v2528 = vadd.f32 %v2454, %v2522
  %v2529 = vadd.f32 %v2455, %v2525
  %2530 = vset.pattern.permute.xlu0 5
  %2531 = vperm.xlu0 %2530, %v27
  %v2532 = vpop.permute.xlu0 %2531
  %2534 = vset.pattern.permute.xlu0 5
  %2535 = vperm.xlu0 %2534, %v28
  %v2536 = vpop.permute.xlu0 %2535
  %v2538 = vadd.f32 %v2528, %v2532
  %v2539 = vadd.f32 %v2529, %v2536
  %v2540 = vadd.f32 %v2538, %v204
  %v2541 = vadd.f32 %v2539, %v207
  %2542 = vst [vmem:[%s7] sm:$0xff] %v2540
  %2543 = vst [vmem:[%s7 + $0x8] sm:$0xff] %v2541
  // Predicated region
  $region30: #{basic_block_forward.1} parent=0 // pred_check
    _
  $region31: #{basic_block_forward.1} parent=0 // pred_check_branch
    %2545 = sbr.rel (0) target = $region33
  $region32: #{basic_block_forward.1} parent=0 // pred_region
    _
  $region33: #{basic_block_forward.1} parent=0 // pred_fallthru
    _
  // Predicated region
  $region34: #{basic_block_forward.1} parent=0 // pred_check
    _
  $region35: #{basic_block_forward.1} parent=0 // pred_check_branch
    %2547 = sbr.rel (0) target = $region37
  $region36: #{basic_block_forward.1} parent=0 // pred_region
    _
  $region37: #{basic_block_forward.1} parent=0 // pred_fallthru
    _

</llo_original>
